<compile_context>
chip_gen: v6e
topology: v6e:2x2x1
jax: 0.10.0
libtpu: 0.0.40
codegen_flags: <defaults>
</compile_context>

<pallas_src>
import functools
import math

import numpy as np
import jax
import jax.numpy as jnp
from jax.experimental import pallas as pl
from jax.experimental.pallas import tpu as pltpu

# Fixed smoothing kernel from the PyTorch module's registered buffer.
_SMOOTH_W = np.array(
    [[0.0751, 0.1238, 0.0751],
     [0.1238, 0.2042, 0.1238],
     [0.0751, 0.1238, 0.0751]], dtype=np.float32)


def _cdiv(a, b):
    return -(-a // b)


# --------------------- host-side (hoisted) operator construction ---------------------
def _reflect_pad_mat(n):
    """(n+2, n): padded row p reads source row reflect(p-1).  Requires n >= 2."""
    if n < 2:
        raise ValueError(
            f"ReflectionPad2d(1) requires spatial size >= 2, got {n}; reduce pyramid_layer_num.")
    P = np.zeros((n + 2, n), np.float32)
    for p in range(n + 2):
        s = abs(p - 1)
        if s > n - 1:
            s = 2 * (n - 1) - s
        P[p, s] = 1.0
    return P


def _pool_mat(n):
    """(ceil(n/2), n): out[k] = 0.5*(in[2k] + in[min(2k+1, n-1)])  (replication pad if n odd)."""
    no = _cdiv(n, 2)
    A = np.zeros((no, n), np.float32)
    for k in range(no):
        A[k, 2 * k] += 0.5
        A[k, min(2 * k + 1, n - 1)] += 0.5
    return A


def _select_mat(n_in, offset, n_out):
    """(n_out, n_in): selects rows offset .. offset+n_out-1."""
    S = np.zeros((n_out, n_in), np.float32)
    S[np.arange(n_out), np.arange(n_out) + offset] = 1.0
    return S


@functools.lru_cache(maxsize=None)
def _level_operators(H, W, TB):
    """Fused operators for one downsample level, lane-folded batch.

    The slab X is (H, TB*W) with image b in columns [b*W, (b+1)*W).  The level output is
        out = concat_d( L[d] @ X , axis=lanes ) @ Rk            (Ho, TB*Wo)
    which equals  sum_d  L_d @ x_b @ R_d  per image b  (exact pad/conv/pad/pool operators).

    Returns (L: (3, Ho, H),  Rk: (3*TB*W, TB*Wo)) as jnp.float32.  The kron (batch block
    diagonal) lives only on the narrow W side; the left operators are dense and shared.
    """
    Ho, Wo = _cdiv(H, 2), _cdiv(W, 2)
    Ph, Ah = _reflect_pad_mat(H), _pool_mat(H)          # (H+2, H), (Ho, H)
    Pw, Aw = _reflect_pad_mat(W), _pool_mat(W)          # (W+2, W), (Wo, W)
    eye = np.eye(TB, dtype=np.float32)
    L = np.zeros((3, Ho, H), np.float32)
    Rk = np.zeros((3 * TB * W, TB * Wo), np.float32)
    for d in range(3):
        L[d] = Ah @ _select_mat(H + 2, d, H) @ Ph                               # (Ho, H)
        Sw = sum(_SMOOTH_W[d, j] * _select_mat(W + 2, j, W) for j in range(3))  # (W, W+2)
        Rd = (Aw @ Sw @ Pw).T                                                   # (W, Wo)
        Rk[d * TB * W:(d + 1) * TB * W] = np.kron(eye, Rd)                      # (TB*W, TB*Wo)
    return jnp.asarray(L), jnp.asarray(Rk)


# ------------------------------------ Pallas kernel ------------------------------------
def _pyramid_kernel(*refs, num_down, out_widths):
    """One block of TB lane-folded images; computes all pyramid levels in-VMEM.

    refs = (x_ref, L_0, Rk_0, L_1, Rk_1, ..., out_0, out_1, ...)
    x_ref: (H0, TB*W0) 2-D slab; out_l: (Ho_l, padded lane width) 2-D slab.
    """
    x_ref = refs[0]
    op_refs = refs[1:1 + 2 * num_down]
    out_refs = refs[1 + 2 * num_down:]

    hi = jax.lax.Precision.HIGHEST
    cur = x_ref[...]                                    # (H0, TB*W0) -- 2-D end-to-end

    for l in range(num_down):
        L_ref, Rk_ref = op_refs[2 * l], op_refs[2 * l + 1]
        # Left smooth+pool along H: three small, dense, kron-free matmuls (Ho, H) @ (H, TB*W),
        # lane-concatenated so the right step is a single wide-K matmul.
        ybig = jnp.concatenate(
            [jnp.dot(L_ref[d], cur, precision=hi, preferred_element_type=jnp.float32)
             for d in range(3)], axis=1)                # (Ho, 3*TB*W)
        # Right smooth+pool along W for all three taps in ONE lane-dense matmul.
        acc = jnp.dot(ybig, Rk_ref[...], precision=hi,
                      preferred_element_type=jnp.float32)        # (Ho, TB*Wo)

        ob = out_refs[l]
        w_use = out_widths[l]
        if ob.shape[-1] == w_use:
            ob[...] = acc
        else:
            # Lane-padded output block (only when the grid is tiled): zero-fill the tail so the
            # whole 128-aligned block is written unmasked; the host strips the padding.
            pad = jnp.zeros((acc.shape[0], ob.shape[-1] - w_use), jnp.float32)
            ob[...] = jnp.concatenate([acc, pad], axis=-1)

        cur = acc                                       # feeds the next (smaller) level


# --------------------------------- wrapper / launch code ---------------------------------
def _vmem_budget_bytes():
    """~3/4 of physical VMEM: ~96 MiB on v5e/v6e (128 MiB), ~48 MiB on v7x (64 MiB)."""
    cap = None
    try:
        cap = int(getattr(pltpu.get_tpu_info(), "vmem_capacity_bytes", 0)) or None
    except Exception:
        cap = None
    if cap is None:
        cap = 64 * 1024 * 1024
    return int(min(max((cap * 3) // 4, 32 * 1024 * 1024), 112 * 1024 * 1024))


def _vmem_estimate(TB, dims):
    H0, W0 = dims[0]
    total = 2 * H0 * (TB * W0) * 4                        # double-buffered input block
    for l in range(len(dims) - 1):
        H, W = dims[l]
        Ho, Wo = dims[l + 1]
        tw, two = TB * W, TB * Wo
        total += 2 * (3 * Ho * H + 3 * tw * two) * 4      # resident L / Rk (default dbl-buffered)
        total += 2 * Ho * (_cdiv(two, 128) * 128) * 4     # double-buffered output block (padded)
        total += (6 * Ho * tw + 2 * Ho * two) * 4         # live intermediates (ys, ybig, acc)
    return total


def _plan(B, dims, budget):
    """Choose (TB images per block, grid size G) for the lane-folded layout."""
    H0, W0 = dims[0]
    lane_target = 256                                     # fills v6e/v7x 256-wide MXU; fine on v5e
    tb_lane = max(1, lane_target // W0) if W0 < lane_target else 1

    if tb_lane >= B and _vmem_estimate(B, dims) <= budget:
        return B, 1                                       # single block: no alignment constraints

    # Multi-block path: per-block lane width must be a multiple of 128.
    m = 128 // math.gcd(W0, 128)
    tb = max(m, (min(tb_lane, B) // m) * m)
    while tb > m and _vmem_estimate(tb, dims) > budget:
        tb -= m
    if tb >= B:
        # TODO(synk): H-axis halo tiling here if even one block exceeds the budget (v7x 64 MiB).
        return B, 1

    G = _cdiv(B, tb)
    if G > 1 and G % 2 == 1:
        # Prefer an even step count so v7x's two TensorCores stay balanced (no extra empty block:
        # tb shrinks instead of G being padded up).
        tb_even = _cdiv(_cdiv(B, G + 1), m) * m
        if tb_even >= m and _cdiv(B, tb_even) % 2 == 0:
            tb = tb_even
            G = _cdiv(B, tb)
    return tb, G


def _run_pyramid_flat(flat, num_down):
    """flat: (B, H, W) float32 -> list of num_down downsampled levels [(B, H1, W1), ...]."""
    B, H, W = flat.shape
    dims = [(H, W)]
    for _ in range(num_down):
        h, w = dims[-1]
        if h < 2 or w < 2:
            raise ValueError(
                "ImagePyramidLayer: reflection padding requires every pyramid level to have "
                f"spatial size >= 2; got {(h, w)} -- reduce pyramid_layer_num.")
        dims.append((_cdiv(h, 2), _cdiv(w, 2)))
    dims = tuple(dims)

    budget = _vmem_budget_bytes()
    TB, G = _plan(B, dims, budget)
    Bpad = G * TB
    if Bpad != B:
        flat = jnp.pad(flat, ((0, Bpad - B), (0, 0), (0, 0)))

    # Lane fold (layout plumbing, done once in XLA outside the kernel):
    # (Bpad, H, W) -> (H, Bpad*W), image b occupying columns [b*W, (b+1)*W).
    slab = jnp.transpose(flat, (1, 0, 2)).reshape(H, Bpad * W)

    in_specs = [pl.BlockSpec((H, TB * W), lambda g: (0, g))]
    ops = []
    out_shape = []
    out_specs = []
    out_widths = []
    for l in range(num_down):
        Hl, Wl = dims[l]
        Ho, Wo = dims[l + 1]
        L, Rk = _level_operators(Hl, Wl, TB)
        ops += [L, Rk]
        # Constant operators: same block every grid step -> stay resident in VMEM.
        in_specs += [pl.BlockSpec(L.shape, lambda g: (0, 0, 0)),
                     pl.BlockSpec(Rk.shape, lambda g: (0, 0))]
        w_use = TB * Wo
        w_blk = w_use if G == 1 else _cdiv(w_use, 128) * 128   # 128-aligned blocks when tiled
        out_widths.append(w_use)
        out_shape.append(jax.ShapeDtypeStruct((Ho, G * w_blk), jnp.float32))
        out_specs.append(pl.BlockSpec((Ho, w_blk), lambda g: (0, g)))

    kernel = functools.partial(_pyramid_kernel, num_down=num_down,
                               out_widths=tuple(out_widths))
    outs = pl.pallas_call(
        kernel,
        out_shape=tuple(out_shape),
        grid=(G,),
        in_specs=in_specs,
        out_specs=tuple(out_specs),
        compiler_params=pltpu.CompilerParams(
            dimension_semantics=("parallel",),
            vmem_limit_bytes=int(budget)),
    )(slab, *ops)
    if not isinstance(outs, (tuple, list)):
        outs = (outs,)

    results = []
    for l, o in enumerate(outs):
        Ho, Wo = dims[l + 1]
        w_use = out_widths[l]
        w_blk = o.shape[-1] // G
        # (Ho, G*w_blk) -> strip per-block lane pad -> (Ho, Bpad, Wo) -> (B, Ho, Wo)
        o = o.reshape(Ho, G, w_blk)[:, :, :w_use].reshape(Ho, Bpad, Wo)
        results.append(jnp.transpose(o, (1, 0, 2))[:B])
    return results


class ImagePyramidLayerPallas:
    """JAX/Pallas equivalent of the PyTorch ImagePyramidLayer forward pass."""

    def __init__(self, chan, pyramid_layer_num):
        self.chan = chan
        self.pyramid_layer_num = pyramid_layer_num

    @staticmethod
    def _flatten(x):
        ndim = x.ndim
        dtype = x.dtype
        if ndim == 2:
            flat, nc = x[None], None
        elif ndim == 3:
            flat, nc = x, None
        else:
            N, C, H, W = x.shape
            flat, nc = x.reshape(N * C, H, W), (N, C)
        return flat.astype(jnp.float32), ndim, nc, dtype

    @staticmethod
    def _unflatten(y, ndim, nc, dtype):
        y = y.astype(dtype)
        if ndim == 2:
            return y[0]
        if ndim == 3:
            return y
        N, C = nc
        return y.reshape(N, C, y.shape[-2], y.shape[-1])

    def downsample(self, x):
        flat, ndim, nc, dt = self._flatten(x)
        out = _run_pyramid_flat(flat, 1)[0]
        return self._unflatten(out, ndim, nc, dt)

    def __call__(self, x, do_detach=True):
        pyramid = [x]
        num_down = self.pyramid_layer_num - 1
        if num_down <= 0:
            return pyramid
        flat, ndim, nc, dt = self._flatten(x)
        # All levels produced by a single fused pallas_call (deep levels are tiny; fusing
        # removes per-level launch overhead and HBM round-trips).
        outs = _run_pyramid_flat(flat, num_down)
        for l, o in enumerate(outs):
            img_d = self._unflatten(o, ndim, nc, dt)
            if do_detach:
                img_d = jax.lax.stop_gradient(img_d)   # torch .detach() equivalent (forward-only)
            pyramid.append(img_d)
            assert _cdiv(pyramid[l].shape[-1], 2) == img_d.shape[-1]
        return pyramid

    def get_coords(self, imH, imW):
        x_pyramid = [np.arange(imW) + 0.5]
        y_pyramid = [np.arange(imH) + 0.5]
        for i in range(self.pyramid_layer_num - 1):
            offset = 2 ** i
            stride = 2 ** (i + 1)
            x_pyramid.append(np.arange(offset, offset + stride * np.ceil(x_pyramid[i].shape[0] / 2), stride))
            y_pyramid.append(np.arange(offset, offset + stride * np.ceil(y_pyramid[i].shape[0] / 2), stride))
        return (x_pyramid, y_pyramid)


# ---------------------------- pure-JAX reference (for checking) ----------------------------
def _ref_downsample(x):
    """x: (N, C, H, W) float32."""
    N, C, H, W = x.shape
    xp = jnp.pad(x, ((0, 0), (0, 0), (1, 1), (1, 1)), mode="reflect")
    y = jnp.zeros((N, C, H, W), jnp.float32)
    for di in range(3):
        for dj in range(3):
            y = y + float(_SMOOTH_W[di, dj]) * xp[:, :, di:di + H, dj:dj + W]
    if H % 2:
        y = jnp.concatenate([y, y[:, :, -1:, :]], axis=2)
    if W % 2:
        y = jnp.concatenate([y, y[:, :, :, -1:]], axis=3)
    H2, W2 = y.shape[2], y.shape[3]
    return y.reshape(N, C, H2 // 2, 2, W2 // 2, 2).mean(axis=(3, 5))


if __name__ == "__main__":
    key = jax.random.PRNGKey(0)
    N, C, H, W = 2, 4, 16, 16
    num_levels = 3

    x = jax.random.normal(key, (N, C, H, W), dtype=jnp.float32)

    layer = ImagePyramidLayerPallas(chan=C, pyramid_layer_num=num_levels)
    pyramid = layer(x)
    pyramid = [jax.block_until_ready(p) for p in pyramid]

    # sanity check against a pure-JAX reference of the PyTorch forward
    ref = [x]
    for i in range(num_levels - 1):
        ref.append(_ref_downsample(ref[i]))
    for lvl, (a, b) in enumerate(zip(pyramid, ref)):
        assert a.shape == b.shape, (lvl, a.shape, b.shape)
        assert jnp.allclose(a, b, atol=2e-5, rtol=2e-5), f"mismatch at level {lvl}"

    # standalone single-level downsample path
    d1 = jax.block_until_ready(layer.downsample(x))
    assert d1.shape == ref[1].shape
    assert jnp.allclose(d1, ref[1], atol=2e-5, rtol=2e-5), "mismatch in downsample()"

    # odd spatial sizes + 3-D input exercise the replication-pad path and masked lane tails
    x3 = jax.random.normal(jax.random.PRNGKey(1), (3, 11, 13), dtype=jnp.float32)
    layer2 = ImagePyramidLayerPallas(chan=1, pyramid_layer_num=2)
    p3 = [jax.block_until_ready(p) for p in layer2(x3)]
    r3 = _ref_downsample(x3[:, None])[:, 0]
    assert p3[1].shape == (3, 6, 7), p3[1].shape
    assert jnp.allclose(p3[1], r3, atol=2e-5, rtol=2e-5), "mismatch on odd-sized 3-D input"

    print("KERNEL_OK")
</pallas_src>

<mosaic_0001>
module attributes {stable_mosaic.version = 11 : i64} {
  func.func @_pyramid_kernel(%arg0: i32, %arg1: memref<16x128xf32, #tpu.memory_space<vmem>>, %arg2: memref<3x8x16xf32, #tpu.memory_space<vmem>>, %arg3: memref<384x64xf32, #tpu.memory_space<vmem>>, %arg4: memref<3x4x8xf32, #tpu.memory_space<vmem>>, %arg5: memref<192x32xf32, #tpu.memory_space<vmem>>, %arg6: memref<8x64xf32, #tpu.memory_space<vmem>>, %arg7: memref<4x32xf32, #tpu.memory_space<vmem>>) attributes {dimension_semantics = [#tpu.dimension_semantics<parallel>], iteration_bounds = array<i64: 1>, scalar_prefetch = 0 : i64, scratch_operands = 0 : i64, tpu.core_type = #tpu.core_type<tc>, window_params = [{transform_indices = @transform_0, window_bounds = array<i64: 16, 128>}, {pipeline_mode = #tpu.pipeline_mode<synchronous>, transform_indices = @transform_1, window_bounds = array<i64: 3, 8, 16>}, {pipeline_mode = #tpu.pipeline_mode<synchronous>, transform_indices = @transform_2, window_bounds = array<i64: 384, 64>}, {pipeline_mode = #tpu.pipeline_mode<synchronous>, transform_indices = @transform_3, window_bounds = array<i64: 3, 4, 8>}, {pipeline_mode = #tpu.pipeline_mode<synchronous>, transform_indices = @transform_4, window_bounds = array<i64: 192, 32>}, {transform_indices = @transform_5, window_bounds = array<i64: 8, 64>}, {transform_indices = @transform_6, window_bounds = array<i64: 4, 32>}]} {
    %c0 = arith.constant 0 : index
    %c0_0 = arith.constant 0 : index
    %0 = vector.load %arg1[%c0, %c0_0] : memref<16x128xf32, #tpu.memory_space<vmem>>, vector<16x128xf32>
    %c0_1 = arith.constant 0 : index
    %c0_2 = arith.constant 0 : index
    %c0_3 = arith.constant 0 : index
    %1 = vector.load %arg2[%c0_1, %c0_2, %c0_3] : memref<3x8x16xf32, #tpu.memory_space<vmem>>, vector<1x8x16xf32>
    %2 = vector.shape_cast %1 : vector<1x8x16xf32> to vector<8x16xf32>
    %cst = arith.constant dense<0.000000e+00> : vector<8x128xf32>
    %3 = tpu.matmul %2, %0, %cst {dimension_numbers = #tpu.dot_dimension_numbers<[1], [0], [0], [1], [0, 0, 1, 1], [], []>, precision = #tpu.contract_precision<fp32>} : vector<8x16xf32>, vector<16x128xf32>, vector<8x128xf32> -> vector<8x128xf32>
    %c1 = arith.constant 1 : index
    %c0_4 = arith.constant 0 : index
    %c0_5 = arith.constant 0 : index
    %4 = vector.load %arg2[%c1, %c0_4, %c0_5] : memref<3x8x16xf32, #tpu.memory_space<vmem>>, vector<1x8x16xf32>
    %5 = vector.shape_cast %4 : vector<1x8x16xf32> to vector<8x16xf32>
    %cst_6 = arith.constant dense<0.000000e+00> : vector<8x128xf32>
    %6 = tpu.matmul %5, %0, %cst_6 {dimension_numbers = #tpu.dot_dimension_numbers<[1], [0], [0], [1], [0, 0, 1, 1], [], []>, precision = #tpu.contract_precision<fp32>} : vector<8x16xf32>, vector<16x128xf32>, vector<8x128xf32> -> vector<8x128xf32>
    %c2 = arith.constant 2 : index
    %c0_7 = arith.constant 0 : index
    %c0_8 = arith.constant 0 : index
    %7 = vector.load %arg2[%c2, %c0_7, %c0_8] : memref<3x8x16xf32, #tpu.memory_space<vmem>>, vector<1x8x16xf32>
    %8 = vector.shape_cast %7 : vector<1x8x16xf32> to vector<8x16xf32>
    %cst_9 = arith.constant dense<0.000000e+00> : vector<8x128xf32>
    %9 = tpu.matmul %8, %0, %cst_9 {dimension_numbers = #tpu.dot_dimension_numbers<[1], [0], [0], [1], [0, 0, 1, 1], [], []>, precision = #tpu.contract_precision<fp32>} : vector<8x16xf32>, vector<16x128xf32>, vector<8x128xf32> -> vector<8x128xf32>
    %10 = tpu.concatenate %3, %6, %9 in 1 : vector<8x128xf32>, vector<8x128xf32>, vector<8x128xf32> -> vector<8x384xf32>
    %c0_10 = arith.constant 0 : index
    %c0_11 = arith.constant 0 : index
    %11 = vector.load %arg3[%c0_10, %c0_11] : memref<384x64xf32, #tpu.memory_space<vmem>>, vector<384x64xf32>
    %cst_12 = arith.constant dense<0.000000e+00> : vector<8x64xf32>
    %12 = tpu.matmul %10, %11, %cst_12 {dimension_numbers = #tpu.dot_dimension_numbers<[1], [0], [0], [1], [0, 0, 1, 1], [], []>, precision = #tpu.contract_precision<fp32>} : vector<8x384xf32>, vector<384x64xf32>, vector<8x64xf32> -> vector<8x64xf32>
    %c0_13 = arith.constant 0 : index
    %c0_14 = arith.constant 0 : index
    %13 = vector.load %arg6[%c0_13, %c0_14] : memref<8x64xf32, #tpu.memory_space<vmem>>, vector<8x64xf32>
    tpu.vector_store %arg6[%c0_13, %c0_14], %12 {strides = array<i32>} : memref<8x64xf32, #tpu.memory_space<vmem>>, vector<8x64xf32>,
    %c0_15 = arith.constant 0 : index
    %c0_16 = arith.constant 0 : index
    %c0_17 = arith.constant 0 : index
    %14 = vector.load %arg4[%c0_15, %c0_16, %c0_17] : memref<3x4x8xf32, #tpu.memory_space<vmem>>, vector<1x4x8xf32>
    %15 = vector.shape_cast %14 : vector<1x4x8xf32> to vector<4x8xf32>
    %cst_18 = arith.constant dense<0.000000e+00> : vector<4x64xf32>
    %16 = tpu.matmul %15, %12, %cst_18 {dimension_numbers = #tpu.dot_dimension_numbers<[1], [0], [0], [1], [0, 0, 1, 1], [], []>, precision = #tpu.contract_precision<fp32>} : vector<4x8xf32>, vector<8x64xf32>, vector<4x64xf32> -> vector<4x64xf32>
    %c1_19 = arith.constant 1 : index
    %c0_20 = arith.constant 0 : index
    %c0_21 = arith.constant 0 : index
    %17 = vector.load %arg4[%c1_19, %c0_20, %c0_21] : memref<3x4x8xf32, #tpu.memory_space<vmem>>, vector<1x4x8xf32>
    %18 = vector.shape_cast %17 : vector<1x4x8xf32> to vector<4x8xf32>
    %cst_22 = arith.constant dense<0.000000e+00> : vector<4x64xf32>
    %19 = tpu.matmul %18, %12, %cst_22 {dimension_numbers = #tpu.dot_dimension_numbers<[1], [0], [0], [1], [0, 0, 1, 1], [], []>, precision = #tpu.contract_precision<fp32>} : vector<4x8xf32>, vector<8x64xf32>, vector<4x64xf32> -> vector<4x64xf32>
    %c2_23 = arith.constant 2 : index
    %c0_24 = arith.constant 0 : index
    %c0_25 = arith.constant 0 : index
    %20 = vector.load %arg4[%c2_23, %c0_24, %c0_25] : memref<3x4x8xf32, #tpu.memory_space<vmem>>, vector<1x4x8xf32>
    %21 = vector.shape_cast %20 : vector<1x4x8xf32> to vector<4x8xf32>
    %cst_26 = arith.constant dense<0.000000e+00> : vector<4x64xf32>
    %22 = tpu.matmul %21, %12, %cst_26 {dimension_numbers = #tpu.dot_dimension_numbers<[1], [0], [0], [1], [0, 0, 1, 1], [], []>, precision = #tpu.contract_precision<fp32>} : vector<4x8xf32>, vector<8x64xf32>, vector<4x64xf32> -> vector<4x64xf32>
    %23 = tpu.concatenate %16, %19, %22 in 1 : vector<4x64xf32>, vector<4x64xf32>, vector<4x64xf32> -> vector<4x192xf32>
    %c0_27 = arith.constant 0 : index
    %c0_28 = arith.constant 0 : index
    %24 = vector.load %arg5[%c0_27, %c0_28] : memref<192x32xf32, #tpu.memory_space<vmem>>, vector<192x32xf32>
    %cst_29 = arith.constant dense<0.000000e+00> : vector<4x32xf32>
    %25 = tpu.matmul %23, %24, %cst_29 {dimension_numbers = #tpu.dot_dimension_numbers<[1], [0], [0], [1], [0, 0, 1, 1], [], []>, precision = #tpu.contract_precision<fp32>} : vector<4x192xf32>, vector<192x32xf32>, vector<4x32xf32> -> vector<4x32xf32>
    %c0_30 = arith.constant 0 : index
    %c0_31 = arith.constant 0 : index
    %26 = vector.load %arg7[%c0_30, %c0_31] : memref<4x32xf32, #tpu.memory_space<vmem>>, vector<4x32xf32>
    tpu.vector_store %arg7[%c0_30, %c0_31], %25 {strides = array<i32>} : memref<4x32xf32, #tpu.memory_space<vmem>>, vector<4x32xf32>,
    return
  }
  func.func @transform_0(%arg0: i32) -> (i32, i32) {
    %c0_i32 = arith.constant 0 : i32
    %c0_i32_0 = arith.constant 0 : i32
    return %c0_i32, %arg0 : i32, i32
  }
  func.func @transform_1(%arg0: i32) -> (i32, i32, i32) {
    %c0_i32 = arith.constant 0 : i32
    %c0_i32_0 = arith.constant 0 : i32
    %c0_i32_1 = arith.constant 0 : i32
    %c0_i32_2 = arith.constant 0 : i32
    return %c0_i32, %c0_i32_0, %c0_i32_1 : i32, i32, i32
  }
  func.func @transform_2(%arg0: i32) -> (i32, i32) {
    %c0_i32 = arith.constant 0 : i32
    %c0_i32_0 = arith.constant 0 : i32
    %c0_i32_1 = arith.constant 0 : i32
    return %c0_i32, %c0_i32_0 : i32, i32
  }
  func.func @transform_3(%arg0: i32) -> (i32, i32, i32) {
    %c0_i32 = arith.constant 0 : i32
    %c0_i32_0 = arith.constant 0 : i32
    %c0_i32_1 = arith.constant 0 : i32
    %c0_i32_2 = arith.constant 0 : i32
    return %c0_i32, %c0_i32_0, %c0_i32_1 : i32, i32, i32
  }
  func.func @transform_4(%arg0: i32) -> (i32, i32) {
    %c0_i32 = arith.constant 0 : i32
    %c0_i32_0 = arith.constant 0 : i32
    %c0_i32_1 = arith.constant 0 : i32
    return %c0_i32, %c0_i32_0 : i32, i32
  }
  func.func @transform_5(%arg0: i32) -> (i32, i32) {
    %c0_i32 = arith.constant 0 : i32
    %c0_i32_0 = arith.constant 0 : i32
    return %c0_i32, %arg0 : i32, i32
  }
  func.func @transform_6(%arg0: i32) -> (i32, i32) {
    %c0_i32 = arith.constant 0 : i32
    %c0_i32_0 = arith.constant 0 : i32
    return %c0_i32, %arg0 : i32, i32
  }
}

</mosaic_0001>

<llo_original>
// kernel: tpu_custom_call.1
$region0: #{tpu_custom_call.1}
  #allocation0 [shape = 'u32[]', space=smem, size = 0x4, offset = 0x4, fixed_abs, tag = 'smem constant byte address 0x4 - core index']
  #allocation1 [shape = 'u32[144,128]{1,0:T(1,128)}', space=vmem, size = 0x12000, scoped, tag = 'internal scratch']
  %s0 = inlined_call_operand.vmem [shape: f32[16,128], index: 0, kind: input, shape index: {}]
  %s1 = inlined_call_operand.vmem [shape: f32[3,8,16], index: 1, kind: input, shape index: {}]
  %s2 = inlined_call_operand.vmem [shape: f32[384,64], index: 2, kind: input, shape index: {}]
  %s3 = inlined_call_operand.vmem [shape: f32[3,4,8], index: 3, kind: input, shape index: {}]
  %s4 = inlined_call_operand.vmem [shape: f32[192,32], index: 4, kind: input, shape index: {}]
  %s5 = inlined_call_operand.hbm [shape: f32[8,64], index: 5, kind: output, shape index: {0}]
  %s6 = inlined_call_operand.hbm [shape: f32[4,32], index: 6, kind: output, shape index: {1}]
  %7 = xla_tuple %s5, %s6
  %s8 = sld [smem:[#allocation0]]
  $region38: #{tpu_custom_call.1} parent=0
    _
  %s10 = ssub.s32 1, %s8
  %s11 = scalar_select 0, %s10, %s8
  $region1: #{tpu_custom_call.1} parent=0
    #allocation2 [shape = 'u8[4096]{0}', space=vmem, size = 0x1000, scoped, tag = 'output window, operand 0, single buffered']
    #allocation3 [shape = 's32[1]{0}', space=sflag, size = 0x4, scoped, tag = 'scoped memory for tpu_custom_call.1']
    #allocation4 [shape = 'u8[2048]{0}', space=vmem, size = 0x800, scoped, tag = 'output window, operand 1, single buffered']
    #allocation5 [shape = 's32[1]{0}', space=sflag, size = 0x4, scoped, tag = 'scoped memory for tpu_custom_call.1']
    %12 = vsyncpa [#allocation3], 0
    %13 = vsyncpa [#allocation5], 0
    // Predicated region
    $region2: #{tpu_custom_call.1} parent=1 // pred_check
      _
    $region3: #{tpu_custom_call.1} parent=1 // pred_check_branch
      %15 = sbr.rel (0) target = $region5
    $region4: #{tpu_custom_call.1} parent=1 // pred_region
      _
    $region5: #{tpu_custom_call.1} parent=1 // pred_fallthru
      _
    // Predicated region
    $region6: #{tpu_custom_call.1} parent=1 // pred_check
      _
    $region7: #{tpu_custom_call.1} parent=1 // pred_check_branch
      %17 = sbr.rel (0) target = $region9
    $region8: #{tpu_custom_call.1} parent=1 // pred_region
      _
    $region9: #{tpu_custom_call.1} parent=1 // pred_fallthru
      _
    // Predicated region
    $region10: #{tpu_custom_call.1} parent=1 // pred_check
      _
    $region11: #{tpu_custom_call.1} parent=1 // pred_check_branch
      %19 = sbr.rel (0) target = $region13
    $region12: #{tpu_custom_call.1} parent=1 // pred_region
      _
    $region13: #{tpu_custom_call.1} parent=1 // pred_fallthru
      _
    // Predicated region
    $region14: #{tpu_custom_call.1} parent=1 // pred_check
      _
    $region15: #{tpu_custom_call.1} parent=1 // pred_check_branch
      %21 = sbr.rel (0) target = $region17
    $region16: #{tpu_custom_call.1} parent=1 // pred_region
      _
    $region17: #{tpu_custom_call.1} parent=1 // pred_fallthru
      _
    // Predicated region
    $region18: #{tpu_custom_call.1} parent=1 // pred_check
      _
    $region19: #{tpu_custom_call.1} parent=1 // pred_check_branch
      %23 = sbr.rel (0) target = $region21
    $region20: #{tpu_custom_call.1} parent=1 // pred_region
      _
    $region21: #{tpu_custom_call.1} parent=1 // pred_fallthru
      _
    %v24 = vld [vmem:[%s0] sm:$0xff]
    %v25 = vld [vmem:[%s0 + $0x8] sm:$0xff]
    %v26 = vld [vmem:[%s1] sm:$0xff]
    %vm27 = vcmask 130048
    %v29 = vsel %vm27, %v26, 0
    %31 = vmatprep.subr.mxu0 0.0
    %32 = vmatpush1.msra.mxu0 0.0
    %33 = vmatprep.subr.mxu0 0.0
    %34 = vmatpush1.msra.mxu0 0.0
    %35 = vmatprep.subr.mxu0 0.0
    %36 = vmatpush1.msra.mxu0 0.0
    %37 = vmatprep.subr.mxu0 0.0
    %38 = vmatpush1.msra.mxu0 0.0
    %39 = vmatprep.subr.mxu0 0.0
    %40 = vmatpush1.msra.mxu0 0.0
    %41 = vmatprep.subr.mxu0 0.0
    %42 = vmatpush1.msra.mxu0 0.0
    %43 = vmatprep.subr.mxu0 0.0
    %44 = vmatpush1.msra.mxu0 0.0
    %45 = vmatprep.subr.mxu0 0.0
    %46 = vmatpush1.msra.mxu0 0.0
    %47 = vmatprep.subr.mxu0 0.0
    %48 = vmatpush1.msra.mxu0 0.0
    %49 = vmatprep.subr.mxu0 0.0
    %50 = vmatpush1.msra.mxu0 0.0
    %51 = vmatprep.subr.mxu0 0.0
    %52 = vmatpush1.msra.mxu0 0.0
    %53 = vmatprep.subr.mxu0 0.0
    %54 = vmatpush1.msra.mxu0 0.0
    %55 = vmatprep.subr.mxu0 0.0
    %56 = vmatpush1.msra.mxu0 0.0
    %57 = vmatprep.subr.mxu0 0.0
    %58 = vmatpush1.msra.mxu0 0.0
    %59 = vmatprep.subr.mxu0 0.0
    %v60 = vand.u32 %v25, 4294901760
    %61 = vmatpush1.msra.mxu0 %v60
    %62 = vmatprep.subr.mxu0 0.0
    %v63 = vand.u32 %v24, 4294901760
    %64 = vmatpush1.msra.mxu0 %v63
    %65 = vmatprep.subr.mxu0 0.0
    %66 = vmatpush2.msra.mxu0 0.0
    %67 = vmatprep.subr.mxu0 0.0
    %68 = vmatpush2.msra.mxu0 0.0
    %69 = vmatprep.subr.mxu0 0.0
    %70 = vmatpush2.msra.mxu0 0.0
    %71 = vmatprep.subr.mxu0 0.0
    %72 = vmatpush2.msra.mxu0 0.0
    %73 = vmatprep.subr.mxu0 0.0
    %74 = vmatpush2.msra.mxu0 0.0
    %75 = vmatprep.subr.mxu0 0.0
    %76 = vmatpush2.msra.mxu0 0.0
    %77 = vmatprep.subr.mxu0 0.0
    %78 = vmatpush2.msra.mxu0 0.0
    %79 = vmatprep.subr.mxu0 0.0
    %80 = vmatpush2.msra.mxu0 0.0
    %81 = vmatprep.subr.mxu0 0.0
    %82 = vmatpush2.msra.mxu0 0.0
    %83 = vmatprep.subr.mxu0 0.0
    %84 = vmatpush2.msra.mxu0 0.0
    %85 = vmatprep.subr.mxu0 0.0
    %86 = vmatpush2.msra.mxu0 0.0
    %87 = vmatprep.subr.mxu0 0.0
    %88 = vmatpush2.msra.mxu0 0.0
    %89 = vmatprep.subr.mxu0 0.0
    %90 = vmatpush2.msra.mxu0 0.0
    %91 = vmatprep.subr.mxu0 0.0
    %92 = vmatpush2.msra.mxu0 0.0
    %93 = vmatprep.subr.mxu0 0.0
    %94 = vmatpush2.msra.mxu0 0.0
    %95 = vmatprep.subr.mxu0 0.0
    %96 = vmatpush2.msra.mxu0 0.0
    %97 = vmatprep.mubr.f32.mxu0 0.0
    %v98 = vand.u32 %v29, 4294901760
    %v99 = vsub.f32 %v29, %v98
    %v100 = vand.u32 %v99, 4294901760
    %v101 = vsub.f32 %v99, %v100
    %v102 = vand.u32 %v101, 4294901760
    %103 = vmatmul.mubr.f32.gmra.mxu0 %v102
    %v104 = vpop.f32.mrf.mxu0
    %v105 = vadd.f32 0.0, %v104
    %v106 = vpop.f32.mrf.mxu0
    %107 = vdwg.mxu0
    %108 = vmatprep.subr.mxu0 0.0
    %109 = vmatpush1.msra.mxu0 0.0
    %110 = vmatprep.subr.mxu0 0.0
    %111 = vmatpush1.msra.mxu0 0.0
    %112 = vmatprep.subr.mxu0 0.0
    %113 = vmatpush1.msra.mxu0 0.0
    %114 = vmatprep.subr.mxu0 0.0
    %115 = vmatpush1.msra.mxu0 0.0
    %116 = vmatprep.subr.mxu0 0.0
    %117 = vmatpush1.msra.mxu0 0.0
    %118 = vmatprep.subr.mxu0 0.0
    %119 = vmatpush1.msra.mxu0 0.0
    %120 = vmatprep.subr.mxu0 0.0
    %121 = vmatpush1.msra.mxu0 0.0
    %122 = vmatprep.subr.mxu0 0.0
    %123 = vmatpush1.msra.mxu0 0.0
    %124 = vmatprep.subr.mxu0 0.0
    %125 = vmatpush1.msra.mxu0 0.0
    %126 = vmatprep.subr.mxu0 0.0
    %127 = vmatpush1.msra.mxu0 0.0
    %128 = vmatprep.subr.mxu0 0.0
    %129 = vmatpush1.msra.mxu0 0.0
    %130 = vmatprep.subr.mxu0 0.0
    %131 = vmatpush1.msra.mxu0 0.0
    %132 = vmatprep.subr.mxu0 0.0
    %133 = vmatpush1.msra.mxu0 0.0
    %134 = vmatprep.subr.mxu0 0.0
    %135 = vmatpush1.msra.mxu0 0.0
    %136 = vmatprep.subr.mxu0 0.0
    %v137 = vand.u32 %v25, 4294901760
    %v138 = vsub.f32 %v25, %v137
    %v139 = vand.u32 %v138, 4294901760
    %v140 = vsub.f32 %v138, %v139
    %v141 = vand.u32 %v140, 4294901760
    %142 = vmatpush1.msra.mxu0 %v141
    %143 = vmatprep.subr.mxu0 0.0
    %v144 = vand.u32 %v24, 4294901760
    %v145 = vsub.f32 %v24, %v144
    %v146 = vand.u32 %v145, 4294901760
    %v147 = vsub.f32 %v145, %v146
    %v148 = vand.u32 %v147, 4294901760
    %149 = vmatpush1.msra.mxu0 %v148
    %150 = vmatprep.subr.mxu0 0.0
    %151 = vmatpush2.msra.mxu0 0.0
    %152 = vmatprep.subr.mxu0 0.0
    %153 = vmatpush2.msra.mxu0 0.0
    %154 = vmatprep.subr.mxu0 0.0
    %155 = vmatpush2.msra.mxu0 0.0
    %156 = vmatprep.subr.mxu0 0.0
    %157 = vmatpush2.msra.mxu0 0.0
    %158 = vmatprep.subr.mxu0 0.0
    %159 = vmatpush2.msra.mxu0 0.0
    %160 = vmatprep.subr.mxu0 0.0
    %161 = vmatpush2.msra.mxu0 0.0
    %162 = vmatprep.subr.mxu0 0.0
    %163 = vmatpush2.msra.mxu0 0.0
    %164 = vmatprep.subr.mxu0 0.0
    %165 = vmatpush2.msra.mxu0 0.0
    %166 = vmatprep.subr.mxu0 0.0
    %167 = vmatpush2.msra.mxu0 0.0
    %168 = vmatprep.subr.mxu0 0.0
    %169 = vmatpush2.msra.mxu0 0.0
    %170 = vmatprep.subr.mxu0 0.0
    %171 = vmatpush2.msra.mxu0 0.0
    %172 = vmatprep.subr.mxu0 0.0
    %173 = vmatpush2.msra.mxu0 0.0
    %174 = vmatprep.subr.mxu0 0.0
    %175 = vmatpush2.msra.mxu0 0.0
    %176 = vmatprep.subr.mxu0 0.0
    %177 = vmatpush2.msra.mxu0 0.0
    %178 = vmatprep.subr.mxu0 0.0
    %179 = vmatpush2.msra.mxu0 0.0
    %180 = vmatprep.subr.mxu0 0.0
    %181 = vmatpush2.msra.mxu0 0.0
    %182 = vmatprep.mubr.f32.mxu0 0.0
    %v183 = vand.u32 %v29, 4294901760
    %184 = vmatmul.mubr.f32.gmra.mxu0 %v183
    %v185 = vpop.f32.mrf.mxu0
    %v186 = vadd.f32 %v105, %v185
    %v187 = vpop.f32.mrf.mxu0
    %188 = vdwg.mxu0
    %189 = vmatprep.subr.mxu0 0.0
    %190 = vmatpush1.msra.mxu0 0.0
    %191 = vmatprep.subr.mxu0 0.0
    %192 = vmatpush1.msra.mxu0 0.0
    %193 = vmatprep.subr.mxu0 0.0
    %194 = vmatpush1.msra.mxu0 0.0
    %195 = vmatprep.subr.mxu0 0.0
    %196 = vmatpush1.msra.mxu0 0.0
    %197 = vmatprep.subr.mxu0 0.0
    %198 = vmatpush1.msra.mxu0 0.0
    %199 = vmatprep.subr.mxu0 0.0
    %200 = vmatpush1.msra.mxu0 0.0
    %201 = vmatprep.subr.mxu0 0.0
    %202 = vmatpush1.msra.mxu0 0.0
    %203 = vmatprep.subr.mxu0 0.0
    %204 = vmatpush1.msra.mxu0 0.0
    %205 = vmatprep.subr.mxu0 0.0
    %206 = vmatpush1.msra.mxu0 0.0
    %207 = vmatprep.subr.mxu0 0.0
    %208 = vmatpush1.msra.mxu0 0.0
    %209 = vmatprep.subr.mxu0 0.0
    %210 = vmatpush1.msra.mxu0 0.0
    %211 = vmatprep.subr.mxu0 0.0
    %212 = vmatpush1.msra.mxu0 0.0
    %213 = vmatprep.subr.mxu0 0.0
    %214 = vmatpush1.msra.mxu0 0.0
    %215 = vmatprep.subr.mxu0 0.0
    %216 = vmatpush1.msra.mxu0 0.0
    %217 = vmatprep.subr.mxu0 0.0
    %v218 = vand.u32 %v25, 4294901760
    %v219 = vsub.f32 %v25, %v218
    %220 = vmatpush1.msra.mxu0 %v219
    %221 = vmatprep.subr.mxu0 0.0
    %v222 = vand.u32 %v24, 4294901760
    %v223 = vsub.f32 %v24, %v222
    %224 = vmatpush1.msra.mxu0 %v223
    %225 = vmatprep.subr.mxu0 0.0
    %226 = vmatpush2.msra.mxu0 0.0
    %227 = vmatprep.subr.mxu0 0.0
    %228 = vmatpush2.msra.mxu0 0.0
    %229 = vmatprep.subr.mxu0 0.0
    %230 = vmatpush2.msra.mxu0 0.0
    %231 = vmatprep.subr.mxu0 0.0
    %232 = vmatpush2.msra.mxu0 0.0
    %233 = vmatprep.subr.mxu0 0.0
    %234 = vmatpush2.msra.mxu0 0.0
    %235 = vmatprep.subr.mxu0 0.0
    %236 = vmatpush2.msra.mxu0 0.0
    %237 = vmatprep.subr.mxu0 0.0
    %238 = vmatpush2.msra.mxu0 0.0
    %239 = vmatprep.subr.mxu0 0.0
    %240 = vmatpush2.msra.mxu0 0.0
    %241 = vmatprep.subr.mxu0 0.0
    %242 = vmatpush2.msra.mxu0 0.0
    %243 = vmatprep.subr.mxu0 0.0
    %244 = vmatpush2.msra.mxu0 0.0
    %245 = vmatprep.subr.mxu0 0.0
    %246 = vmatpush2.msra.mxu0 0.0
    %247 = vmatprep.subr.mxu0 0.0
    %248 = vmatpush2.msra.mxu0 0.0
    %249 = vmatprep.subr.mxu0 0.0
    %250 = vmatpush2.msra.mxu0 0.0
    %251 = vmatprep.subr.mxu0 0.0
    %252 = vmatpush2.msra.mxu0 0.0
    %253 = vmatprep.subr.mxu0 0.0
    %254 = vmatpush2.msra.mxu0 0.0
    %255 = vmatprep.subr.mxu0 0.0
    %256 = vmatpush2.msra.mxu0 0.0
    %257 = vmatprep.mubr.f32.mxu0 0.0
    %v258 = vand.u32 %v29, 4294901760
    %v259 = vsub.f32 %v29, %v258
    %260 = vmatmul.mubr.f32.gmra.mxu0 %v259
    %v261 = vpop.f32.mrf.mxu0
    %v262 = vadd.f32 %v186, %v261
    %v263 = vpop.f32.mrf.mxu0
    %264 = vdwg.mxu0
    %265 = vmatprep.subr.mxu0 0.0
    %266 = vmatpush1.msra.mxu0 0.0
    %267 = vmatprep.subr.mxu0 0.0
    %268 = vmatpush1.msra.mxu0 0.0
    %269 = vmatprep.subr.mxu0 0.0
    %270 = vmatpush1.msra.mxu0 0.0
    %271 = vmatprep.subr.mxu0 0.0
    %272 = vmatpush1.msra.mxu0 0.0
    %273 = vmatprep.subr.mxu0 0.0
    %274 = vmatpush1.msra.mxu0 0.0
    %275 = vmatprep.subr.mxu0 0.0
    %276 = vmatpush1.msra.mxu0 0.0
    %277 = vmatprep.subr.mxu0 0.0
    %278 = vmatpush1.msra.mxu0 0.0
    %279 = vmatprep.subr.mxu0 0.0
    %280 = vmatpush1.msra.mxu0 0.0
    %281 = vmatprep.subr.mxu0 0.0
    %282 = vmatpush1.msra.mxu0 0.0
    %283 = vmatprep.subr.mxu0 0.0
    %284 = vmatpush1.msra.mxu0 0.0
    %285 = vmatprep.subr.mxu0 0.0
    %286 = vmatpush1.msra.mxu0 0.0
    %287 = vmatprep.subr.mxu0 0.0
    %288 = vmatpush1.msra.mxu0 0.0
    %289 = vmatprep.subr.mxu0 0.0
    %290 = vmatpush1.msra.mxu0 0.0
    %291 = vmatprep.subr.mxu0 0.0
    %292 = vmatpush1.msra.mxu0 0.0
    %293 = vmatprep.subr.mxu0 0.0
    %v294 = vand.u32 %v25, 4294901760
    %295 = vmatpush1.msra.mxu0 %v294
    %296 = vmatprep.subr.mxu0 0.0
    %v297 = vand.u32 %v24, 4294901760
    %298 = vmatpush1.msra.mxu0 %v297
    %299 = vmatprep.subr.mxu0 0.0
    %300 = vmatpush2.msra.mxu0 0.0
    %301 = vmatprep.subr.mxu0 0.0
    %302 = vmatpush2.msra.mxu0 0.0
    %303 = vmatprep.subr.mxu0 0.0
    %304 = vmatpush2.msra.mxu0 0.0
    %305 = vmatprep.subr.mxu0 0.0
    %306 = vmatpush2.msra.mxu0 0.0
    %307 = vmatprep.subr.mxu0 0.0
    %308 = vmatpush2.msra.mxu0 0.0
    %309 = vmatprep.subr.mxu0 0.0
    %310 = vmatpush2.msra.mxu0 0.0
    %311 = vmatprep.subr.mxu0 0.0
    %312 = vmatpush2.msra.mxu0 0.0
    %313 = vmatprep.subr.mxu0 0.0
    %314 = vmatpush2.msra.mxu0 0.0
    %315 = vmatprep.subr.mxu0 0.0
    %316 = vmatpush2.msra.mxu0 0.0
    %317 = vmatprep.subr.mxu0 0.0
    %318 = vmatpush2.msra.mxu0 0.0
    %319 = vmatprep.subr.mxu0 0.0
    %320 = vmatpush2.msra.mxu0 0.0
    %321 = vmatprep.subr.mxu0 0.0
    %322 = vmatpush2.msra.mxu0 0.0
    %323 = vmatprep.subr.mxu0 0.0
    %324 = vmatpush2.msra.mxu0 0.0
    %325 = vmatprep.subr.mxu0 0.0
    %326 = vmatpush2.msra.mxu0 0.0
    %327 = vmatprep.subr.mxu0 0.0
    %328 = vmatpush2.msra.mxu0 0.0
    %329 = vmatprep.subr.mxu0 0.0
    %330 = vmatpush2.msra.mxu0 0.0
    %331 = vmatprep.mubr.f32.mxu0 0.0
    %v332 = vand.u32 %v29, 4294901760
    %v333 = vsub.f32 %v29, %v332
    %v334 = vand.u32 %v333, 4294901760
    %335 = vmatmul.mubr.f32.gmra.mxu0 %v334
    %v336 = vpop.f32.mrf.mxu0
    %v337 = vadd.f32 %v262, %v336
    %v338 = vpop.f32.mrf.mxu0
    %339 = vdwg.mxu0
    %340 = vmatprep.subr.mxu0 0.0
    %341 = vmatpush1.msra.mxu0 0.0
    %342 = vmatprep.subr.mxu0 0.0
    %343 = vmatpush1.msra.mxu0 0.0
    %344 = vmatprep.subr.mxu0 0.0
    %345 = vmatpush1.msra.mxu0 0.0
    %346 = vmatprep.subr.mxu0 0.0
    %347 = vmatpush1.msra.mxu0 0.0
    %348 = vmatprep.subr.mxu0 0.0
    %349 = vmatpush1.msra.mxu0 0.0
    %350 = vmatprep.subr.mxu0 0.0
    %351 = vmatpush1.msra.mxu0 0.0
    %352 = vmatprep.subr.mxu0 0.0
    %353 = vmatpush1.msra.mxu0 0.0
    %354 = vmatprep.subr.mxu0 0.0
    %355 = vmatpush1.msra.mxu0 0.0
    %356 = vmatprep.subr.mxu0 0.0
    %357 = vmatpush1.msra.mxu0 0.0
    %358 = vmatprep.subr.mxu0 0.0
    %359 = vmatpush1.msra.mxu0 0.0
    %360 = vmatprep.subr.mxu0 0.0
    %361 = vmatpush1.msra.mxu0 0.0
    %362 = vmatprep.subr.mxu0 0.0
    %363 = vmatpush1.msra.mxu0 0.0
    %364 = vmatprep.subr.mxu0 0.0
    %365 = vmatpush1.msra.mxu0 0.0
    %366 = vmatprep.subr.mxu0 0.0
    %367 = vmatpush1.msra.mxu0 0.0
    %368 = vmatprep.subr.mxu0 0.0
    %v369 = vand.u32 %v25, 4294901760
    %v370 = vsub.f32 %v25, %v369
    %v371 = vand.u32 %v370, 4294901760
    %372 = vmatpush1.msra.mxu0 %v371
    %373 = vmatprep.subr.mxu0 0.0
    %v374 = vand.u32 %v24, 4294901760
    %v375 = vsub.f32 %v24, %v374
    %v376 = vand.u32 %v375, 4294901760
    %377 = vmatpush1.msra.mxu0 %v376
    %378 = vmatprep.subr.mxu0 0.0
    %379 = vmatpush2.msra.mxu0 0.0
    %380 = vmatprep.subr.mxu0 0.0
    %381 = vmatpush2.msra.mxu0 0.0
    %382 = vmatprep.subr.mxu0 0.0
    %383 = vmatpush2.msra.mxu0 0.0
    %384 = vmatprep.subr.mxu0 0.0
    %385 = vmatpush2.msra.mxu0 0.0
    %386 = vmatprep.subr.mxu0 0.0
    %387 = vmatpush2.msra.mxu0 0.0
    %388 = vmatprep.subr.mxu0 0.0
    %389 = vmatpush2.msra.mxu0 0.0
    %390 = vmatprep.subr.mxu0 0.0
    %391 = vmatpush2.msra.mxu0 0.0
    %392 = vmatprep.subr.mxu0 0.0
    %393 = vmatpush2.msra.mxu0 0.0
    %394 = vmatprep.subr.mxu0 0.0
    %395 = vmatpush2.msra.mxu0 0.0
    %396 = vmatprep.subr.mxu0 0.0
    %397 = vmatpush2.msra.mxu0 0.0
    %398 = vmatprep.subr.mxu0 0.0
    %399 = vmatpush2.msra.mxu0 0.0
    %400 = vmatprep.subr.mxu0 0.0
    %401 = vmatpush2.msra.mxu0 0.0
    %402 = vmatprep.subr.mxu0 0.0
    %403 = vmatpush2.msra.mxu0 0.0
    %404 = vmatprep.subr.mxu0 0.0
    %405 = vmatpush2.msra.mxu0 0.0
    %406 = vmatprep.subr.mxu0 0.0
    %407 = vmatpush2.msra.mxu0 0.0
    %408 = vmatprep.subr.mxu0 0.0
    %409 = vmatpush2.msra.mxu0 0.0
    %410 = vmatprep.mubr.f32.mxu0 0.0
    %v411 = vand.u32 %v29, 4294901760
    %412 = vmatmul.mubr.f32.gmra.mxu0 %v411
    %v413 = vpop.f32.mrf.mxu0
    %v414 = vadd.f32 %v337, %v413
    %v415 = vpop.f32.mrf.mxu0
    %416 = vdwg.mxu0
    %417 = vmatprep.subr.mxu0 0.0
    %418 = vmatpush1.msra.mxu0 0.0
    %419 = vmatprep.subr.mxu0 0.0
    %420 = vmatpush1.msra.mxu0 0.0
    %421 = vmatprep.subr.mxu0 0.0
    %422 = vmatpush1.msra.mxu0 0.0
    %423 = vmatprep.subr.mxu0 0.0
    %424 = vmatpush1.msra.mxu0 0.0
    %425 = vmatprep.subr.mxu0 0.0
    %426 = vmatpush1.msra.mxu0 0.0
    %427 = vmatprep.subr.mxu0 0.0
    %428 = vmatpush1.msra.mxu0 0.0
    %429 = vmatprep.subr.mxu0 0.0
    %430 = vmatpush1.msra.mxu0 0.0
    %431 = vmatprep.subr.mxu0 0.0
    %432 = vmatpush1.msra.mxu0 0.0
    %433 = vmatprep.subr.mxu0 0.0
    %434 = vmatpush1.msra.mxu0 0.0
    %435 = vmatprep.subr.mxu0 0.0
    %436 = vmatpush1.msra.mxu0 0.0
    %437 = vmatprep.subr.mxu0 0.0
    %438 = vmatpush1.msra.mxu0 0.0
    %439 = vmatprep.subr.mxu0 0.0
    %440 = vmatpush1.msra.mxu0 0.0
    %441 = vmatprep.subr.mxu0 0.0
    %442 = vmatpush1.msra.mxu0 0.0
    %443 = vmatprep.subr.mxu0 0.0
    %444 = vmatpush1.msra.mxu0 0.0
    %445 = vmatprep.subr.mxu0 0.0
    %v446 = vand.u32 %v25, 4294901760
    %447 = vmatpush1.msra.mxu0 %v446
    %448 = vmatprep.subr.mxu0 0.0
    %v449 = vand.u32 %v24, 4294901760
    %450 = vmatpush1.msra.mxu0 %v449
    %451 = vmatprep.subr.mxu0 0.0
    %452 = vmatpush2.msra.mxu0 0.0
    %453 = vmatprep.subr.mxu0 0.0
    %454 = vmatpush2.msra.mxu0 0.0
    %455 = vmatprep.subr.mxu0 0.0
    %456 = vmatpush2.msra.mxu0 0.0
    %457 = vmatprep.subr.mxu0 0.0
    %458 = vmatpush2.msra.mxu0 0.0
    %459 = vmatprep.subr.mxu0 0.0
    %460 = vmatpush2.msra.mxu0 0.0
    %461 = vmatprep.subr.mxu0 0.0
    %462 = vmatpush2.msra.mxu0 0.0
    %463 = vmatprep.subr.mxu0 0.0
    %464 = vmatpush2.msra.mxu0 0.0
    %465 = vmatprep.subr.mxu0 0.0
    %466 = vmatpush2.msra.mxu0 0.0
    %467 = vmatprep.subr.mxu0 0.0
    %468 = vmatpush2.msra.mxu0 0.0
    %469 = vmatprep.subr.mxu0 0.0
    %470 = vmatpush2.msra.mxu0 0.0
    %471 = vmatprep.subr.mxu0 0.0
    %472 = vmatpush2.msra.mxu0 0.0
    %473 = vmatprep.subr.mxu0 0.0
    %474 = vmatpush2.msra.mxu0 0.0
    %475 = vmatprep.subr.mxu0 0.0
    %476 = vmatpush2.msra.mxu0 0.0
    %477 = vmatprep.subr.mxu0 0.0
    %478 = vmatpush2.msra.mxu0 0.0
    %479 = vmatprep.subr.mxu0 0.0
    %480 = vmatpush2.msra.mxu0 0.0
    %481 = vmatprep.subr.mxu0 0.0
    %482 = vmatpush2.msra.mxu0 0.0
    %483 = vmatprep.mubr.f32.mxu0 0.0
    %v484 = vand.u32 %v29, 4294901760
    %485 = vmatmul.mubr.f32.gmra.mxu0 %v484
    %v486 = vpop.f32.mrf.mxu0
    %v487 = vadd.f32 %v414, %v486
    %v488 = vpop.f32.mrf.mxu0
    %489 = vdwg.mxu0
    %s490 = scalar_lea.vmem %s1, 8
    %v491 = vld [vmem:[%s490] sm:$0xff]
    %v493 = vsel %vm27, %v491, 0
    %495 = vmatprep.subr.mxu0 0.0
    %496 = vmatpush1.msra.mxu0 0.0
    %497 = vmatprep.subr.mxu0 0.0
    %498 = vmatpush1.msra.mxu0 0.0
    %499 = vmatprep.subr.mxu0 0.0
    %500 = vmatpush1.msra.mxu0 0.0
    %501 = vmatprep.subr.mxu0 0.0
    %502 = vmatpush1.msra.mxu0 0.0
    %503 = vmatprep.subr.mxu0 0.0
    %504 = vmatpush1.msra.mxu0 0.0
    %505 = vmatprep.subr.mxu0 0.0
    %506 = vmatpush1.msra.mxu0 0.0
    %507 = vmatprep.subr.mxu0 0.0
    %508 = vmatpush1.msra.mxu0 0.0
    %509 = vmatprep.subr.mxu0 0.0
    %510 = vmatpush1.msra.mxu0 0.0
    %511 = vmatprep.subr.mxu0 0.0
    %512 = vmatpush1.msra.mxu0 0.0
    %513 = vmatprep.subr.mxu0 0.0
    %514 = vmatpush1.msra.mxu0 0.0
    %515 = vmatprep.subr.mxu0 0.0
    %516 = vmatpush1.msra.mxu0 0.0
    %517 = vmatprep.subr.mxu0 0.0
    %518 = vmatpush1.msra.mxu0 0.0
    %519 = vmatprep.subr.mxu0 0.0
    %520 = vmatpush1.msra.mxu0 0.0
    %521 = vmatprep.subr.mxu0 0.0
    %522 = vmatpush1.msra.mxu0 0.0
    %523 = vmatprep.subr.mxu0 0.0
    %v524 = vand.u32 %v25, 4294901760
    %525 = vmatpush1.msra.mxu0 %v524
    %526 = vmatprep.subr.mxu0 0.0
    %v527 = vand.u32 %v24, 4294901760
    %528 = vmatpush1.msra.mxu0 %v527
    %529 = vmatprep.subr.mxu0 0.0
    %530 = vmatpush2.msra.mxu0 0.0
    %531 = vmatprep.subr.mxu0 0.0
    %532 = vmatpush2.msra.mxu0 0.0
    %533 = vmatprep.subr.mxu0 0.0
    %534 = vmatpush2.msra.mxu0 0.0
    %535 = vmatprep.subr.mxu0 0.0
    %536 = vmatpush2.msra.mxu0 0.0
    %537 = vmatprep.subr.mxu0 0.0
    %538 = vmatpush2.msra.mxu0 0.0
    %539 = vmatprep.subr.mxu0 0.0
    %540 = vmatpush2.msra.mxu0 0.0
    %541 = vmatprep.subr.mxu0 0.0
    %542 = vmatpush2.msra.mxu0 0.0
    %543 = vmatprep.subr.mxu0 0.0
    %544 = vmatpush2.msra.mxu0 0.0
    %545 = vmatprep.subr.mxu0 0.0
    %546 = vmatpush2.msra.mxu0 0.0
    %547 = vmatprep.subr.mxu0 0.0
    %548 = vmatpush2.msra.mxu0 0.0
    %549 = vmatprep.subr.mxu0 0.0
    %550 = vmatpush2.msra.mxu0 0.0
    %551 = vmatprep.subr.mxu0 0.0
    %552 = vmatpush2.msra.mxu0 0.0
    %553 = vmatprep.subr.mxu0 0.0
    %554 = vmatpush2.msra.mxu0 0.0
    %555 = vmatprep.subr.mxu0 0.0
    %556 = vmatpush2.msra.mxu0 0.0
    %557 = vmatprep.subr.mxu0 0.0
    %558 = vmatpush2.msra.mxu0 0.0
    %559 = vmatprep.subr.mxu0 0.0
    %560 = vmatpush2.msra.mxu0 0.0
    %561 = vmatprep.mubr.f32.mxu0 0.0
    %v562 = vand.u32 %v493, 4294901760
    %v563 = vsub.f32 %v493, %v562
    %v564 = vand.u32 %v563, 4294901760
    %v565 = vsub.f32 %v563, %v564
    %v566 = vand.u32 %v565, 4294901760
    %567 = vmatmul.mubr.f32.gmra.mxu0 %v566
    %v568 = vpop.f32.mrf.mxu0
    %v569 = vadd.f32 0.0, %v568
    %v570 = vpop.f32.mrf.mxu0
    %571 = vdwg.mxu0
    %572 = vmatprep.subr.mxu0 0.0
    %573 = vmatpush1.msra.mxu0 0.0
    %574 = vmatprep.subr.mxu0 0.0
    %575 = vmatpush1.msra.mxu0 0.0
    %576 = vmatprep.subr.mxu0 0.0
    %577 = vmatpush1.msra.mxu0 0.0
    %578 = vmatprep.subr.mxu0 0.0
    %579 = vmatpush1.msra.mxu0 0.0
    %580 = vmatprep.subr.mxu0 0.0
    %581 = vmatpush1.msra.mxu0 0.0
    %582 = vmatprep.subr.mxu0 0.0
    %583 = vmatpush1.msra.mxu0 0.0
    %584 = vmatprep.subr.mxu0 0.0
    %585 = vmatpush1.msra.mxu0 0.0
    %586 = vmatprep.subr.mxu0 0.0
    %587 = vmatpush1.msra.mxu0 0.0
    %588 = vmatprep.subr.mxu0 0.0
    %589 = vmatpush1.msra.mxu0 0.0
    %590 = vmatprep.subr.mxu0 0.0
    %591 = vmatpush1.msra.mxu0 0.0
    %592 = vmatprep.subr.mxu0 0.0
    %593 = vmatpush1.msra.mxu0 0.0
    %594 = vmatprep.subr.mxu0 0.0
    %595 = vmatpush1.msra.mxu0 0.0
    %596 = vmatprep.subr.mxu0 0.0
    %597 = vmatpush1.msra.mxu0 0.0
    %598 = vmatprep.subr.mxu0 0.0
    %599 = vmatpush1.msra.mxu0 0.0
    %600 = vmatprep.subr.mxu0 0.0
    %v601 = vand.u32 %v25, 4294901760
    %v602 = vsub.f32 %v25, %v601
    %v603 = vand.u32 %v602, 4294901760
    %v604 = vsub.f32 %v602, %v603
    %v605 = vand.u32 %v604, 4294901760
    %606 = vmatpush1.msra.mxu0 %v605
    %607 = vmatprep.subr.mxu0 0.0
    %v608 = vand.u32 %v24, 4294901760
    %v609 = vsub.f32 %v24, %v608
    %v610 = vand.u32 %v609, 4294901760
    %v611 = vsub.f32 %v609, %v610
    %v612 = vand.u32 %v611, 4294901760
    %613 = vmatpush1.msra.mxu0 %v612
    %614 = vmatprep.subr.mxu0 0.0
    %615 = vmatpush2.msra.mxu0 0.0
    %616 = vmatprep.subr.mxu0 0.0
    %617 = vmatpush2.msra.mxu0 0.0
    %618 = vmatprep.subr.mxu0 0.0
    %619 = vmatpush2.msra.mxu0 0.0
    %620 = vmatprep.subr.mxu0 0.0
    %621 = vmatpush2.msra.mxu0 0.0
    %622 = vmatprep.subr.mxu0 0.0
    %623 = vmatpush2.msra.mxu0 0.0
    %624 = vmatprep.subr.mxu0 0.0
    %625 = vmatpush2.msra.mxu0 0.0
    %626 = vmatprep.subr.mxu0 0.0
    %627 = vmatpush2.msra.mxu0 0.0
    %628 = vmatprep.subr.mxu0 0.0
    %629 = vmatpush2.msra.mxu0 0.0
    %630 = vmatprep.subr.mxu0 0.0
    %631 = vmatpush2.msra.mxu0 0.0
    %632 = vmatprep.subr.mxu0 0.0
    %633 = vmatpush2.msra.mxu0 0.0
    %634 = vmatprep.subr.mxu0 0.0
    %635 = vmatpush2.msra.mxu0 0.0
    %636 = vmatprep.subr.mxu0 0.0
    %637 = vmatpush2.msra.mxu0 0.0
    %638 = vmatprep.subr.mxu0 0.0
    %639 = vmatpush2.msra.mxu0 0.0
    %640 = vmatprep.subr.mxu0 0.0
    %641 = vmatpush2.msra.mxu0 0.0
    %642 = vmatprep.subr.mxu0 0.0
    %643 = vmatpush2.msra.mxu0 0.0
    %644 = vmatprep.subr.mxu0 0.0
    %645 = vmatpush2.msra.mxu0 0.0
    %646 = vmatprep.mubr.f32.mxu0 0.0
    %v647 = vand.u32 %v493, 4294901760
    %648 = vmatmul.mubr.f32.gmra.mxu0 %v647
    %v649 = vpop.f32.mrf.mxu0
    %v650 = vadd.f32 %v569, %v649
    %v651 = vpop.f32.mrf.mxu0
    %652 = vdwg.mxu0
    %653 = vmatprep.subr.mxu0 0.0
    %654 = vmatpush1.msra.mxu0 0.0
    %655 = vmatprep.subr.mxu0 0.0
    %656 = vmatpush1.msra.mxu0 0.0
    %657 = vmatprep.subr.mxu0 0.0
    %658 = vmatpush1.msra.mxu0 0.0
    %659 = vmatprep.subr.mxu0 0.0
    %660 = vmatpush1.msra.mxu0 0.0
    %661 = vmatprep.subr.mxu0 0.0
    %662 = vmatpush1.msra.mxu0 0.0
    %663 = vmatprep.subr.mxu0 0.0
    %664 = vmatpush1.msra.mxu0 0.0
    %665 = vmatprep.subr.mxu0 0.0
    %666 = vmatpush1.msra.mxu0 0.0
    %667 = vmatprep.subr.mxu0 0.0
    %668 = vmatpush1.msra.mxu0 0.0
    %669 = vmatprep.subr.mxu0 0.0
    %670 = vmatpush1.msra.mxu0 0.0
    %671 = vmatprep.subr.mxu0 0.0
    %672 = vmatpush1.msra.mxu0 0.0
    %673 = vmatprep.subr.mxu0 0.0
    %674 = vmatpush1.msra.mxu0 0.0
    %675 = vmatprep.subr.mxu0 0.0
    %676 = vmatpush1.msra.mxu0 0.0
    %677 = vmatprep.subr.mxu0 0.0
    %678 = vmatpush1.msra.mxu0 0.0
    %679 = vmatprep.subr.mxu0 0.0
    %680 = vmatpush1.msra.mxu0 0.0
    %681 = vmatprep.subr.mxu0 0.0
    %v682 = vand.u32 %v25, 4294901760
    %v683 = vsub.f32 %v25, %v682
    %684 = vmatpush1.msra.mxu0 %v683
    %685 = vmatprep.subr.mxu0 0.0
    %v686 = vand.u32 %v24, 4294901760
    %v687 = vsub.f32 %v24, %v686
    %688 = vmatpush1.msra.mxu0 %v687
    %689 = vmatprep.subr.mxu0 0.0
    %690 = vmatpush2.msra.mxu0 0.0
    %691 = vmatprep.subr.mxu0 0.0
    %692 = vmatpush2.msra.mxu0 0.0
    %693 = vmatprep.subr.mxu0 0.0
    %694 = vmatpush2.msra.mxu0 0.0
    %695 = vmatprep.subr.mxu0 0.0
    %696 = vmatpush2.msra.mxu0 0.0
    %697 = vmatprep.subr.mxu0 0.0
    %698 = vmatpush2.msra.mxu0 0.0
    %699 = vmatprep.subr.mxu0 0.0
    %700 = vmatpush2.msra.mxu0 0.0
    %701 = vmatprep.subr.mxu0 0.0
    %702 = vmatpush2.msra.mxu0 0.0
    %703 = vmatprep.subr.mxu0 0.0
    %704 = vmatpush2.msra.mxu0 0.0
    %705 = vmatprep.subr.mxu0 0.0
    %706 = vmatpush2.msra.mxu0 0.0
    %707 = vmatprep.subr.mxu0 0.0
    %708 = vmatpush2.msra.mxu0 0.0
    %709 = vmatprep.subr.mxu0 0.0
    %710 = vmatpush2.msra.mxu0 0.0
    %711 = vmatprep.subr.mxu0 0.0
    %712 = vmatpush2.msra.mxu0 0.0
    %713 = vmatprep.subr.mxu0 0.0
    %714 = vmatpush2.msra.mxu0 0.0
    %715 = vmatprep.subr.mxu0 0.0
    %716 = vmatpush2.msra.mxu0 0.0
    %717 = vmatprep.subr.mxu0 0.0
    %718 = vmatpush2.msra.mxu0 0.0
    %719 = vmatprep.subr.mxu0 0.0
    %720 = vmatpush2.msra.mxu0 0.0
    %721 = vmatprep.mubr.f32.mxu0 0.0
    %v722 = vand.u32 %v493, 4294901760
    %v723 = vsub.f32 %v493, %v722
    %724 = vmatmul.mubr.f32.gmra.mxu0 %v723
    %v725 = vpop.f32.mrf.mxu0
    %v726 = vadd.f32 %v650, %v725
    %v727 = vpop.f32.mrf.mxu0
    %728 = vdwg.mxu0
    %729 = vmatprep.subr.mxu0 0.0
    %730 = vmatpush1.msra.mxu0 0.0
    %731 = vmatprep.subr.mxu0 0.0
    %732 = vmatpush1.msra.mxu0 0.0
    %733 = vmatprep.subr.mxu0 0.0
    %734 = vmatpush1.msra.mxu0 0.0
    %735 = vmatprep.subr.mxu0 0.0
    %736 = vmatpush1.msra.mxu0 0.0
    %737 = vmatprep.subr.mxu0 0.0
    %738 = vmatpush1.msra.mxu0 0.0
    %739 = vmatprep.subr.mxu0 0.0
    %740 = vmatpush1.msra.mxu0 0.0
    %741 = vmatprep.subr.mxu0 0.0
    %742 = vmatpush1.msra.mxu0 0.0
    %743 = vmatprep.subr.mxu0 0.0
    %744 = vmatpush1.msra.mxu0 0.0
    %745 = vmatprep.subr.mxu0 0.0
    %746 = vmatpush1.msra.mxu0 0.0
    %747 = vmatprep.subr.mxu0 0.0
    %748 = vmatpush1.msra.mxu0 0.0
    %749 = vmatprep.subr.mxu0 0.0
    %750 = vmatpush1.msra.mxu0 0.0
    %751 = vmatprep.subr.mxu0 0.0
    %752 = vmatpush1.msra.mxu0 0.0
    %753 = vmatprep.subr.mxu0 0.0
    %754 = vmatpush1.msra.mxu0 0.0
    %755 = vmatprep.subr.mxu0 0.0
    %756 = vmatpush1.msra.mxu0 0.0
    %757 = vmatprep.subr.mxu0 0.0
    %v758 = vand.u32 %v25, 4294901760
    %759 = vmatpush1.msra.mxu0 %v758
    %760 = vmatprep.subr.mxu0 0.0
    %v761 = vand.u32 %v24, 4294901760
    %762 = vmatpush1.msra.mxu0 %v761
    %763 = vmatprep.subr.mxu0 0.0
    %764 = vmatpush2.msra.mxu0 0.0
    %765 = vmatprep.subr.mxu0 0.0
    %766 = vmatpush2.msra.mxu0 0.0
    %767 = vmatprep.subr.mxu0 0.0
    %768 = vmatpush2.msra.mxu0 0.0
    %769 = vmatprep.subr.mxu0 0.0
    %770 = vmatpush2.msra.mxu0 0.0
    %771 = vmatprep.subr.mxu0 0.0
    %772 = vmatpush2.msra.mxu0 0.0
    %773 = vmatprep.subr.mxu0 0.0
    %774 = vmatpush2.msra.mxu0 0.0
    %775 = vmatprep.subr.mxu0 0.0
    %776 = vmatpush2.msra.mxu0 0.0
    %777 = vmatprep.subr.mxu0 0.0
    %778 = vmatpush2.msra.mxu0 0.0
    %779 = vmatprep.subr.mxu0 0.0
    %780 = vmatpush2.msra.mxu0 0.0
    %781 = vmatprep.subr.mxu0 0.0
    %782 = vmatpush2.msra.mxu0 0.0
    %783 = vmatprep.subr.mxu0 0.0
    %784 = vmatpush2.msra.mxu0 0.0
    %785 = vmatprep.subr.mxu0 0.0
    %786 = vmatpush2.msra.mxu0 0.0
    %787 = vmatprep.subr.mxu0 0.0
    %788 = vmatpush2.msra.mxu0 0.0
    %789 = vmatprep.subr.mxu0 0.0
    %790 = vmatpush2.msra.mxu0 0.0
    %791 = vmatprep.subr.mxu0 0.0
    %792 = vmatpush2.msra.mxu0 0.0
    %793 = vmatprep.subr.mxu0 0.0
    %794 = vmatpush2.msra.mxu0 0.0
    %795 = vmatprep.mubr.f32.mxu0 0.0
    %v796 = vand.u32 %v493, 4294901760
    %v797 = vsub.f32 %v493, %v796
    %v798 = vand.u32 %v797, 4294901760
    %799 = vmatmul.mubr.f32.gmra.mxu0 %v798
    %v800 = vpop.f32.mrf.mxu0
    %v801 = vadd.f32 %v726, %v800
    %v802 = vpop.f32.mrf.mxu0
    %803 = vdwg.mxu0
    %804 = vmatprep.subr.mxu0 0.0
    %805 = vmatpush1.msra.mxu0 0.0
    %806 = vmatprep.subr.mxu0 0.0
    %807 = vmatpush1.msra.mxu0 0.0
    %808 = vmatprep.subr.mxu0 0.0
    %809 = vmatpush1.msra.mxu0 0.0
    %810 = vmatprep.subr.mxu0 0.0
    %811 = vmatpush1.msra.mxu0 0.0
    %812 = vmatprep.subr.mxu0 0.0
    %813 = vmatpush1.msra.mxu0 0.0
    %814 = vmatprep.subr.mxu0 0.0
    %815 = vmatpush1.msra.mxu0 0.0
    %816 = vmatprep.subr.mxu0 0.0
    %817 = vmatpush1.msra.mxu0 0.0
    %818 = vmatprep.subr.mxu0 0.0
    %819 = vmatpush1.msra.mxu0 0.0
    %820 = vmatprep.subr.mxu0 0.0
    %821 = vmatpush1.msra.mxu0 0.0
    %822 = vmatprep.subr.mxu0 0.0
    %823 = vmatpush1.msra.mxu0 0.0
    %824 = vmatprep.subr.mxu0 0.0
    %825 = vmatpush1.msra.mxu0 0.0
    %826 = vmatprep.subr.mxu0 0.0
    %827 = vmatpush1.msra.mxu0 0.0
    %828 = vmatprep.subr.mxu0 0.0
    %829 = vmatpush1.msra.mxu0 0.0
    %830 = vmatprep.subr.mxu0 0.0
    %831 = vmatpush1.msra.mxu0 0.0
    %832 = vmatprep.subr.mxu0 0.0
    %v833 = vand.u32 %v25, 4294901760
    %v834 = vsub.f32 %v25, %v833
    %v835 = vand.u32 %v834, 4294901760
    %836 = vmatpush1.msra.mxu0 %v835
    %837 = vmatprep.subr.mxu0 0.0
    %v838 = vand.u32 %v24, 4294901760
    %v839 = vsub.f32 %v24, %v838
    %v840 = vand.u32 %v839, 4294901760
    %841 = vmatpush1.msra.mxu0 %v840
    %842 = vmatprep.subr.mxu0 0.0
    %843 = vmatpush2.msra.mxu0 0.0
    %844 = vmatprep.subr.mxu0 0.0
    %845 = vmatpush2.msra.mxu0 0.0
    %846 = vmatprep.subr.mxu0 0.0
    %847 = vmatpush2.msra.mxu0 0.0
    %848 = vmatprep.subr.mxu0 0.0
    %849 = vmatpush2.msra.mxu0 0.0
    %850 = vmatprep.subr.mxu0 0.0
    %851 = vmatpush2.msra.mxu0 0.0
    %852 = vmatprep.subr.mxu0 0.0
    %853 = vmatpush2.msra.mxu0 0.0
    %854 = vmatprep.subr.mxu0 0.0
    %855 = vmatpush2.msra.mxu0 0.0
    %856 = vmatprep.subr.mxu0 0.0
    %857 = vmatpush2.msra.mxu0 0.0
    %858 = vmatprep.subr.mxu0 0.0
    %859 = vmatpush2.msra.mxu0 0.0
    %860 = vmatprep.subr.mxu0 0.0
    %861 = vmatpush2.msra.mxu0 0.0
    %862 = vmatprep.subr.mxu0 0.0
    %863 = vmatpush2.msra.mxu0 0.0
    %864 = vmatprep.subr.mxu0 0.0
    %865 = vmatpush2.msra.mxu0 0.0
    %866 = vmatprep.subr.mxu0 0.0
    %867 = vmatpush2.msra.mxu0 0.0
    %868 = vmatprep.subr.mxu0 0.0
    %869 = vmatpush2.msra.mxu0 0.0
    %870 = vmatprep.subr.mxu0 0.0
    %871 = vmatpush2.msra.mxu0 0.0
    %872 = vmatprep.subr.mxu0 0.0
    %873 = vmatpush2.msra.mxu0 0.0
    %874 = vmatprep.mubr.f32.mxu0 0.0
    %v875 = vand.u32 %v493, 4294901760
    %876 = vmatmul.mubr.f32.gmra.mxu0 %v875
    %v877 = vpop.f32.mrf.mxu0
    %v878 = vadd.f32 %v801, %v877
    %v879 = vpop.f32.mrf.mxu0
    %880 = vdwg.mxu0
    %881 = vmatprep.subr.mxu0 0.0
    %882 = vmatpush1.msra.mxu0 0.0
    %883 = vmatprep.subr.mxu0 0.0
    %884 = vmatpush1.msra.mxu0 0.0
    %885 = vmatprep.subr.mxu0 0.0
    %886 = vmatpush1.msra.mxu0 0.0
    %887 = vmatprep.subr.mxu0 0.0
    %888 = vmatpush1.msra.mxu0 0.0
    %889 = vmatprep.subr.mxu0 0.0
    %890 = vmatpush1.msra.mxu0 0.0
    %891 = vmatprep.subr.mxu0 0.0
    %892 = vmatpush1.msra.mxu0 0.0
    %893 = vmatprep.subr.mxu0 0.0
    %894 = vmatpush1.msra.mxu0 0.0
    %895 = vmatprep.subr.mxu0 0.0
    %896 = vmatpush1.msra.mxu0 0.0
    %897 = vmatprep.subr.mxu0 0.0
    %898 = vmatpush1.msra.mxu0 0.0
    %899 = vmatprep.subr.mxu0 0.0
    %900 = vmatpush1.msra.mxu0 0.0
    %901 = vmatprep.subr.mxu0 0.0
    %902 = vmatpush1.msra.mxu0 0.0
    %903 = vmatprep.subr.mxu0 0.0
    %904 = vmatpush1.msra.mxu0 0.0
    %905 = vmatprep.subr.mxu0 0.0
    %906 = vmatpush1.msra.mxu0 0.0
    %907 = vmatprep.subr.mxu0 0.0
    %908 = vmatpush1.msra.mxu0 0.0
    %909 = vmatprep.subr.mxu0 0.0
    %v910 = vand.u32 %v25, 4294901760
    %911 = vmatpush1.msra.mxu0 %v910
    %912 = vmatprep.subr.mxu0 0.0
    %v913 = vand.u32 %v24, 4294901760
    %914 = vmatpush1.msra.mxu0 %v913
    %915 = vmatprep.subr.mxu0 0.0
    %916 = vmatpush2.msra.mxu0 0.0
    %917 = vmatprep.subr.mxu0 0.0
    %918 = vmatpush2.msra.mxu0 0.0
    %919 = vmatprep.subr.mxu0 0.0
    %920 = vmatpush2.msra.mxu0 0.0
    %921 = vmatprep.subr.mxu0 0.0
    %922 = vmatpush2.msra.mxu0 0.0
    %923 = vmatprep.subr.mxu0 0.0
    %924 = vmatpush2.msra.mxu0 0.0
    %925 = vmatprep.subr.mxu0 0.0
    %926 = vmatpush2.msra.mxu0 0.0
    %927 = vmatprep.subr.mxu0 0.0
    %928 = vmatpush2.msra.mxu0 0.0
    %929 = vmatprep.subr.mxu0 0.0
    %930 = vmatpush2.msra.mxu0 0.0
    %931 = vmatprep.subr.mxu0 0.0
    %932 = vmatpush2.msra.mxu0 0.0
    %933 = vmatprep.subr.mxu0 0.0
    %934 = vmatpush2.msra.mxu0 0.0
    %935 = vmatprep.subr.mxu0 0.0
    %936 = vmatpush2.msra.mxu0 0.0
    %937 = vmatprep.subr.mxu0 0.0
    %938 = vmatpush2.msra.mxu0 0.0
    %939 = vmatprep.subr.mxu0 0.0
    %940 = vmatpush2.msra.mxu0 0.0
    %941 = vmatprep.subr.mxu0 0.0
    %942 = vmatpush2.msra.mxu0 0.0
    %943 = vmatprep.subr.mxu0 0.0
    %944 = vmatpush2.msra.mxu0 0.0
    %945 = vmatprep.subr.mxu0 0.0
    %946 = vmatpush2.msra.mxu0 0.0
    %947 = vmatprep.mubr.f32.mxu0 0.0
    %v948 = vand.u32 %v493, 4294901760
    %949 = vmatmul.mubr.f32.gmra.mxu0 %v948
    %v950 = vpop.f32.mrf.mxu0
    %v951 = vadd.f32 %v878, %v950
    %v952 = vpop.f32.mrf.mxu0
    %953 = vdwg.mxu0
    %s954 = scalar_lea.vmem %s1, 16
    %v955 = vld [vmem:[%s954] sm:$0xff]
    %v957 = vsel %vm27, %v955, 0
    %959 = vmatprep.subr.mxu0 0.0
    %960 = vmatpush1.msra.mxu0 0.0
    %961 = vmatprep.subr.mxu0 0.0
    %962 = vmatpush1.msra.mxu0 0.0
    %963 = vmatprep.subr.mxu0 0.0
    %964 = vmatpush1.msra.mxu0 0.0
    %965 = vmatprep.subr.mxu0 0.0
    %966 = vmatpush1.msra.mxu0 0.0
    %967 = vmatprep.subr.mxu0 0.0
    %968 = vmatpush1.msra.mxu0 0.0
    %969 = vmatprep.subr.mxu0 0.0
    %970 = vmatpush1.msra.mxu0 0.0
    %971 = vmatprep.subr.mxu0 0.0
    %972 = vmatpush1.msra.mxu0 0.0
    %973 = vmatprep.subr.mxu0 0.0
    %974 = vmatpush1.msra.mxu0 0.0
    %975 = vmatprep.subr.mxu0 0.0
    %976 = vmatpush1.msra.mxu0 0.0
    %977 = vmatprep.subr.mxu0 0.0
    %978 = vmatpush1.msra.mxu0 0.0
    %979 = vmatprep.subr.mxu0 0.0
    %980 = vmatpush1.msra.mxu0 0.0
    %981 = vmatprep.subr.mxu0 0.0
    %982 = vmatpush1.msra.mxu0 0.0
    %983 = vmatprep.subr.mxu0 0.0
    %984 = vmatpush1.msra.mxu0 0.0
    %985 = vmatprep.subr.mxu0 0.0
    %986 = vmatpush1.msra.mxu0 0.0
    %987 = vmatprep.subr.mxu0 0.0
    %v988 = vand.u32 %v25, 4294901760
    %989 = vmatpush1.msra.mxu0 %v988
    %990 = vmatprep.subr.mxu0 0.0
    %v991 = vand.u32 %v24, 4294901760
    %992 = vmatpush1.msra.mxu0 %v991
    %993 = vmatprep.subr.mxu0 0.0
    %994 = vmatpush2.msra.mxu0 0.0
    %995 = vmatprep.subr.mxu0 0.0
    %996 = vmatpush2.msra.mxu0 0.0
    %997 = vmatprep.subr.mxu0 0.0
    %998 = vmatpush2.msra.mxu0 0.0
    %999 = vmatprep.subr.mxu0 0.0
    %1000 = vmatpush2.msra.mxu0 0.0
    %1001 = vmatprep.subr.mxu0 0.0
    %1002 = vmatpush2.msra.mxu0 0.0
    %1003 = vmatprep.subr.mxu0 0.0
    %1004 = vmatpush2.msra.mxu0 0.0
    %1005 = vmatprep.subr.mxu0 0.0
    %1006 = vmatpush2.msra.mxu0 0.0
    %1007 = vmatprep.subr.mxu0 0.0
    %1008 = vmatpush2.msra.mxu0 0.0
    %1009 = vmatprep.subr.mxu0 0.0
    %1010 = vmatpush2.msra.mxu0 0.0
    %1011 = vmatprep.subr.mxu0 0.0
    %1012 = vmatpush2.msra.mxu0 0.0
    %1013 = vmatprep.subr.mxu0 0.0
    %1014 = vmatpush2.msra.mxu0 0.0
    %1015 = vmatprep.subr.mxu0 0.0
    %1016 = vmatpush2.msra.mxu0 0.0
    %1017 = vmatprep.subr.mxu0 0.0
    %1018 = vmatpush2.msra.mxu0 0.0
    %1019 = vmatprep.subr.mxu0 0.0
    %1020 = vmatpush2.msra.mxu0 0.0
    %1021 = vmatprep.subr.mxu0 0.0
    %1022 = vmatpush2.msra.mxu0 0.0
    %1023 = vmatprep.subr.mxu0 0.0
    %1024 = vmatpush2.msra.mxu0 0.0
    %1025 = vmatprep.mubr.f32.mxu0 0.0
    %v1026 = vand.u32 %v957, 4294901760
    %v1027 = vsub.f32 %v957, %v1026
    %v1028 = vand.u32 %v1027, 4294901760
    %v1029 = vsub.f32 %v1027, %v1028
    %v1030 = vand.u32 %v1029, 4294901760
    %1031 = vmatmul.mubr.f32.gmra.mxu0 %v1030
    %v1032 = vpop.f32.mrf.mxu0
    %v1033 = vadd.f32 0.0, %v1032
    %v1034 = vpop.f32.mrf.mxu0
    %1035 = vdwg.mxu0
    %1036 = vmatprep.subr.mxu0 0.0
    %1037 = vmatpush1.msra.mxu0 0.0
    %1038 = vmatprep.subr.mxu0 0.0
    %1039 = vmatpush1.msra.mxu0 0.0
    %1040 = vmatprep.subr.mxu0 0.0
    %1041 = vmatpush1.msra.mxu0 0.0
    %1042 = vmatprep.subr.mxu0 0.0
    %1043 = vmatpush1.msra.mxu0 0.0
    %1044 = vmatprep.subr.mxu0 0.0
    %1045 = vmatpush1.msra.mxu0 0.0
    %1046 = vmatprep.subr.mxu0 0.0
    %1047 = vmatpush1.msra.mxu0 0.0
    %1048 = vmatprep.subr.mxu0 0.0
    %1049 = vmatpush1.msra.mxu0 0.0
    %1050 = vmatprep.subr.mxu0 0.0
    %1051 = vmatpush1.msra.mxu0 0.0
    %1052 = vmatprep.subr.mxu0 0.0
    %1053 = vmatpush1.msra.mxu0 0.0
    %1054 = vmatprep.subr.mxu0 0.0
    %1055 = vmatpush1.msra.mxu0 0.0
    %1056 = vmatprep.subr.mxu0 0.0
    %1057 = vmatpush1.msra.mxu0 0.0
    %1058 = vmatprep.subr.mxu0 0.0
    %1059 = vmatpush1.msra.mxu0 0.0
    %1060 = vmatprep.subr.mxu0 0.0
    %1061 = vmatpush1.msra.mxu0 0.0
    %1062 = vmatprep.subr.mxu0 0.0
    %1063 = vmatpush1.msra.mxu0 0.0
    %1064 = vmatprep.subr.mxu0 0.0
    %v1065 = vand.u32 %v25, 4294901760
    %v1066 = vsub.f32 %v25, %v1065
    %v1067 = vand.u32 %v1066, 4294901760
    %v1068 = vsub.f32 %v1066, %v1067
    %v1069 = vand.u32 %v1068, 4294901760
    %1070 = vmatpush1.msra.mxu0 %v1069
    %1071 = vmatprep.subr.mxu0 0.0
    %v1072 = vand.u32 %v24, 4294901760
    %v1073 = vsub.f32 %v24, %v1072
    %v1074 = vand.u32 %v1073, 4294901760
    %v1075 = vsub.f32 %v1073, %v1074
    %v1076 = vand.u32 %v1075, 4294901760
    %1077 = vmatpush1.msra.mxu0 %v1076
    %1078 = vmatprep.subr.mxu0 0.0
    %1079 = vmatpush2.msra.mxu0 0.0
    %1080 = vmatprep.subr.mxu0 0.0
    %1081 = vmatpush2.msra.mxu0 0.0
    %1082 = vmatprep.subr.mxu0 0.0
    %1083 = vmatpush2.msra.mxu0 0.0
    %1084 = vmatprep.subr.mxu0 0.0
    %1085 = vmatpush2.msra.mxu0 0.0
    %1086 = vmatprep.subr.mxu0 0.0
    %1087 = vmatpush2.msra.mxu0 0.0
    %1088 = vmatprep.subr.mxu0 0.0
    %1089 = vmatpush2.msra.mxu0 0.0
    %1090 = vmatprep.subr.mxu0 0.0
    %1091 = vmatpush2.msra.mxu0 0.0
    %1092 = vmatprep.subr.mxu0 0.0
    %1093 = vmatpush2.msra.mxu0 0.0
    %1094 = vmatprep.subr.mxu0 0.0
    %1095 = vmatpush2.msra.mxu0 0.0
    %1096 = vmatprep.subr.mxu0 0.0
    %1097 = vmatpush2.msra.mxu0 0.0
    %1098 = vmatprep.subr.mxu0 0.0
    %1099 = vmatpush2.msra.mxu0 0.0
    %1100 = vmatprep.subr.mxu0 0.0
    %1101 = vmatpush2.msra.mxu0 0.0
    %1102 = vmatprep.subr.mxu0 0.0
    %1103 = vmatpush2.msra.mxu0 0.0
    %1104 = vmatprep.subr.mxu0 0.0
    %1105 = vmatpush2.msra.mxu0 0.0
    %1106 = vmatprep.subr.mxu0 0.0
    %1107 = vmatpush2.msra.mxu0 0.0
    %1108 = vmatprep.subr.mxu0 0.0
    %1109 = vmatpush2.msra.mxu0 0.0
    %1110 = vmatprep.mubr.f32.mxu0 0.0
    %v1111 = vand.u32 %v957, 4294901760
    %1112 = vmatmul.mubr.f32.gmra.mxu0 %v1111
    %v1113 = vpop.f32.mrf.mxu0
    %v1114 = vadd.f32 %v1033, %v1113
    %v1115 = vpop.f32.mrf.mxu0
    %1116 = vdwg.mxu0
    %1117 = vmatprep.subr.mxu0 0.0
    %1118 = vmatpush1.msra.mxu0 0.0
    %1119 = vmatprep.subr.mxu0 0.0
    %1120 = vmatpush1.msra.mxu0 0.0
    %1121 = vmatprep.subr.mxu0 0.0
    %1122 = vmatpush1.msra.mxu0 0.0
    %1123 = vmatprep.subr.mxu0 0.0
    %1124 = vmatpush1.msra.mxu0 0.0
    %1125 = vmatprep.subr.mxu0 0.0
    %1126 = vmatpush1.msra.mxu0 0.0
    %1127 = vmatprep.subr.mxu0 0.0
    %1128 = vmatpush1.msra.mxu0 0.0
    %1129 = vmatprep.subr.mxu0 0.0
    %1130 = vmatpush1.msra.mxu0 0.0
    %1131 = vmatprep.subr.mxu0 0.0
    %1132 = vmatpush1.msra.mxu0 0.0
    %1133 = vmatprep.subr.mxu0 0.0
    %1134 = vmatpush1.msra.mxu0 0.0
    %1135 = vmatprep.subr.mxu0 0.0
    %1136 = vmatpush1.msra.mxu0 0.0
    %1137 = vmatprep.subr.mxu0 0.0
    %1138 = vmatpush1.msra.mxu0 0.0
    %1139 = vmatprep.subr.mxu0 0.0
    %1140 = vmatpush1.msra.mxu0 0.0
    %1141 = vmatprep.subr.mxu0 0.0
    %1142 = vmatpush1.msra.mxu0 0.0
    %1143 = vmatprep.subr.mxu0 0.0
    %1144 = vmatpush1.msra.mxu0 0.0
    %1145 = vmatprep.subr.mxu0 0.0
    %v1146 = vand.u32 %v25, 4294901760
    %v1147 = vsub.f32 %v25, %v1146
    %1148 = vmatpush1.msra.mxu0 %v1147
    %1149 = vmatprep.subr.mxu0 0.0
    %v1150 = vand.u32 %v24, 4294901760
    %v1151 = vsub.f32 %v24, %v1150
    %1152 = vmatpush1.msra.mxu0 %v1151
    %1153 = vmatprep.subr.mxu0 0.0
    %1154 = vmatpush2.msra.mxu0 0.0
    %1155 = vmatprep.subr.mxu0 0.0
    %1156 = vmatpush2.msra.mxu0 0.0
    %1157 = vmatprep.subr.mxu0 0.0
    %1158 = vmatpush2.msra.mxu0 0.0
    %1159 = vmatprep.subr.mxu0 0.0
    %1160 = vmatpush2.msra.mxu0 0.0
    %1161 = vmatprep.subr.mxu0 0.0
    %1162 = vmatpush2.msra.mxu0 0.0
    %1163 = vmatprep.subr.mxu0 0.0
    %1164 = vmatpush2.msra.mxu0 0.0
    %1165 = vmatprep.subr.mxu0 0.0
    %1166 = vmatpush2.msra.mxu0 0.0
    %1167 = vmatprep.subr.mxu0 0.0
    %1168 = vmatpush2.msra.mxu0 0.0
    %1169 = vmatprep.subr.mxu0 0.0
    %1170 = vmatpush2.msra.mxu0 0.0
    %1171 = vmatprep.subr.mxu0 0.0
    %1172 = vmatpush2.msra.mxu0 0.0
    %1173 = vmatprep.subr.mxu0 0.0
    %1174 = vmatpush2.msra.mxu0 0.0
    %1175 = vmatprep.subr.mxu0 0.0
    %1176 = vmatpush2.msra.mxu0 0.0
    %1177 = vmatprep.subr.mxu0 0.0
    %1178 = vmatpush2.msra.mxu0 0.0
    %1179 = vmatprep.subr.mxu0 0.0
    %1180 = vmatpush2.msra.mxu0 0.0
    %1181 = vmatprep.subr.mxu0 0.0
    %1182 = vmatpush2.msra.mxu0 0.0
    %1183 = vmatprep.subr.mxu0 0.0
    %1184 = vmatpush2.msra.mxu0 0.0
    %1185 = vmatprep.mubr.f32.mxu0 0.0
    %v1186 = vand.u32 %v957, 4294901760
    %v1187 = vsub.f32 %v957, %v1186
    %1188 = vmatmul.mubr.f32.gmra.mxu0 %v1187
    %v1189 = vpop.f32.mrf.mxu0
    %v1190 = vadd.f32 %v1114, %v1189
    %v1191 = vpop.f32.mrf.mxu0
    %1192 = vdwg.mxu0
    %1193 = vmatprep.subr.mxu0 0.0
    %1194 = vmatpush1.msra.mxu0 0.0
    %1195 = vmatprep.subr.mxu0 0.0
    %1196 = vmatpush1.msra.mxu0 0.0
    %1197 = vmatprep.subr.mxu0 0.0
    %1198 = vmatpush1.msra.mxu0 0.0
    %1199 = vmatprep.subr.mxu0 0.0
    %1200 = vmatpush1.msra.mxu0 0.0
    %1201 = vmatprep.subr.mxu0 0.0
    %1202 = vmatpush1.msra.mxu0 0.0
    %1203 = vmatprep.subr.mxu0 0.0
    %1204 = vmatpush1.msra.mxu0 0.0
    %1205 = vmatprep.subr.mxu0 0.0
    %1206 = vmatpush1.msra.mxu0 0.0
    %1207 = vmatprep.subr.mxu0 0.0
    %1208 = vmatpush1.msra.mxu0 0.0
    %1209 = vmatprep.subr.mxu0 0.0
    %1210 = vmatpush1.msra.mxu0 0.0
    %1211 = vmatprep.subr.mxu0 0.0
    %1212 = vmatpush1.msra.mxu0 0.0
    %1213 = vmatprep.subr.mxu0 0.0
    %1214 = vmatpush1.msra.mxu0 0.0
    %1215 = vmatprep.subr.mxu0 0.0
    %1216 = vmatpush1.msra.mxu0 0.0
    %1217 = vmatprep.subr.mxu0 0.0
    %1218 = vmatpush1.msra.mxu0 0.0
    %1219 = vmatprep.subr.mxu0 0.0
    %1220 = vmatpush1.msra.mxu0 0.0
    %1221 = vmatprep.subr.mxu0 0.0
    %v1222 = vand.u32 %v25, 4294901760
    %1223 = vmatpush1.msra.mxu0 %v1222
    %1224 = vmatprep.subr.mxu0 0.0
    %v1225 = vand.u32 %v24, 4294901760
    %1226 = vmatpush1.msra.mxu0 %v1225
    %1227 = vmatprep.subr.mxu0 0.0
    %1228 = vmatpush2.msra.mxu0 0.0
    %1229 = vmatprep.subr.mxu0 0.0
    %1230 = vmatpush2.msra.mxu0 0.0
    %1231 = vmatprep.subr.mxu0 0.0
    %1232 = vmatpush2.msra.mxu0 0.0
    %1233 = vmatprep.subr.mxu0 0.0
    %1234 = vmatpush2.msra.mxu0 0.0
    %1235 = vmatprep.subr.mxu0 0.0
    %1236 = vmatpush2.msra.mxu0 0.0
    %1237 = vmatprep.subr.mxu0 0.0
    %1238 = vmatpush2.msra.mxu0 0.0
    %1239 = vmatprep.subr.mxu0 0.0
    %1240 = vmatpush2.msra.mxu0 0.0
    %1241 = vmatprep.subr.mxu0 0.0
    %1242 = vmatpush2.msra.mxu0 0.0
    %1243 = vmatprep.subr.mxu0 0.0
    %1244 = vmatpush2.msra.mxu0 0.0
    %1245 = vmatprep.subr.mxu0 0.0
    %1246 = vmatpush2.msra.mxu0 0.0
    %1247 = vmatprep.subr.mxu0 0.0
    %1248 = vmatpush2.msra.mxu0 0.0
    %1249 = vmatprep.subr.mxu0 0.0
    %1250 = vmatpush2.msra.mxu0 0.0
    %1251 = vmatprep.subr.mxu0 0.0
    %1252 = vmatpush2.msra.mxu0 0.0
    %1253 = vmatprep.subr.mxu0 0.0
    %1254 = vmatpush2.msra.mxu0 0.0
    %1255 = vmatprep.subr.mxu0 0.0
    %1256 = vmatpush2.msra.mxu0 0.0
    %1257 = vmatprep.subr.mxu0 0.0
    %1258 = vmatpush2.msra.mxu0 0.0
    %1259 = vmatprep.mubr.f32.mxu0 0.0
    %v1260 = vand.u32 %v957, 4294901760
    %v1261 = vsub.f32 %v957, %v1260
    %v1262 = vand.u32 %v1261, 4294901760
    %1263 = vmatmul.mubr.f32.gmra.mxu0 %v1262
    %v1264 = vpop.f32.mrf.mxu0
    %v1265 = vadd.f32 %v1190, %v1264
    %v1266 = vpop.f32.mrf.mxu0
    %1267 = vdwg.mxu0
    %1268 = vmatprep.subr.mxu0 0.0
    %1269 = vmatpush1.msra.mxu0 0.0
    %1270 = vmatprep.subr.mxu0 0.0
    %1271 = vmatpush1.msra.mxu0 0.0
    %1272 = vmatprep.subr.mxu0 0.0
    %1273 = vmatpush1.msra.mxu0 0.0
    %1274 = vmatprep.subr.mxu0 0.0
    %1275 = vmatpush1.msra.mxu0 0.0
    %1276 = vmatprep.subr.mxu0 0.0
    %1277 = vmatpush1.msra.mxu0 0.0
    %1278 = vmatprep.subr.mxu0 0.0
    %1279 = vmatpush1.msra.mxu0 0.0
    %1280 = vmatprep.subr.mxu0 0.0
    %1281 = vmatpush1.msra.mxu0 0.0
    %1282 = vmatprep.subr.mxu0 0.0
    %1283 = vmatpush1.msra.mxu0 0.0
    %1284 = vmatprep.subr.mxu0 0.0
    %1285 = vmatpush1.msra.mxu0 0.0
    %1286 = vmatprep.subr.mxu0 0.0
    %1287 = vmatpush1.msra.mxu0 0.0
    %1288 = vmatprep.subr.mxu0 0.0
    %1289 = vmatpush1.msra.mxu0 0.0
    %1290 = vmatprep.subr.mxu0 0.0
    %1291 = vmatpush1.msra.mxu0 0.0
    %1292 = vmatprep.subr.mxu0 0.0
    %1293 = vmatpush1.msra.mxu0 0.0
    %1294 = vmatprep.subr.mxu0 0.0
    %1295 = vmatpush1.msra.mxu0 0.0
    %1296 = vmatprep.subr.mxu0 0.0
    %v1297 = vand.u32 %v25, 4294901760
    %v1298 = vsub.f32 %v25, %v1297
    %v1299 = vand.u32 %v1298, 4294901760
    %1300 = vmatpush1.msra.mxu0 %v1299
    %1301 = vmatprep.subr.mxu0 0.0
    %v1302 = vand.u32 %v24, 4294901760
    %v1303 = vsub.f32 %v24, %v1302
    %v1304 = vand.u32 %v1303, 4294901760
    %1305 = vmatpush1.msra.mxu0 %v1304
    %1306 = vmatprep.subr.mxu0 0.0
    %1307 = vmatpush2.msra.mxu0 0.0
    %1308 = vmatprep.subr.mxu0 0.0
    %1309 = vmatpush2.msra.mxu0 0.0
    %1310 = vmatprep.subr.mxu0 0.0
    %1311 = vmatpush2.msra.mxu0 0.0
    %1312 = vmatprep.subr.mxu0 0.0
    %1313 = vmatpush2.msra.mxu0 0.0
    %1314 = vmatprep.subr.mxu0 0.0
    %1315 = vmatpush2.msra.mxu0 0.0
    %1316 = vmatprep.subr.mxu0 0.0
    %1317 = vmatpush2.msra.mxu0 0.0
    %1318 = vmatprep.subr.mxu0 0.0
    %1319 = vmatpush2.msra.mxu0 0.0
    %1320 = vmatprep.subr.mxu0 0.0
    %1321 = vmatpush2.msra.mxu0 0.0
    %1322 = vmatprep.subr.mxu0 0.0
    %1323 = vmatpush2.msra.mxu0 0.0
    %1324 = vmatprep.subr.mxu0 0.0
    %1325 = vmatpush2.msra.mxu0 0.0
    %1326 = vmatprep.subr.mxu0 0.0
    %1327 = vmatpush2.msra.mxu0 0.0
    %1328 = vmatprep.subr.mxu0 0.0
    %1329 = vmatpush2.msra.mxu0 0.0
    %1330 = vmatprep.subr.mxu0 0.0
    %1331 = vmatpush2.msra.mxu0 0.0
    %1332 = vmatprep.subr.mxu0 0.0
    %1333 = vmatpush2.msra.mxu0 0.0
    %1334 = vmatprep.subr.mxu0 0.0
    %1335 = vmatpush2.msra.mxu0 0.0
    %1336 = vmatprep.subr.mxu0 0.0
    %1337 = vmatpush2.msra.mxu0 0.0
    %1338 = vmatprep.mubr.f32.mxu0 0.0
    %v1339 = vand.u32 %v957, 4294901760
    %1340 = vmatmul.mubr.f32.gmra.mxu0 %v1339
    %v1341 = vpop.f32.mrf.mxu0
    %v1342 = vadd.f32 %v1265, %v1341
    %v1343 = vpop.f32.mrf.mxu0
    %1344 = vdwg.mxu0
    %1345 = vmatprep.subr.mxu0 0.0
    %1346 = vmatpush1.msra.mxu0 0.0
    %1347 = vmatprep.subr.mxu0 0.0
    %1348 = vmatpush1.msra.mxu0 0.0
    %1349 = vmatprep.subr.mxu0 0.0
    %1350 = vmatpush1.msra.mxu0 0.0
    %1351 = vmatprep.subr.mxu0 0.0
    %1352 = vmatpush1.msra.mxu0 0.0
    %1353 = vmatprep.subr.mxu0 0.0
    %1354 = vmatpush1.msra.mxu0 0.0
    %1355 = vmatprep.subr.mxu0 0.0
    %1356 = vmatpush1.msra.mxu0 0.0
    %1357 = vmatprep.subr.mxu0 0.0
    %1358 = vmatpush1.msra.mxu0 0.0
    %1359 = vmatprep.subr.mxu0 0.0
    %1360 = vmatpush1.msra.mxu0 0.0
    %1361 = vmatprep.subr.mxu0 0.0
    %1362 = vmatpush1.msra.mxu0 0.0
    %1363 = vmatprep.subr.mxu0 0.0
    %1364 = vmatpush1.msra.mxu0 0.0
    %1365 = vmatprep.subr.mxu0 0.0
    %1366 = vmatpush1.msra.mxu0 0.0
    %1367 = vmatprep.subr.mxu0 0.0
    %1368 = vmatpush1.msra.mxu0 0.0
    %1369 = vmatprep.subr.mxu0 0.0
    %1370 = vmatpush1.msra.mxu0 0.0
    %1371 = vmatprep.subr.mxu0 0.0
    %1372 = vmatpush1.msra.mxu0 0.0
    %1373 = vmatprep.subr.mxu0 0.0
    %v1374 = vand.u32 %v25, 4294901760
    %1375 = vmatpush1.msra.mxu0 %v1374
    %1376 = vmatprep.subr.mxu0 0.0
    %v1377 = vand.u32 %v24, 4294901760
    %1378 = vmatpush1.msra.mxu0 %v1377
    %1379 = vmatprep.subr.mxu0 0.0
    %1380 = vmatpush2.msra.mxu0 0.0
    %1381 = vmatprep.subr.mxu0 0.0
    %1382 = vmatpush2.msra.mxu0 0.0
    %1383 = vmatprep.subr.mxu0 0.0
    %1384 = vmatpush2.msra.mxu0 0.0
    %1385 = vmatprep.subr.mxu0 0.0
    %1386 = vmatpush2.msra.mxu0 0.0
    %1387 = vmatprep.subr.mxu0 0.0
    %1388 = vmatpush2.msra.mxu0 0.0
    %1389 = vmatprep.subr.mxu0 0.0
    %1390 = vmatpush2.msra.mxu0 0.0
    %1391 = vmatprep.subr.mxu0 0.0
    %1392 = vmatpush2.msra.mxu0 0.0
    %1393 = vmatprep.subr.mxu0 0.0
    %1394 = vmatpush2.msra.mxu0 0.0
    %1395 = vmatprep.subr.mxu0 0.0
    %1396 = vmatpush2.msra.mxu0 0.0
    %1397 = vmatprep.subr.mxu0 0.0
    %1398 = vmatpush2.msra.mxu0 0.0
    %1399 = vmatprep.subr.mxu0 0.0
    %1400 = vmatpush2.msra.mxu0 0.0
    %1401 = vmatprep.subr.mxu0 0.0
    %1402 = vmatpush2.msra.mxu0 0.0
    %1403 = vmatprep.subr.mxu0 0.0
    %1404 = vmatpush2.msra.mxu0 0.0
    %1405 = vmatprep.subr.mxu0 0.0
    %1406 = vmatpush2.msra.mxu0 0.0
    %1407 = vmatprep.subr.mxu0 0.0
    %1408 = vmatpush2.msra.mxu0 0.0
    %1409 = vmatprep.subr.mxu0 0.0
    %1410 = vmatpush2.msra.mxu0 0.0
    %1411 = vmatprep.mubr.f32.mxu0 0.0
    %v1412 = vand.u32 %v957, 4294901760
    %1413 = vmatmul.mubr.f32.gmra.mxu0 %v1412
    %v1414 = vpop.f32.mrf.mxu0
    %v1415 = vadd.f32 %v1342, %v1414
    %v1416 = vpop.f32.mrf.mxu0
    %1417 = vdwg.mxu0
    %v1418 = vld [vmem:[%s2] sm:$0xff]
    %v1419 = vld [vmem:[%s2 + $0x8] sm:$0xff]
    %v1420 = vld [vmem:[%s2 + $0x10] sm:$0xff]
    %v1421 = vld [vmem:[%s2 + $0x18] sm:$0xff]
    %v1422 = vld [vmem:[%s2 + $0x20] sm:$0xff]
    %v1423 = vld [vmem:[%s2 + $0x28] sm:$0xff]
    %v1424 = vld [vmem:[%s2 + $0x30] sm:$0xff]
    %v1425 = vld [vmem:[%s2 + $0x38] sm:$0xff]
    %v1426 = vld [vmem:[%s2 + $0x40] sm:$0xff]
    %v1427 = vld [vmem:[%s2 + $0x48] sm:$0xff]
    %v1428 = vld [vmem:[%s2 + $0x50] sm:$0xff]
    %v1429 = vld [vmem:[%s2 + $0x58] sm:$0xff]
    %v1430 = vld [vmem:[%s2 + $0x60] sm:$0xff]
    %v1431 = vld [vmem:[%s2 + $0x68] sm:$0xff]
    %v1432 = vld [vmem:[%s2 + $0x70] sm:$0xff]
    %v1433 = vld [vmem:[%s2 + $0x78] sm:$0xff]
    %v1434 = vld [vmem:[%s2 + $0x80] sm:$0xff]
    %v1435 = vld [vmem:[%s2 + $0x88] sm:$0xff]
    %v1436 = vld [vmem:[%s2 + $0x90] sm:$0xff]
    %v1437 = vld [vmem:[%s2 + $0x98] sm:$0xff]
    %v1438 = vld [vmem:[%s2 + $0xa0] sm:$0xff]
    %v1439 = vld [vmem:[%s2 + $0xa8] sm:$0xff]
    %v1440 = vld [vmem:[%s2 + $0xb0] sm:$0xff]
    %v1441 = vld [vmem:[%s2 + $0xb8] sm:$0xff]
    %v1442 = vld [vmem:[%s2 + $0xc0] sm:$0xff]
    %v1443 = vld [vmem:[%s2 + $0xc8] sm:$0xff]
    %v1444 = vld [vmem:[%s2 + $0xd0] sm:$0xff]
    %v1445 = vld [vmem:[%s2 + $0xd8] sm:$0xff]
    %v1446 = vld [vmem:[%s2 + $0xe0] sm:$0xff]
    %v1447 = vld [vmem:[%s2 + $0xe8] sm:$0xff]
    %v1448 = vld [vmem:[%s2 + $0xf0] sm:$0xff]
    %v1449 = vld [vmem:[%s2 + $0xf8] sm:$0xff]
    %v1450 = vld [vmem:[%s2 + $0x100] sm:$0xff]
    %v1451 = vld [vmem:[%s2 + $0x108] sm:$0xff]
    %v1452 = vld [vmem:[%s2 + $0x110] sm:$0xff]
    %v1453 = vld [vmem:[%s2 + $0x118] sm:$0xff]
    %v1454 = vld [vmem:[%s2 + $0x120] sm:$0xff]
    %v1455 = vld [vmem:[%s2 + $0x128] sm:$0xff]
    %v1456 = vld [vmem:[%s2 + $0x130] sm:$0xff]
    %v1457 = vld [vmem:[%s2 + $0x138] sm:$0xff]
    %v1458 = vld [vmem:[%s2 + $0x140] sm:$0xff]
    %v1459 = vld [vmem:[%s2 + $0x148] sm:$0xff]
    %v1460 = vld [vmem:[%s2 + $0x150] sm:$0xff]
    %v1461 = vld [vmem:[%s2 + $0x158] sm:$0xff]
    %v1462 = vld [vmem:[%s2 + $0x160] sm:$0xff]
    %v1463 = vld [vmem:[%s2 + $0x168] sm:$0xff]
    %v1464 = vld [vmem:[%s2 + $0x170] sm:$0xff]
    %v1465 = vld [vmem:[%s2 + $0x178] sm:$0xff]
    %1466 = vmatprep.subr.mxu0 0.0
    %v1467 = vand.u32 %v1433, 4294901760
    %1468 = vmatpush1.msra.mxu0 %v1467
    %1469 = vmatprep.subr.mxu0 0.0
    %v1470 = vand.u32 %v1432, 4294901760
    %1471 = vmatpush1.msra.mxu0 %v1470
    %1472 = vmatprep.subr.mxu0 0.0
    %v1473 = vand.u32 %v1431, 4294901760
    %1474 = vmatpush1.msra.mxu0 %v1473
    %1475 = vmatprep.subr.mxu0 0.0
    %v1476 = vand.u32 %v1430, 4294901760
    %1477 = vmatpush1.msra.mxu0 %v1476
    %1478 = vmatprep.subr.mxu0 0.0
    %v1479 = vand.u32 %v1429, 4294901760
    %1480 = vmatpush1.msra.mxu0 %v1479
    %1481 = vmatprep.subr.mxu0 0.0
    %v1482 = vand.u32 %v1428, 4294901760
    %1483 = vmatpush1.msra.mxu0 %v1482
    %1484 = vmatprep.subr.mxu0 0.0
    %v1485 = vand.u32 %v1427, 4294901760
    %1486 = vmatpush1.msra.mxu0 %v1485
    %1487 = vmatprep.subr.mxu0 0.0
    %v1488 = vand.u32 %v1426, 4294901760
    %1489 = vmatpush1.msra.mxu0 %v1488
    %1490 = vmatprep.subr.mxu0 0.0
    %v1491 = vand.u32 %v1425, 4294901760
    %1492 = vmatpush1.msra.mxu0 %v1491
    %1493 = vmatprep.subr.mxu0 0.0
    %v1494 = vand.u32 %v1424, 4294901760
    %1495 = vmatpush1.msra.mxu0 %v1494
    %1496 = vmatprep.subr.mxu0 0.0
    %v1497 = vand.u32 %v1423, 4294901760
    %1498 = vmatpush1.msra.mxu0 %v1497
    %1499 = vmatprep.subr.mxu0 0.0
    %v1500 = vand.u32 %v1422, 4294901760
    %1501 = vmatpush1.msra.mxu0 %v1500
    %1502 = vmatprep.subr.mxu0 0.0
    %v1503 = vand.u32 %v1421, 4294901760
    %1504 = vmatpush1.msra.mxu0 %v1503
    %1505 = vmatprep.subr.mxu0 0.0
    %v1506 = vand.u32 %v1420, 4294901760
    %1507 = vmatpush1.msra.mxu0 %v1506
    %1508 = vmatprep.subr.mxu0 0.0
    %v1509 = vand.u32 %v1419, 4294901760
    %1510 = vmatpush1.msra.mxu0 %v1509
    %1511 = vmatprep.subr.mxu0 0.0
    %v1512 = vand.u32 %v1418, 4294901760
    %1513 = vmatpush1.msra.mxu0 %v1512
    %1514 = vmatprep.subr.mxu0 0.0
    %v1515 = vand.u32 %v1449, 4294901760
    %1516 = vmatpush2.msra.mxu0 %v1515
    %1517 = vmatprep.subr.mxu0 0.0
    %v1518 = vand.u32 %v1448, 4294901760
    %1519 = vmatpush2.msra.mxu0 %v1518
    %1520 = vmatprep.subr.mxu0 0.0
    %v1521 = vand.u32 %v1447, 4294901760
    %1522 = vmatpush2.msra.mxu0 %v1521
    %1523 = vmatprep.subr.mxu0 0.0
    %v1524 = vand.u32 %v1446, 4294901760
    %1525 = vmatpush2.msra.mxu0 %v1524
    %1526 = vmatprep.subr.mxu0 0.0
    %v1527 = vand.u32 %v1445, 4294901760
    %1528 = vmatpush2.msra.mxu0 %v1527
    %1529 = vmatprep.subr.mxu0 0.0
    %v1530 = vand.u32 %v1444, 4294901760
    %1531 = vmatpush2.msra.mxu0 %v1530
    %1532 = vmatprep.subr.mxu0 0.0
    %v1533 = vand.u32 %v1443, 4294901760
    %1534 = vmatpush2.msra.mxu0 %v1533
    %1535 = vmatprep.subr.mxu0 0.0
    %v1536 = vand.u32 %v1442, 4294901760
    %1537 = vmatpush2.msra.mxu0 %v1536
    %1538 = vmatprep.subr.mxu0 0.0
    %v1539 = vand.u32 %v1441, 4294901760
    %1540 = vmatpush2.msra.mxu0 %v1539
    %1541 = vmatprep.subr.mxu0 0.0
    %v1542 = vand.u32 %v1440, 4294901760
    %1543 = vmatpush2.msra.mxu0 %v1542
    %1544 = vmatprep.subr.mxu0 0.0
    %v1545 = vand.u32 %v1439, 4294901760
    %1546 = vmatpush2.msra.mxu0 %v1545
    %1547 = vmatprep.subr.mxu0 0.0
    %v1548 = vand.u32 %v1438, 4294901760
    %1549 = vmatpush2.msra.mxu0 %v1548
    %1550 = vmatprep.subr.mxu0 0.0
    %v1551 = vand.u32 %v1437, 4294901760
    %1552 = vmatpush2.msra.mxu0 %v1551
    %1553 = vmatprep.subr.mxu0 0.0
    %v1554 = vand.u32 %v1436, 4294901760
    %1555 = vmatpush2.msra.mxu0 %v1554
    %1556 = vmatprep.subr.mxu0 0.0
    %v1557 = vand.u32 %v1435, 4294901760
    %1558 = vmatpush2.msra.mxu0 %v1557
    %1559 = vmatprep.subr.mxu0 0.0
    %v1560 = vand.u32 %v1434, 4294901760
    %1561 = vmatpush2.msra.mxu0 %v1560
    %v1562 = vand.u32 %v951, 4294901760
    %v1563 = vsub.f32 %v951, %v1562
    %v1564 = vand.u32 %v1563, 4294901760
    %v1565 = vsub.f32 %v1563, %v1564
    %v1566 = vand.u32 %v1565, 4294901760
    %1567 = vmatprep.mubr.f32.mxu0 %v1566
    %v1568 = vand.u32 %v487, 4294901760
    %v1569 = vsub.f32 %v487, %v1568
    %v1570 = vand.u32 %v1569, 4294901760
    %v1571 = vsub.f32 %v1569, %v1570
    %v1572 = vand.u32 %v1571, 4294901760
    %1573 = vmatmul.mubr.f32.gmra.mxu0 %v1572
    %v1574 = vpop.f32.mrf.mxu0
    %v1575 = vadd.f32 0.0, %v1574
    %v1576 = vpop.f32.mrf.mxu0
    %1577 = vdwg.mxu0
    %1578 = vmatprep.subr.mxu0 0.0
    %v1579 = vand.u32 %v1433, 4294901760
    %v1580 = vsub.f32 %v1433, %v1579
    %v1581 = vand.u32 %v1580, 4294901760
    %v1582 = vsub.f32 %v1580, %v1581
    %v1583 = vand.u32 %v1582, 4294901760
    %1584 = vmatpush1.msra.mxu0 %v1583
    %1585 = vmatprep.subr.mxu0 0.0
    %v1586 = vand.u32 %v1432, 4294901760
    %v1587 = vsub.f32 %v1432, %v1586
    %v1588 = vand.u32 %v1587, 4294901760
    %v1589 = vsub.f32 %v1587, %v1588
    %v1590 = vand.u32 %v1589, 4294901760
    %1591 = vmatpush1.msra.mxu0 %v1590
    %1592 = vmatprep.subr.mxu0 0.0
    %v1593 = vand.u32 %v1431, 4294901760
    %v1594 = vsub.f32 %v1431, %v1593
    %v1595 = vand.u32 %v1594, 4294901760
    %v1596 = vsub.f32 %v1594, %v1595
    %v1597 = vand.u32 %v1596, 4294901760
    %1598 = vmatpush1.msra.mxu0 %v1597
    %1599 = vmatprep.subr.mxu0 0.0
    %v1600 = vand.u32 %v1430, 4294901760
    %v1601 = vsub.f32 %v1430, %v1600
    %v1602 = vand.u32 %v1601, 4294901760
    %v1603 = vsub.f32 %v1601, %v1602
    %v1604 = vand.u32 %v1603, 4294901760
    %1605 = vmatpush1.msra.mxu0 %v1604
    %1606 = vmatprep.subr.mxu0 0.0
    %v1607 = vand.u32 %v1429, 4294901760
    %v1608 = vsub.f32 %v1429, %v1607
    %v1609 = vand.u32 %v1608, 4294901760
    %v1610 = vsub.f32 %v1608, %v1609
    %v1611 = vand.u32 %v1610, 4294901760
    %1612 = vmatpush1.msra.mxu0 %v1611
    %1613 = vmatprep.subr.mxu0 0.0
    %v1614 = vand.u32 %v1428, 4294901760
    %v1615 = vsub.f32 %v1428, %v1614
    %v1616 = vand.u32 %v1615, 4294901760
    %v1617 = vsub.f32 %v1615, %v1616
    %v1618 = vand.u32 %v1617, 4294901760
    %1619 = vmatpush1.msra.mxu0 %v1618
    %1620 = vmatprep.subr.mxu0 0.0
    %v1621 = vand.u32 %v1427, 4294901760
    %v1622 = vsub.f32 %v1427, %v1621
    %v1623 = vand.u32 %v1622, 4294901760
    %v1624 = vsub.f32 %v1622, %v1623
    %v1625 = vand.u32 %v1624, 4294901760
    %1626 = vmatpush1.msra.mxu0 %v1625
    %1627 = vmatprep.subr.mxu0 0.0
    %v1628 = vand.u32 %v1426, 4294901760
    %v1629 = vsub.f32 %v1426, %v1628
    %v1630 = vand.u32 %v1629, 4294901760
    %v1631 = vsub.f32 %v1629, %v1630
    %v1632 = vand.u32 %v1631, 4294901760
    %1633 = vmatpush1.msra.mxu0 %v1632
    %1634 = vmatprep.subr.mxu0 0.0
    %v1635 = vand.u32 %v1425, 4294901760
    %v1636 = vsub.f32 %v1425, %v1635
    %v1637 = vand.u32 %v1636, 4294901760
    %v1638 = vsub.f32 %v1636, %v1637
    %v1639 = vand.u32 %v1638, 4294901760
    %1640 = vmatpush1.msra.mxu0 %v1639
    %1641 = vmatprep.subr.mxu0 0.0
    %v1642 = vand.u32 %v1424, 4294901760
    %v1643 = vsub.f32 %v1424, %v1642
    %v1644 = vand.u32 %v1643, 4294901760
    %v1645 = vsub.f32 %v1643, %v1644
    %v1646 = vand.u32 %v1645, 4294901760
    %1647 = vmatpush1.msra.mxu0 %v1646
    %1648 = vmatprep.subr.mxu0 0.0
    %v1649 = vand.u32 %v1423, 4294901760
    %v1650 = vsub.f32 %v1423, %v1649
    %v1651 = vand.u32 %v1650, 4294901760
    %v1652 = vsub.f32 %v1650, %v1651
    %v1653 = vand.u32 %v1652, 4294901760
    %1654 = vmatpush1.msra.mxu0 %v1653
    %1655 = vmatprep.subr.mxu0 0.0
    %v1656 = vand.u32 %v1422, 4294901760
    %v1657 = vsub.f32 %v1422, %v1656
    %v1658 = vand.u32 %v1657, 4294901760
    %v1659 = vsub.f32 %v1657, %v1658
    %v1660 = vand.u32 %v1659, 4294901760
    %1661 = vmatpush1.msra.mxu0 %v1660
    %1662 = vmatprep.subr.mxu0 0.0
    %v1663 = vand.u32 %v1421, 4294901760
    %v1664 = vsub.f32 %v1421, %v1663
    %v1665 = vand.u32 %v1664, 4294901760
    %v1666 = vsub.f32 %v1664, %v1665
    %v1667 = vand.u32 %v1666, 4294901760
    %1668 = vmatpush1.msra.mxu0 %v1667
    %1669 = vmatprep.subr.mxu0 0.0
    %v1670 = vand.u32 %v1420, 4294901760
    %v1671 = vsub.f32 %v1420, %v1670
    %v1672 = vand.u32 %v1671, 4294901760
    %v1673 = vsub.f32 %v1671, %v1672
    %v1674 = vand.u32 %v1673, 4294901760
    %1675 = vmatpush1.msra.mxu0 %v1674
    %1676 = vmatprep.subr.mxu0 0.0
    %v1677 = vand.u32 %v1419, 4294901760
    %v1678 = vsub.f32 %v1419, %v1677
    %v1679 = vand.u32 %v1678, 4294901760
    %v1680 = vsub.f32 %v1678, %v1679
    %v1681 = vand.u32 %v1680, 4294901760
    %1682 = vmatpush1.msra.mxu0 %v1681
    %1683 = vmatprep.subr.mxu0 0.0
    %v1684 = vand.u32 %v1418, 4294901760
    %v1685 = vsub.f32 %v1418, %v1684
    %v1686 = vand.u32 %v1685, 4294901760
    %v1687 = vsub.f32 %v1685, %v1686
    %v1688 = vand.u32 %v1687, 4294901760
    %1689 = vmatpush1.msra.mxu0 %v1688
    %1690 = vmatprep.subr.mxu0 0.0
    %v1691 = vand.u32 %v1449, 4294901760
    %v1692 = vsub.f32 %v1449, %v1691
    %v1693 = vand.u32 %v1692, 4294901760
    %v1694 = vsub.f32 %v1692, %v1693
    %v1695 = vand.u32 %v1694, 4294901760
    %1696 = vmatpush2.msra.mxu0 %v1695
    %1697 = vmatprep.subr.mxu0 0.0
    %v1698 = vand.u32 %v1448, 4294901760
    %v1699 = vsub.f32 %v1448, %v1698
    %v1700 = vand.u32 %v1699, 4294901760
    %v1701 = vsub.f32 %v1699, %v1700
    %v1702 = vand.u32 %v1701, 4294901760
    %1703 = vmatpush2.msra.mxu0 %v1702
    %1704 = vmatprep.subr.mxu0 0.0
    %v1705 = vand.u32 %v1447, 4294901760
    %v1706 = vsub.f32 %v1447, %v1705
    %v1707 = vand.u32 %v1706, 4294901760
    %v1708 = vsub.f32 %v1706, %v1707
    %v1709 = vand.u32 %v1708, 4294901760
    %1710 = vmatpush2.msra.mxu0 %v1709
    %1711 = vmatprep.subr.mxu0 0.0
    %v1712 = vand.u32 %v1446, 4294901760
    %v1713 = vsub.f32 %v1446, %v1712
    %v1714 = vand.u32 %v1713, 4294901760
    %v1715 = vsub.f32 %v1713, %v1714
    %v1716 = vand.u32 %v1715, 4294901760
    %1717 = vmatpush2.msra.mxu0 %v1716
    %1718 = vmatprep.subr.mxu0 0.0
    %v1719 = vand.u32 %v1445, 4294901760
    %v1720 = vsub.f32 %v1445, %v1719
    %v1721 = vand.u32 %v1720, 4294901760
    %v1722 = vsub.f32 %v1720, %v1721
    %v1723 = vand.u32 %v1722, 4294901760
    %1724 = vmatpush2.msra.mxu0 %v1723
    %1725 = vmatprep.subr.mxu0 0.0
    %v1726 = vand.u32 %v1444, 4294901760
    %v1727 = vsub.f32 %v1444, %v1726
    %v1728 = vand.u32 %v1727, 4294901760
    %v1729 = vsub.f32 %v1727, %v1728
    %v1730 = vand.u32 %v1729, 4294901760
    %1731 = vmatpush2.msra.mxu0 %v1730
    %1732 = vmatprep.subr.mxu0 0.0
    %v1733 = vand.u32 %v1443, 4294901760
    %v1734 = vsub.f32 %v1443, %v1733
    %v1735 = vand.u32 %v1734, 4294901760
    %v1736 = vsub.f32 %v1734, %v1735
    %v1737 = vand.u32 %v1736, 4294901760
    %1738 = vmatpush2.msra.mxu0 %v1737
    %1739 = vmatprep.subr.mxu0 0.0
    %v1740 = vand.u32 %v1442, 4294901760
    %v1741 = vsub.f32 %v1442, %v1740
    %v1742 = vand.u32 %v1741, 4294901760
    %v1743 = vsub.f32 %v1741, %v1742
    %v1744 = vand.u32 %v1743, 4294901760
    %1745 = vmatpush2.msra.mxu0 %v1744
    %1746 = vmatprep.subr.mxu0 0.0
    %v1747 = vand.u32 %v1441, 4294901760
    %v1748 = vsub.f32 %v1441, %v1747
    %v1749 = vand.u32 %v1748, 4294901760
    %v1750 = vsub.f32 %v1748, %v1749
    %v1751 = vand.u32 %v1750, 4294901760
    %1752 = vmatpush2.msra.mxu0 %v1751
    %1753 = vmatprep.subr.mxu0 0.0
    %v1754 = vand.u32 %v1440, 4294901760
    %v1755 = vsub.f32 %v1440, %v1754
    %v1756 = vand.u32 %v1755, 4294901760
    %v1757 = vsub.f32 %v1755, %v1756
    %v1758 = vand.u32 %v1757, 4294901760
    %1759 = vmatpush2.msra.mxu0 %v1758
    %1760 = vmatprep.subr.mxu0 0.0
    %v1761 = vand.u32 %v1439, 4294901760
    %v1762 = vsub.f32 %v1439, %v1761
    %v1763 = vand.u32 %v1762, 4294901760
    %v1764 = vsub.f32 %v1762, %v1763
    %v1765 = vand.u32 %v1764, 4294901760
    %1766 = vmatpush2.msra.mxu0 %v1765
    %1767 = vmatprep.subr.mxu0 0.0
    %v1768 = vand.u32 %v1438, 4294901760
    %v1769 = vsub.f32 %v1438, %v1768
    %v1770 = vand.u32 %v1769, 4294901760
    %v1771 = vsub.f32 %v1769, %v1770
    %v1772 = vand.u32 %v1771, 4294901760
    %1773 = vmatpush2.msra.mxu0 %v1772
    %1774 = vmatprep.subr.mxu0 0.0
    %v1775 = vand.u32 %v1437, 4294901760
    %v1776 = vsub.f32 %v1437, %v1775
    %v1777 = vand.u32 %v1776, 4294901760
    %v1778 = vsub.f32 %v1776, %v1777
    %v1779 = vand.u32 %v1778, 4294901760
    %1780 = vmatpush2.msra.mxu0 %v1779
    %1781 = vmatprep.subr.mxu0 0.0
    %v1782 = vand.u32 %v1436, 4294901760
    %v1783 = vsub.f32 %v1436, %v1782
    %v1784 = vand.u32 %v1783, 4294901760
    %v1785 = vsub.f32 %v1783, %v1784
    %v1786 = vand.u32 %v1785, 4294901760
    %1787 = vmatpush2.msra.mxu0 %v1786
    %1788 = vmatprep.subr.mxu0 0.0
    %v1789 = vand.u32 %v1435, 4294901760
    %v1790 = vsub.f32 %v1435, %v1789
    %v1791 = vand.u32 %v1790, 4294901760
    %v1792 = vsub.f32 %v1790, %v1791
    %v1793 = vand.u32 %v1792, 4294901760
    %1794 = vmatpush2.msra.mxu0 %v1793
    %1795 = vmatprep.subr.mxu0 0.0
    %v1796 = vand.u32 %v1434, 4294901760
    %v1797 = vsub.f32 %v1434, %v1796
    %v1798 = vand.u32 %v1797, 4294901760
    %v1799 = vsub.f32 %v1797, %v1798
    %v1800 = vand.u32 %v1799, 4294901760
    %1801 = vmatpush2.msra.mxu0 %v1800
    %v1802 = vand.u32 %v951, 4294901760
    %1803 = vmatprep.mubr.f32.mxu0 %v1802
    %v1804 = vand.u32 %v487, 4294901760
    %1805 = vmatmul.mubr.f32.gmra.mxu0 %v1804
    %v1806 = vpop.f32.mrf.mxu0
    %v1807 = vadd.f32 %v1575, %v1806
    %v1808 = vpop.f32.mrf.mxu0
    %1809 = vdwg.mxu0
    %1810 = vmatprep.subr.mxu0 0.0
    %v1811 = vand.u32 %v1433, 4294901760
    %v1812 = vsub.f32 %v1433, %v1811
    %1813 = vmatpush1.msra.mxu0 %v1812
    %1814 = vmatprep.subr.mxu0 0.0
    %v1815 = vand.u32 %v1432, 4294901760
    %v1816 = vsub.f32 %v1432, %v1815
    %1817 = vmatpush1.msra.mxu0 %v1816
    %1818 = vmatprep.subr.mxu0 0.0
    %v1819 = vand.u32 %v1431, 4294901760
    %v1820 = vsub.f32 %v1431, %v1819
    %1821 = vmatpush1.msra.mxu0 %v1820
    %1822 = vmatprep.subr.mxu0 0.0
    %v1823 = vand.u32 %v1430, 4294901760
    %v1824 = vsub.f32 %v1430, %v1823
    %1825 = vmatpush1.msra.mxu0 %v1824
    %1826 = vmatprep.subr.mxu0 0.0
    %v1827 = vand.u32 %v1429, 4294901760
    %v1828 = vsub.f32 %v1429, %v1827
    %1829 = vmatpush1.msra.mxu0 %v1828
    %1830 = vmatprep.subr.mxu0 0.0
    %v1831 = vand.u32 %v1428, 4294901760
    %v1832 = vsub.f32 %v1428, %v1831
    %1833 = vmatpush1.msra.mxu0 %v1832
    %1834 = vmatprep.subr.mxu0 0.0
    %v1835 = vand.u32 %v1427, 4294901760
    %v1836 = vsub.f32 %v1427, %v1835
    %1837 = vmatpush1.msra.mxu0 %v1836
    %1838 = vmatprep.subr.mxu0 0.0
    %v1839 = vand.u32 %v1426, 4294901760
    %v1840 = vsub.f32 %v1426, %v1839
    %1841 = vmatpush1.msra.mxu0 %v1840
    %1842 = vmatprep.subr.mxu0 0.0
    %v1843 = vand.u32 %v1425, 4294901760
    %v1844 = vsub.f32 %v1425, %v1843
    %1845 = vmatpush1.msra.mxu0 %v1844
    %1846 = vmatprep.subr.mxu0 0.0
    %v1847 = vand.u32 %v1424, 4294901760
    %v1848 = vsub.f32 %v1424, %v1847
    %1849 = vmatpush1.msra.mxu0 %v1848
    %1850 = vmatprep.subr.mxu0 0.0
    %v1851 = vand.u32 %v1423, 4294901760
    %v1852 = vsub.f32 %v1423, %v1851
    %1853 = vmatpush1.msra.mxu0 %v1852
    %1854 = vmatprep.subr.mxu0 0.0
    %v1855 = vand.u32 %v1422, 4294901760
    %v1856 = vsub.f32 %v1422, %v1855
    %1857 = vmatpush1.msra.mxu0 %v1856
    %1858 = vmatprep.subr.mxu0 0.0
    %v1859 = vand.u32 %v1421, 4294901760
    %v1860 = vsub.f32 %v1421, %v1859
    %1861 = vmatpush1.msra.mxu0 %v1860
    %1862 = vmatprep.subr.mxu0 0.0
    %v1863 = vand.u32 %v1420, 4294901760
    %v1864 = vsub.f32 %v1420, %v1863
    %1865 = vmatpush1.msra.mxu0 %v1864
    %1866 = vmatprep.subr.mxu0 0.0
    %v1867 = vand.u32 %v1419, 4294901760
    %v1868 = vsub.f32 %v1419, %v1867
    %1869 = vmatpush1.msra.mxu0 %v1868
    %1870 = vmatprep.subr.mxu0 0.0
    %v1871 = vand.u32 %v1418, 4294901760
    %v1872 = vsub.f32 %v1418, %v1871
    %1873 = vmatpush1.msra.mxu0 %v1872
    %1874 = vmatprep.subr.mxu0 0.0
    %v1875 = vand.u32 %v1449, 4294901760
    %v1876 = vsub.f32 %v1449, %v1875
    %1877 = vmatpush2.msra.mxu0 %v1876
    %1878 = vmatprep.subr.mxu0 0.0
    %v1879 = vand.u32 %v1448, 4294901760
    %v1880 = vsub.f32 %v1448, %v1879
    %1881 = vmatpush2.msra.mxu0 %v1880
    %1882 = vmatprep.subr.mxu0 0.0
    %v1883 = vand.u32 %v1447, 4294901760
    %v1884 = vsub.f32 %v1447, %v1883
    %1885 = vmatpush2.msra.mxu0 %v1884
    %1886 = vmatprep.subr.mxu0 0.0
    %v1887 = vand.u32 %v1446, 4294901760
    %v1888 = vsub.f32 %v1446, %v1887
    %1889 = vmatpush2.msra.mxu0 %v1888
    %1890 = vmatprep.subr.mxu0 0.0
    %v1891 = vand.u32 %v1445, 4294901760
    %v1892 = vsub.f32 %v1445, %v1891
    %1893 = vmatpush2.msra.mxu0 %v1892
    %1894 = vmatprep.subr.mxu0 0.0
    %v1895 = vand.u32 %v1444, 4294901760
    %v1896 = vsub.f32 %v1444, %v1895
    %1897 = vmatpush2.msra.mxu0 %v1896
    %1898 = vmatprep.subr.mxu0 0.0
    %v1899 = vand.u32 %v1443, 4294901760
    %v1900 = vsub.f32 %v1443, %v1899
    %1901 = vmatpush2.msra.mxu0 %v1900
    %1902 = vmatprep.subr.mxu0 0.0
    %v1903 = vand.u32 %v1442, 4294901760
    %v1904 = vsub.f32 %v1442, %v1903
    %1905 = vmatpush2.msra.mxu0 %v1904
    %1906 = vmatprep.subr.mxu0 0.0
    %v1907 = vand.u32 %v1441, 4294901760
    %v1908 = vsub.f32 %v1441, %v1907
    %1909 = vmatpush2.msra.mxu0 %v1908
    %1910 = vmatprep.subr.mxu0 0.0
    %v1911 = vand.u32 %v1440, 4294901760
    %v1912 = vsub.f32 %v1440, %v1911
    %1913 = vmatpush2.msra.mxu0 %v1912
    %1914 = vmatprep.subr.mxu0 0.0
    %v1915 = vand.u32 %v1439, 4294901760
    %v1916 = vsub.f32 %v1439, %v1915
    %1917 = vmatpush2.msra.mxu0 %v1916
    %1918 = vmatprep.subr.mxu0 0.0
    %v1919 = vand.u32 %v1438, 4294901760
    %v1920 = vsub.f32 %v1438, %v1919
    %1921 = vmatpush2.msra.mxu0 %v1920
    %1922 = vmatprep.subr.mxu0 0.0
    %v1923 = vand.u32 %v1437, 4294901760
    %v1924 = vsub.f32 %v1437, %v1923
    %1925 = vmatpush2.msra.mxu0 %v1924
    %1926 = vmatprep.subr.mxu0 0.0
    %v1927 = vand.u32 %v1436, 4294901760
    %v1928 = vsub.f32 %v1436, %v1927
    %1929 = vmatpush2.msra.mxu0 %v1928
    %1930 = vmatprep.subr.mxu0 0.0
    %v1931 = vand.u32 %v1435, 4294901760
    %v1932 = vsub.f32 %v1435, %v1931
    %1933 = vmatpush2.msra.mxu0 %v1932
    %1934 = vmatprep.subr.mxu0 0.0
    %v1935 = vand.u32 %v1434, 4294901760
    %v1936 = vsub.f32 %v1434, %v1935
    %1937 = vmatpush2.msra.mxu0 %v1936
    %v1938 = vand.u32 %v951, 4294901760
    %v1939 = vsub.f32 %v951, %v1938
    %1940 = vmatprep.mubr.f32.mxu0 %v1939
    %v1941 = vand.u32 %v487, 4294901760
    %v1942 = vsub.f32 %v487, %v1941
    %1943 = vmatmul.mubr.f32.gmra.mxu0 %v1942
    %v1944 = vpop.f32.mrf.mxu0
    %v1945 = vadd.f32 %v1807, %v1944
    %v1946 = vpop.f32.mrf.mxu0
    %1947 = vdwg.mxu0
    %1948 = vmatprep.subr.mxu0 0.0
    %v1949 = vand.u32 %v1433, 4294901760
    %1950 = vmatpush1.msra.mxu0 %v1949
    %1951 = vmatprep.subr.mxu0 0.0
    %v1952 = vand.u32 %v1432, 4294901760
    %1953 = vmatpush1.msra.mxu0 %v1952
    %1954 = vmatprep.subr.mxu0 0.0
    %v1955 = vand.u32 %v1431, 4294901760
    %1956 = vmatpush1.msra.mxu0 %v1955
    %1957 = vmatprep.subr.mxu0 0.0
    %v1958 = vand.u32 %v1430, 4294901760
    %1959 = vmatpush1.msra.mxu0 %v1958
    %1960 = vmatprep.subr.mxu0 0.0
    %v1961 = vand.u32 %v1429, 4294901760
    %1962 = vmatpush1.msra.mxu0 %v1961
    %1963 = vmatprep.subr.mxu0 0.0
    %v1964 = vand.u32 %v1428, 4294901760
    %1965 = vmatpush1.msra.mxu0 %v1964
    %1966 = vmatprep.subr.mxu0 0.0
    %v1967 = vand.u32 %v1427, 4294901760
    %1968 = vmatpush1.msra.mxu0 %v1967
    %1969 = vmatprep.subr.mxu0 0.0
    %v1970 = vand.u32 %v1426, 4294901760
    %1971 = vmatpush1.msra.mxu0 %v1970
    %1972 = vmatprep.subr.mxu0 0.0
    %v1973 = vand.u32 %v1425, 4294901760
    %1974 = vmatpush1.msra.mxu0 %v1973
    %1975 = vmatprep.subr.mxu0 0.0
    %v1976 = vand.u32 %v1424, 4294901760
    %1977 = vmatpush1.msra.mxu0 %v1976
    %1978 = vmatprep.subr.mxu0 0.0
    %v1979 = vand.u32 %v1423, 4294901760
    %1980 = vmatpush1.msra.mxu0 %v1979
    %1981 = vmatprep.subr.mxu0 0.0
    %v1982 = vand.u32 %v1422, 4294901760
    %1983 = vmatpush1.msra.mxu0 %v1982
    %1984 = vmatprep.subr.mxu0 0.0
    %v1985 = vand.u32 %v1421, 4294901760
    %1986 = vmatpush1.msra.mxu0 %v1985
    %1987 = vmatprep.subr.mxu0 0.0
    %v1988 = vand.u32 %v1420, 4294901760
    %1989 = vmatpush1.msra.mxu0 %v1988
    %1990 = vmatprep.subr.mxu0 0.0
    %v1991 = vand.u32 %v1419, 4294901760
    %1992 = vmatpush1.msra.mxu0 %v1991
    %1993 = vmatprep.subr.mxu0 0.0
    %v1994 = vand.u32 %v1418, 4294901760
    %1995 = vmatpush1.msra.mxu0 %v1994
    %1996 = vmatprep.subr.mxu0 0.0
    %v1997 = vand.u32 %v1449, 4294901760
    %1998 = vmatpush2.msra.mxu0 %v1997
    %1999 = vmatprep.subr.mxu0 0.0
    %v2000 = vand.u32 %v1448, 4294901760
    %2001 = vmatpush2.msra.mxu0 %v2000
    %2002 = vmatprep.subr.mxu0 0.0
    %v2003 = vand.u32 %v1447, 4294901760
    %2004 = vmatpush2.msra.mxu0 %v2003
    %2005 = vmatprep.subr.mxu0 0.0
    %v2006 = vand.u32 %v1446, 4294901760
    %2007 = vmatpush2.msra.mxu0 %v2006
    %2008 = vmatprep.subr.mxu0 0.0
    %v2009 = vand.u32 %v1445, 4294901760
    %2010 = vmatpush2.msra.mxu0 %v2009
    %2011 = vmatprep.subr.mxu0 0.0
    %v2012 = vand.u32 %v1444, 4294901760
    %2013 = vmatpush2.msra.mxu0 %v2012
    %2014 = vmatprep.subr.mxu0 0.0
    %v2015 = vand.u32 %v1443, 4294901760
    %2016 = vmatpush2.msra.mxu0 %v2015
    %2017 = vmatprep.subr.mxu0 0.0
    %v2018 = vand.u32 %v1442, 4294901760
    %2019 = vmatpush2.msra.mxu0 %v2018
    %2020 = vmatprep.subr.mxu0 0.0
    %v2021 = vand.u32 %v1441, 4294901760
    %2022 = vmatpush2.msra.mxu0 %v2021
    %2023 = vmatprep.subr.mxu0 0.0
    %v2024 = vand.u32 %v1440, 4294901760
    %2025 = vmatpush2.msra.mxu0 %v2024
    %2026 = vmatprep.subr.mxu0 0.0
    %v2027 = vand.u32 %v1439, 4294901760
    %2028 = vmatpush2.msra.mxu0 %v2027
    %2029 = vmatprep.subr.mxu0 0.0
    %v2030 = vand.u32 %v1438, 4294901760
    %2031 = vmatpush2.msra.mxu0 %v2030
    %2032 = vmatprep.subr.mxu0 0.0
    %v2033 = vand.u32 %v1437, 4294901760
    %2034 = vmatpush2.msra.mxu0 %v2033
    %2035 = vmatprep.subr.mxu0 0.0
    %v2036 = vand.u32 %v1436, 4294901760
    %2037 = vmatpush2.msra.mxu0 %v2036
    %2038 = vmatprep.subr.mxu0 0.0
    %v2039 = vand.u32 %v1435, 4294901760
    %2040 = vmatpush2.msra.mxu0 %v2039
    %2041 = vmatprep.subr.mxu0 0.0
    %v2042 = vand.u32 %v1434, 4294901760
    %2043 = vmatpush2.msra.mxu0 %v2042
    %v2044 = vand.u32 %v951, 4294901760
    %v2045 = vsub.f32 %v951, %v2044
    %v2046 = vand.u32 %v2045, 4294901760
    %2047 = vmatprep.mubr.f32.mxu0 %v2046
    %v2048 = vand.u32 %v487, 4294901760
    %v2049 = vsub.f32 %v487, %v2048
    %v2050 = vand.u32 %v2049, 4294901760
    %2051 = vmatmul.mubr.f32.gmra.mxu0 %v2050
    %v2052 = vpop.f32.mrf.mxu0
    %v2053 = vadd.f32 %v1945, %v2052
    %v2054 = vpop.f32.mrf.mxu0
    %2055 = vdwg.mxu0
    %2056 = vmatprep.subr.mxu0 0.0
    %v2057 = vand.u32 %v1433, 4294901760
    %v2058 = vsub.f32 %v1433, %v2057
    %v2059 = vand.u32 %v2058, 4294901760
    %2060 = vmatpush1.msra.mxu0 %v2059
    %2061 = vmatprep.subr.mxu0 0.0
    %v2062 = vand.u32 %v1432, 4294901760
    %v2063 = vsub.f32 %v1432, %v2062
    %v2064 = vand.u32 %v2063, 4294901760
    %2065 = vmatpush1.msra.mxu0 %v2064
    %2066 = vmatprep.subr.mxu0 0.0
    %v2067 = vand.u32 %v1431, 4294901760
    %v2068 = vsub.f32 %v1431, %v2067
    %v2069 = vand.u32 %v2068, 4294901760
    %2070 = vmatpush1.msra.mxu0 %v2069
    %2071 = vmatprep.subr.mxu0 0.0
    %v2072 = vand.u32 %v1430, 4294901760
    %v2073 = vsub.f32 %v1430, %v2072
    %v2074 = vand.u32 %v2073, 4294901760
    %2075 = vmatpush1.msra.mxu0 %v2074
    %2076 = vmatprep.subr.mxu0 0.0
    %v2077 = vand.u32 %v1429, 4294901760
    %v2078 = vsub.f32 %v1429, %v2077
    %v2079 = vand.u32 %v2078, 4294901760
    %2080 = vmatpush1.msra.mxu0 %v2079
    %2081 = vmatprep.subr.mxu0 0.0
    %v2082 = vand.u32 %v1428, 4294901760
    %v2083 = vsub.f32 %v1428, %v2082
    %v2084 = vand.u32 %v2083, 4294901760
    %2085 = vmatpush1.msra.mxu0 %v2084
    %2086 = vmatprep.subr.mxu0 0.0
    %v2087 = vand.u32 %v1427, 4294901760
    %v2088 = vsub.f32 %v1427, %v2087
    %v2089 = vand.u32 %v2088, 4294901760
    %2090 = vmatpush1.msra.mxu0 %v2089
    %2091 = vmatprep.subr.mxu0 0.0
    %v2092 = vand.u32 %v1426, 4294901760
    %v2093 = vsub.f32 %v1426, %v2092
    %v2094 = vand.u32 %v2093, 4294901760
    %2095 = vmatpush1.msra.mxu0 %v2094
    %2096 = vmatprep.subr.mxu0 0.0
    %v2097 = vand.u32 %v1425, 4294901760
    %v2098 = vsub.f32 %v1425, %v2097
    %v2099 = vand.u32 %v2098, 4294901760
    %2100 = vmatpush1.msra.mxu0 %v2099
    %2101 = vmatprep.subr.mxu0 0.0
    %v2102 = vand.u32 %v1424, 4294901760
    %v2103 = vsub.f32 %v1424, %v2102
    %v2104 = vand.u32 %v2103, 4294901760
    %2105 = vmatpush1.msra.mxu0 %v2104
    %2106 = vmatprep.subr.mxu0 0.0
    %v2107 = vand.u32 %v1423, 4294901760
    %v2108 = vsub.f32 %v1423, %v2107
    %v2109 = vand.u32 %v2108, 4294901760
    %2110 = vmatpush1.msra.mxu0 %v2109
    %2111 = vmatprep.subr.mxu0 0.0
    %v2112 = vand.u32 %v1422, 4294901760
    %v2113 = vsub.f32 %v1422, %v2112
    %v2114 = vand.u32 %v2113, 4294901760
    %2115 = vmatpush1.msra.mxu0 %v2114
    %2116 = vmatprep.subr.mxu0 0.0
    %v2117 = vand.u32 %v1421, 4294901760
    %v2118 = vsub.f32 %v1421, %v2117
    %v2119 = vand.u32 %v2118, 4294901760
    %2120 = vmatpush1.msra.mxu0 %v2119
    %2121 = vmatprep.subr.mxu0 0.0
    %v2122 = vand.u32 %v1420, 4294901760
    %v2123 = vsub.f32 %v1420, %v2122
    %v2124 = vand.u32 %v2123, 4294901760
    %2125 = vmatpush1.msra.mxu0 %v2124
    %2126 = vmatprep.subr.mxu0 0.0
    %v2127 = vand.u32 %v1419, 4294901760
    %v2128 = vsub.f32 %v1419, %v2127
    %v2129 = vand.u32 %v2128, 4294901760
    %2130 = vmatpush1.msra.mxu0 %v2129
    %2131 = vmatprep.subr.mxu0 0.0
    %v2132 = vand.u32 %v1418, 4294901760
    %v2133 = vsub.f32 %v1418, %v2132
    %v2134 = vand.u32 %v2133, 4294901760
    %2135 = vmatpush1.msra.mxu0 %v2134
    %2136 = vmatprep.subr.mxu0 0.0
    %v2137 = vand.u32 %v1449, 4294901760
    %v2138 = vsub.f32 %v1449, %v2137
    %v2139 = vand.u32 %v2138, 4294901760
    %2140 = vmatpush2.msra.mxu0 %v2139
    %2141 = vmatprep.subr.mxu0 0.0
    %v2142 = vand.u32 %v1448, 4294901760
    %v2143 = vsub.f32 %v1448, %v2142
    %v2144 = vand.u32 %v2143, 4294901760
    %2145 = vmatpush2.msra.mxu0 %v2144
    %2146 = vmatprep.subr.mxu0 0.0
    %v2147 = vand.u32 %v1447, 4294901760
    %v2148 = vsub.f32 %v1447, %v2147
    %v2149 = vand.u32 %v2148, 4294901760
    %2150 = vmatpush2.msra.mxu0 %v2149
    %2151 = vmatprep.subr.mxu0 0.0
    %v2152 = vand.u32 %v1446, 4294901760
    %v2153 = vsub.f32 %v1446, %v2152
    %v2154 = vand.u32 %v2153, 4294901760
    %2155 = vmatpush2.msra.mxu0 %v2154
    %2156 = vmatprep.subr.mxu0 0.0
    %v2157 = vand.u32 %v1445, 4294901760
    %v2158 = vsub.f32 %v1445, %v2157
    %v2159 = vand.u32 %v2158, 4294901760
    %2160 = vmatpush2.msra.mxu0 %v2159
    %2161 = vmatprep.subr.mxu0 0.0
    %v2162 = vand.u32 %v1444, 4294901760
    %v2163 = vsub.f32 %v1444, %v2162
    %v2164 = vand.u32 %v2163, 4294901760
    %2165 = vmatpush2.msra.mxu0 %v2164
    %2166 = vmatprep.subr.mxu0 0.0
    %v2167 = vand.u32 %v1443, 4294901760
    %v2168 = vsub.f32 %v1443, %v2167
    %v2169 = vand.u32 %v2168, 4294901760
    %2170 = vmatpush2.msra.mxu0 %v2169
    %2171 = vmatprep.subr.mxu0 0.0
    %v2172 = vand.u32 %v1442, 4294901760
    %v2173 = vsub.f32 %v1442, %v2172
    %v2174 = vand.u32 %v2173, 4294901760
    %2175 = vmatpush2.msra.mxu0 %v2174
    %2176 = vmatprep.subr.mxu0 0.0
    %v2177 = vand.u32 %v1441, 4294901760
    %v2178 = vsub.f32 %v1441, %v2177
    %v2179 = vand.u32 %v2178, 4294901760
    %2180 = vmatpush2.msra.mxu0 %v2179
    %2181 = vmatprep.subr.mxu0 0.0
    %v2182 = vand.u32 %v1440, 4294901760
    %v2183 = vsub.f32 %v1440, %v2182
    %v2184 = vand.u32 %v2183, 4294901760
    %2185 = vmatpush2.msra.mxu0 %v2184
    %2186 = vmatprep.subr.mxu0 0.0
    %v2187 = vand.u32 %v1439, 4294901760
    %v2188 = vsub.f32 %v1439, %v2187
    %v2189 = vand.u32 %v2188, 4294901760
    %2190 = vmatpush2.msra.mxu0 %v2189
    %2191 = vmatprep.subr.mxu0 0.0
    %v2192 = vand.u32 %v1438, 4294901760
    %v2193 = vsub.f32 %v1438, %v2192
    %v2194 = vand.u32 %v2193, 4294901760
    %2195 = vmatpush2.msra.mxu0 %v2194
    %2196 = vmatprep.subr.mxu0 0.0
    %v2197 = vand.u32 %v1437, 4294901760
    %v2198 = vsub.f32 %v1437, %v2197
    %v2199 = vand.u32 %v2198, 4294901760
    %2200 = vmatpush2.msra.mxu0 %v2199
    %2201 = vmatprep.subr.mxu0 0.0
    %v2202 = vand.u32 %v1436, 4294901760
    %v2203 = vsub.f32 %v1436, %v2202
    %v2204 = vand.u32 %v2203, 4294901760
    %2205 = vmatpush2.msra.mxu0 %v2204
    %2206 = vmatprep.subr.mxu0 0.0
    %v2207 = vand.u32 %v1435, 4294901760
    %v2208 = vsub.f32 %v1435, %v2207
    %v2209 = vand.u32 %v2208, 4294901760
    %2210 = vmatpush2.msra.mxu0 %v2209
    %2211 = vmatprep.subr.mxu0 0.0
    %v2212 = vand.u32 %v1434, 4294901760
    %v2213 = vsub.f32 %v1434, %v2212
    %v2214 = vand.u32 %v2213, 4294901760
    %2215 = vmatpush2.msra.mxu0 %v2214
    %v2216 = vand.u32 %v951, 4294901760
    %2217 = vmatprep.mubr.f32.mxu0 %v2216
    %v2218 = vand.u32 %v487, 4294901760
    %2219 = vmatmul.mubr.f32.gmra.mxu0 %v2218
    %v2220 = vpop.f32.mrf.mxu0
    %v2221 = vadd.f32 %v2053, %v2220
    %v2222 = vpop.f32.mrf.mxu0
    %2223 = vdwg.mxu0
    %2224 = vmatprep.subr.mxu0 0.0
    %v2225 = vand.u32 %v1433, 4294901760
    %2226 = vmatpush1.msra.mxu0 %v2225
    %2227 = vmatprep.subr.mxu0 0.0
    %v2228 = vand.u32 %v1432, 4294901760
    %2229 = vmatpush1.msra.mxu0 %v2228
    %2230 = vmatprep.subr.mxu0 0.0
    %v2231 = vand.u32 %v1431, 4294901760
    %2232 = vmatpush1.msra.mxu0 %v2231
    %2233 = vmatprep.subr.mxu0 0.0
    %v2234 = vand.u32 %v1430, 4294901760
    %2235 = vmatpush1.msra.mxu0 %v2234
    %2236 = vmatprep.subr.mxu0 0.0
    %v2237 = vand.u32 %v1429, 4294901760
    %2238 = vmatpush1.msra.mxu0 %v2237
    %2239 = vmatprep.subr.mxu0 0.0
    %v2240 = vand.u32 %v1428, 4294901760
    %2241 = vmatpush1.msra.mxu0 %v2240
    %2242 = vmatprep.subr.mxu0 0.0
    %v2243 = vand.u32 %v1427, 4294901760
    %2244 = vmatpush1.msra.mxu0 %v2243
    %2245 = vmatprep.subr.mxu0 0.0
    %v2246 = vand.u32 %v1426, 4294901760
    %2247 = vmatpush1.msra.mxu0 %v2246
    %2248 = vmatprep.subr.mxu0 0.0
    %v2249 = vand.u32 %v1425, 4294901760
    %2250 = vmatpush1.msra.mxu0 %v2249
    %2251 = vmatprep.subr.mxu0 0.0
    %v2252 = vand.u32 %v1424, 4294901760
    %2253 = vmatpush1.msra.mxu0 %v2252
    %2254 = vmatprep.subr.mxu0 0.0
    %v2255 = vand.u32 %v1423, 4294901760
    %2256 = vmatpush1.msra.mxu0 %v2255
    %2257 = vmatprep.subr.mxu0 0.0
    %v2258 = vand.u32 %v1422, 4294901760
    %2259 = vmatpush1.msra.mxu0 %v2258
    %2260 = vmatprep.subr.mxu0 0.0
    %v2261 = vand.u32 %v1421, 4294901760
    %2262 = vmatpush1.msra.mxu0 %v2261
    %2263 = vmatprep.subr.mxu0 0.0
    %v2264 = vand.u32 %v1420, 4294901760
    %2265 = vmatpush1.msra.mxu0 %v2264
    %2266 = vmatprep.subr.mxu0 0.0
    %v2267 = vand.u32 %v1419, 4294901760
    %2268 = vmatpush1.msra.mxu0 %v2267
    %2269 = vmatprep.subr.mxu0 0.0
    %v2270 = vand.u32 %v1418, 4294901760
    %2271 = vmatpush1.msra.mxu0 %v2270
    %2272 = vmatprep.subr.mxu0 0.0
    %v2273 = vand.u32 %v1449, 4294901760
    %2274 = vmatpush2.msra.mxu0 %v2273
    %2275 = vmatprep.subr.mxu0 0.0
    %v2276 = vand.u32 %v1448, 4294901760
    %2277 = vmatpush2.msra.mxu0 %v2276
    %2278 = vmatprep.subr.mxu0 0.0
    %v2279 = vand.u32 %v1447, 4294901760
    %2280 = vmatpush2.msra.mxu0 %v2279
    %2281 = vmatprep.subr.mxu0 0.0
    %v2282 = vand.u32 %v1446, 4294901760
    %2283 = vmatpush2.msra.mxu0 %v2282
    %2284 = vmatprep.subr.mxu0 0.0
    %v2285 = vand.u32 %v1445, 4294901760
    %2286 = vmatpush2.msra.mxu0 %v2285
    %2287 = vmatprep.subr.mxu0 0.0
    %v2288 = vand.u32 %v1444, 4294901760
    %2289 = vmatpush2.msra.mxu0 %v2288
    %2290 = vmatprep.subr.mxu0 0.0
    %v2291 = vand.u32 %v1443, 4294901760
    %2292 = vmatpush2.msra.mxu0 %v2291
    %2293 = vmatprep.subr.mxu0 0.0
    %v2294 = vand.u32 %v1442, 4294901760
    %2295 = vmatpush2.msra.mxu0 %v2294
    %2296 = vmatprep.subr.mxu0 0.0
    %v2297 = vand.u32 %v1441, 4294901760
    %2298 = vmatpush2.msra.mxu0 %v2297
    %2299 = vmatprep.subr.mxu0 0.0
    %v2300 = vand.u32 %v1440, 4294901760
    %2301 = vmatpush2.msra.mxu0 %v2300
    %2302 = vmatprep.subr.mxu0 0.0
    %v2303 = vand.u32 %v1439, 4294901760
    %2304 = vmatpush2.msra.mxu0 %v2303
    %2305 = vmatprep.subr.mxu0 0.0
    %v2306 = vand.u32 %v1438, 4294901760
    %2307 = vmatpush2.msra.mxu0 %v2306
    %2308 = vmatprep.subr.mxu0 0.0
    %v2309 = vand.u32 %v1437, 4294901760
    %2310 = vmatpush2.msra.mxu0 %v2309
    %2311 = vmatprep.subr.mxu0 0.0
    %v2312 = vand.u32 %v1436, 4294901760
    %2313 = vmatpush2.msra.mxu0 %v2312
    %2314 = vmatprep.subr.mxu0 0.0
    %v2315 = vand.u32 %v1435, 4294901760
    %2316 = vmatpush2.msra.mxu0 %v2315
    %2317 = vmatprep.subr.mxu0 0.0
    %v2318 = vand.u32 %v1434, 4294901760
    %2319 = vmatpush2.msra.mxu0 %v2318
    %v2320 = vand.u32 %v951, 4294901760
    %2321 = vmatprep.mubr.f32.mxu0 %v2320
    %v2322 = vand.u32 %v487, 4294901760
    %2323 = vmatmul.mubr.f32.gmra.mxu0 %v2322
    %v2324 = vpop.f32.mrf.mxu0
    %v2325 = vadd.f32 %v2221, %v2324
    %v2326 = vpop.f32.mrf.mxu0
    %2327 = vdwg.mxu0
    %2328 = vmatprep.subr.mxu0 0.0
    %v2329 = vand.u32 %v1465, 4294901760
    %2330 = vmatpush1.msra.mxu0 %v2329
    %2331 = vmatprep.subr.mxu0 0.0
    %v2332 = vand.u32 %v1464, 4294901760
    %2333 = vmatpush1.msra.mxu0 %v2332
    %2334 = vmatprep.subr.mxu0 0.0
    %v2335 = vand.u32 %v1463, 4294901760
    %2336 = vmatpush1.msra.mxu0 %v2335
    %2337 = vmatprep.subr.mxu0 0.0
    %v2338 = vand.u32 %v1462, 4294901760
    %2339 = vmatpush1.msra.mxu0 %v2338
    %2340 = vmatprep.subr.mxu0 0.0
    %v2341 = vand.u32 %v1461, 4294901760
    %2342 = vmatpush1.msra.mxu0 %v2341
    %2343 = vmatprep.subr.mxu0 0.0
    %v2344 = vand.u32 %v1460, 4294901760
    %2345 = vmatpush1.msra.mxu0 %v2344
    %2346 = vmatprep.subr.mxu0 0.0
    %v2347 = vand.u32 %v1459, 4294901760
    %2348 = vmatpush1.msra.mxu0 %v2347
    %2349 = vmatprep.subr.mxu0 0.0
    %v2350 = vand.u32 %v1458, 4294901760
    %2351 = vmatpush1.msra.mxu0 %v2350
    %2352 = vmatprep.subr.mxu0 0.0
    %v2353 = vand.u32 %v1457, 4294901760
    %2354 = vmatpush1.msra.mxu0 %v2353
    %2355 = vmatprep.subr.mxu0 0.0
    %v2356 = vand.u32 %v1456, 4294901760
    %2357 = vmatpush1.msra.mxu0 %v2356
    %2358 = vmatprep.subr.mxu0 0.0
    %v2359 = vand.u32 %v1455, 4294901760
    %2360 = vmatpush1.msra.mxu0 %v2359
    %2361 = vmatprep.subr.mxu0 0.0
    %v2362 = vand.u32 %v1454, 4294901760
    %2363 = vmatpush1.msra.mxu0 %v2362
    %2364 = vmatprep.subr.mxu0 0.0
    %v2365 = vand.u32 %v1453, 4294901760
    %2366 = vmatpush1.msra.mxu0 %v2365
    %2367 = vmatprep.subr.mxu0 0.0
    %v2368 = vand.u32 %v1452, 4294901760
    %2369 = vmatpush1.msra.mxu0 %v2368
    %2370 = vmatprep.subr.mxu0 0.0
    %v2371 = vand.u32 %v1451, 4294901760
    %2372 = vmatpush1.msra.mxu0 %v2371
    %2373 = vmatprep.subr.mxu0 0.0
    %v2374 = vand.u32 %v1450, 4294901760
    %2375 = vmatpush1.msra.mxu0 %v2374
    %2376 = vmatprep.subr.mxu0 0.0
    %2377 = vmatpush2.msra.mxu0 0.0
    %2378 = vmatprep.subr.mxu0 0.0
    %2379 = vmatpush2.msra.mxu0 0.0
    %2380 = vmatprep.subr.mxu0 0.0
    %2381 = vmatpush2.msra.mxu0 0.0
    %2382 = vmatprep.subr.mxu0 0.0
    %2383 = vmatpush2.msra.mxu0 0.0
    %2384 = vmatprep.subr.mxu0 0.0
    %2385 = vmatpush2.msra.mxu0 0.0
    %2386 = vmatprep.subr.mxu0 0.0
    %2387 = vmatpush2.msra.mxu0 0.0
    %2388 = vmatprep.subr.mxu0 0.0
    %2389 = vmatpush2.msra.mxu0 0.0
    %2390 = vmatprep.subr.mxu0 0.0
    %2391 = vmatpush2.msra.mxu0 0.0
    %2392 = vmatprep.subr.mxu0 0.0
    %2393 = vmatpush2.msra.mxu0 0.0
    %2394 = vmatprep.subr.mxu0 0.0
    %2395 = vmatpush2.msra.mxu0 0.0
    %2396 = vmatprep.subr.mxu0 0.0
    %2397 = vmatpush2.msra.mxu0 0.0
    %2398 = vmatprep.subr.mxu0 0.0
    %2399 = vmatpush2.msra.mxu0 0.0
    %2400 = vmatprep.subr.mxu0 0.0
    %2401 = vmatpush2.msra.mxu0 0.0
    %2402 = vmatprep.subr.mxu0 0.0
    %2403 = vmatpush2.msra.mxu0 0.0
    %2404 = vmatprep.subr.mxu0 0.0
    %2405 = vmatpush2.msra.mxu0 0.0
    %2406 = vmatprep.subr.mxu0 0.0
    %2407 = vmatpush2.msra.mxu0 0.0
    %2408 = vmatprep.mubr.f32.mxu0 0.0
    %v2409 = vand.u32 %v1415, 4294901760
    %v2410 = vsub.f32 %v1415, %v2409
    %v2411 = vand.u32 %v2410, 4294901760
    %v2412 = vsub.f32 %v2410, %v2411
    %v2413 = vand.u32 %v2412, 4294901760
    %2414 = vmatmul.mubr.f32.gmra.mxu0 %v2413
    %v2415 = vpop.f32.mrf.mxu0
    %v2416 = vadd.f32 %v2325, %v2415
    %v2417 = vpop.f32.mrf.mxu0
    %2418 = vdwg.mxu0
    %2419 = vmatprep.subr.mxu0 0.0
    %v2420 = vand.u32 %v1465, 4294901760
    %v2421 = vsub.f32 %v1465, %v2420
    %v2422 = vand.u32 %v2421, 4294901760
    %v2423 = vsub.f32 %v2421, %v2422
    %v2424 = vand.u32 %v2423, 4294901760
    %2425 = vmatpush1.msra.mxu0 %v2424
    %2426 = vmatprep.subr.mxu0 0.0
    %v2427 = vand.u32 %v1464, 4294901760
    %v2428 = vsub.f32 %v1464, %v2427
    %v2429 = vand.u32 %v2428, 4294901760
    %v2430 = vsub.f32 %v2428, %v2429
    %v2431 = vand.u32 %v2430, 4294901760
    %2432 = vmatpush1.msra.mxu0 %v2431
    %2433 = vmatprep.subr.mxu0 0.0
    %v2434 = vand.u32 %v1463, 4294901760
    %v2435 = vsub.f32 %v1463, %v2434
    %v2436 = vand.u32 %v2435, 4294901760
    %v2437 = vsub.f32 %v2435, %v2436
    %v2438 = vand.u32 %v2437, 4294901760
    %2439 = vmatpush1.msra.mxu0 %v2438
    %2440 = vmatprep.subr.mxu0 0.0
    %v2441 = vand.u32 %v1462, 4294901760
    %v2442 = vsub.f32 %v1462, %v2441
    %v2443 = vand.u32 %v2442, 4294901760
    %v2444 = vsub.f32 %v2442, %v2443
    %v2445 = vand.u32 %v2444, 4294901760
    %2446 = vmatpush1.msra.mxu0 %v2445
    %2447 = vmatprep.subr.mxu0 0.0
    %v2448 = vand.u32 %v1461, 4294901760
    %v2449 = vsub.f32 %v1461, %v2448
    %v2450 = vand.u32 %v2449, 4294901760
    %v2451 = vsub.f32 %v2449, %v2450
    %v2452 = vand.u32 %v2451, 4294901760
    %2453 = vmatpush1.msra.mxu0 %v2452
    %2454 = vmatprep.subr.mxu0 0.0
    %v2455 = vand.u32 %v1460, 4294901760
    %v2456 = vsub.f32 %v1460, %v2455
    %v2457 = vand.u32 %v2456, 4294901760
    %v2458 = vsub.f32 %v2456, %v2457
    %v2459 = vand.u32 %v2458, 4294901760
    %2460 = vmatpush1.msra.mxu0 %v2459
    %2461 = vmatprep.subr.mxu0 0.0
    %v2462 = vand.u32 %v1459, 4294901760
    %v2463 = vsub.f32 %v1459, %v2462
    %v2464 = vand.u32 %v2463, 4294901760
    %v2465 = vsub.f32 %v2463, %v2464
    %v2466 = vand.u32 %v2465, 4294901760
    %2467 = vmatpush1.msra.mxu0 %v2466
    %2468 = vmatprep.subr.mxu0 0.0
    %v2469 = vand.u32 %v1458, 4294901760
    %v2470 = vsub.f32 %v1458, %v2469
    %v2471 = vand.u32 %v2470, 4294901760
    %v2472 = vsub.f32 %v2470, %v2471
    %v2473 = vand.u32 %v2472, 4294901760
    %2474 = vmatpush1.msra.mxu0 %v2473
    %2475 = vmatprep.subr.mxu0 0.0
    %v2476 = vand.u32 %v1457, 4294901760
    %v2477 = vsub.f32 %v1457, %v2476
    %v2478 = vand.u32 %v2477, 4294901760
    %v2479 = vsub.f32 %v2477, %v2478
    %v2480 = vand.u32 %v2479, 4294901760
    %2481 = vmatpush1.msra.mxu0 %v2480
    %2482 = vmatprep.subr.mxu0 0.0
    %v2483 = vand.u32 %v1456, 4294901760
    %v2484 = vsub.f32 %v1456, %v2483
    %v2485 = vand.u32 %v2484, 4294901760
    %v2486 = vsub.f32 %v2484, %v2485
    %v2487 = vand.u32 %v2486, 4294901760
    %2488 = vmatpush1.msra.mxu0 %v2487
    %2489 = vmatprep.subr.mxu0 0.0
    %v2490 = vand.u32 %v1455, 4294901760
    %v2491 = vsub.f32 %v1455, %v2490
    %v2492 = vand.u32 %v2491, 4294901760
    %v2493 = vsub.f32 %v2491, %v2492
    %v2494 = vand.u32 %v2493, 4294901760
    %2495 = vmatpush1.msra.mxu0 %v2494
    %2496 = vmatprep.subr.mxu0 0.0
    %v2497 = vand.u32 %v1454, 4294901760
    %v2498 = vsub.f32 %v1454, %v2497
    %v2499 = vand.u32 %v2498, 4294901760
    %v2500 = vsub.f32 %v2498, %v2499
    %v2501 = vand.u32 %v2500, 4294901760
    %2502 = vmatpush1.msra.mxu0 %v2501
    %2503 = vmatprep.subr.mxu0 0.0
    %v2504 = vand.u32 %v1453, 4294901760
    %v2505 = vsub.f32 %v1453, %v2504
    %v2506 = vand.u32 %v2505, 4294901760
    %v2507 = vsub.f32 %v2505, %v2506
    %v2508 = vand.u32 %v2507, 4294901760
    %2509 = vmatpush1.msra.mxu0 %v2508
    %2510 = vmatprep.subr.mxu0 0.0
    %v2511 = vand.u32 %v1452, 4294901760
    %v2512 = vsub.f32 %v1452, %v2511
    %v2513 = vand.u32 %v2512, 4294901760
    %v2514 = vsub.f32 %v2512, %v2513
    %v2515 = vand.u32 %v2514, 4294901760
    %2516 = vmatpush1.msra.mxu0 %v2515
    %2517 = vmatprep.subr.mxu0 0.0
    %v2518 = vand.u32 %v1451, 4294901760
    %v2519 = vsub.f32 %v1451, %v2518
    %v2520 = vand.u32 %v2519, 4294901760
    %v2521 = vsub.f32 %v2519, %v2520
    %v2522 = vand.u32 %v2521, 4294901760
    %2523 = vmatpush1.msra.mxu0 %v2522
    %2524 = vmatprep.subr.mxu0 0.0
    %v2525 = vand.u32 %v1450, 4294901760
    %v2526 = vsub.f32 %v1450, %v2525
    %v2527 = vand.u32 %v2526, 4294901760
    %v2528 = vsub.f32 %v2526, %v2527
    %v2529 = vand.u32 %v2528, 4294901760
    %2530 = vmatpush1.msra.mxu0 %v2529
    %2531 = vmatprep.subr.mxu0 0.0
    %2532 = vmatpush2.msra.mxu0 0.0
    %2533 = vmatprep.subr.mxu0 0.0
    %2534 = vmatpush2.msra.mxu0 0.0
    %2535 = vmatprep.subr.mxu0 0.0
    %2536 = vmatpush2.msra.mxu0 0.0
    %2537 = vmatprep.subr.mxu0 0.0
    %2538 = vmatpush2.msra.mxu0 0.0
    %2539 = vmatprep.subr.mxu0 0.0
    %2540 = vmatpush2.msra.mxu0 0.0
    %2541 = vmatprep.subr.mxu0 0.0
    %2542 = vmatpush2.msra.mxu0 0.0
    %2543 = vmatprep.subr.mxu0 0.0
    %2544 = vmatpush2.msra.mxu0 0.0
    %2545 = vmatprep.subr.mxu0 0.0
    %2546 = vmatpush2.msra.mxu0 0.0
    %2547 = vmatprep.subr.mxu0 0.0
    %2548 = vmatpush2.msra.mxu0 0.0
    %2549 = vmatprep.subr.mxu0 0.0
    %2550 = vmatpush2.msra.mxu0 0.0
    %2551 = vmatprep.subr.mxu0 0.0
    %2552 = vmatpush2.msra.mxu0 0.0
    %2553 = vmatprep.subr.mxu0 0.0
    %2554 = vmatpush2.msra.mxu0 0.0
    %2555 = vmatprep.subr.mxu0 0.0
    %2556 = vmatpush2.msra.mxu0 0.0
    %2557 = vmatprep.subr.mxu0 0.0
    %2558 = vmatpush2.msra.mxu0 0.0
    %2559 = vmatprep.subr.mxu0 0.0
    %2560 = vmatpush2.msra.mxu0 0.0
    %2561 = vmatprep.subr.mxu0 0.0
    %2562 = vmatpush2.msra.mxu0 0.0
    %2563 = vmatprep.mubr.f32.mxu0 0.0
    %v2564 = vand.u32 %v1415, 4294901760
    %2565 = vmatmul.mubr.f32.gmra.mxu0 %v2564
    %v2566 = vpop.f32.mrf.mxu0
    %v2567 = vadd.f32 %v2416, %v2566
    %v2568 = vpop.f32.mrf.mxu0
    %2569 = vdwg.mxu0
    %2570 = vmatprep.subr.mxu0 0.0
    %v2571 = vand.u32 %v1465, 4294901760
    %v2572 = vsub.f32 %v1465, %v2571
    %2573 = vmatpush1.msra.mxu0 %v2572
    %2574 = vmatprep.subr.mxu0 0.0
    %v2575 = vand.u32 %v1464, 4294901760
    %v2576 = vsub.f32 %v1464, %v2575
    %2577 = vmatpush1.msra.mxu0 %v2576
    %2578 = vmatprep.subr.mxu0 0.0
    %v2579 = vand.u32 %v1463, 4294901760
    %v2580 = vsub.f32 %v1463, %v2579
    %2581 = vmatpush1.msra.mxu0 %v2580
    %2582 = vmatprep.subr.mxu0 0.0
    %v2583 = vand.u32 %v1462, 4294901760
    %v2584 = vsub.f32 %v1462, %v2583
    %2585 = vmatpush1.msra.mxu0 %v2584
    %2586 = vmatprep.subr.mxu0 0.0
    %v2587 = vand.u32 %v1461, 4294901760
    %v2588 = vsub.f32 %v1461, %v2587
    %2589 = vmatpush1.msra.mxu0 %v2588
    %2590 = vmatprep.subr.mxu0 0.0
    %v2591 = vand.u32 %v1460, 4294901760
    %v2592 = vsub.f32 %v1460, %v2591
    %2593 = vmatpush1.msra.mxu0 %v2592
    %2594 = vmatprep.subr.mxu0 0.0
    %v2595 = vand.u32 %v1459, 4294901760
    %v2596 = vsub.f32 %v1459, %v2595
    %2597 = vmatpush1.msra.mxu0 %v2596
    %2598 = vmatprep.subr.mxu0 0.0
    %v2599 = vand.u32 %v1458, 4294901760
    %v2600 = vsub.f32 %v1458, %v2599
    %2601 = vmatpush1.msra.mxu0 %v2600
    %2602 = vmatprep.subr.mxu0 0.0
    %v2603 = vand.u32 %v1457, 4294901760
    %v2604 = vsub.f32 %v1457, %v2603
    %2605 = vmatpush1.msra.mxu0 %v2604
    %2606 = vmatprep.subr.mxu0 0.0
    %v2607 = vand.u32 %v1456, 4294901760
    %v2608 = vsub.f32 %v1456, %v2607
    %2609 = vmatpush1.msra.mxu0 %v2608
    %2610 = vmatprep.subr.mxu0 0.0
    %v2611 = vand.u32 %v1455, 4294901760
    %v2612 = vsub.f32 %v1455, %v2611
    %2613 = vmatpush1.msra.mxu0 %v2612
    %2614 = vmatprep.subr.mxu0 0.0
    %v2615 = vand.u32 %v1454, 4294901760
    %v2616 = vsub.f32 %v1454, %v2615
    %2617 = vmatpush1.msra.mxu0 %v2616
    %2618 = vmatprep.subr.mxu0 0.0
    %v2619 = vand.u32 %v1453, 4294901760
    %v2620 = vsub.f32 %v1453, %v2619
    %2621 = vmatpush1.msra.mxu0 %v2620
    %2622 = vmatprep.subr.mxu0 0.0
    %v2623 = vand.u32 %v1452, 4294901760
    %v2624 = vsub.f32 %v1452, %v2623
    %2625 = vmatpush1.msra.mxu0 %v2624
    %2626 = vmatprep.subr.mxu0 0.0
    %v2627 = vand.u32 %v1451, 4294901760
    %v2628 = vsub.f32 %v1451, %v2627
    %2629 = vmatpush1.msra.mxu0 %v2628
    %2630 = vmatprep.subr.mxu0 0.0
    %v2631 = vand.u32 %v1450, 4294901760
    %v2632 = vsub.f32 %v1450, %v2631
    %2633 = vmatpush1.msra.mxu0 %v2632
    %2634 = vmatprep.subr.mxu0 0.0
    %2635 = vmatpush2.msra.mxu0 0.0
    %2636 = vmatprep.subr.mxu0 0.0
    %2637 = vmatpush2.msra.mxu0 0.0
    %2638 = vmatprep.subr.mxu0 0.0
    %2639 = vmatpush2.msra.mxu0 0.0
    %2640 = vmatprep.subr.mxu0 0.0
    %2641 = vmatpush2.msra.mxu0 0.0
    %2642 = vmatprep.subr.mxu0 0.0
    %2643 = vmatpush2.msra.mxu0 0.0
    %2644 = vmatprep.subr.mxu0 0.0
    %2645 = vmatpush2.msra.mxu0 0.0
    %2646 = vmatprep.subr.mxu0 0.0
    %2647 = vmatpush2.msra.mxu0 0.0
    %2648 = vmatprep.subr.mxu0 0.0
    %2649 = vmatpush2.msra.mxu0 0.0
    %2650 = vmatprep.subr.mxu0 0.0
    %2651 = vmatpush2.msra.mxu0 0.0
    %2652 = vmatprep.subr.mxu0 0.0
    %2653 = vmatpush2.msra.mxu0 0.0
    %2654 = vmatprep.subr.mxu0 0.0
    %2655 = vmatpush2.msra.mxu0 0.0
    %2656 = vmatprep.subr.mxu0 0.0
    %2657 = vmatpush2.msra.mxu0 0.0
    %2658 = vmatprep.subr.mxu0 0.0
    %2659 = vmatpush2.msra.mxu0 0.0
    %2660 = vmatprep.subr.mxu0 0.0
    %2661 = vmatpush2.msra.mxu0 0.0
    %2662 = vmatprep.subr.mxu0 0.0
    %2663 = vmatpush2.msra.mxu0 0.0
    %2664 = vmatprep.subr.mxu0 0.0
    %2665 = vmatpush2.msra.mxu0 0.0
    %2666 = vmatprep.mubr.f32.mxu0 0.0
    %v2667 = vand.u32 %v1415, 4294901760
    %v2668 = vsub.f32 %v1415, %v2667
    %2669 = vmatmul.mubr.f32.gmra.mxu0 %v2668
    %v2670 = vpop.f32.mrf.mxu0
    %v2671 = vadd.f32 %v2567, %v2670
    %v2672 = vpop.f32.mrf.mxu0
    %2673 = vdwg.mxu0
    %2674 = vmatprep.subr.mxu0 0.0
    %v2675 = vand.u32 %v1465, 4294901760
    %2676 = vmatpush1.msra.mxu0 %v2675
    %2677 = vmatprep.subr.mxu0 0.0
    %v2678 = vand.u32 %v1464, 4294901760
    %2679 = vmatpush1.msra.mxu0 %v2678
    %2680 = vmatprep.subr.mxu0 0.0
    %v2681 = vand.u32 %v1463, 4294901760
    %2682 = vmatpush1.msra.mxu0 %v2681
    %2683 = vmatprep.subr.mxu0 0.0
    %v2684 = vand.u32 %v1462, 4294901760
    %2685 = vmatpush1.msra.mxu0 %v2684
    %2686 = vmatprep.subr.mxu0 0.0
    %v2687 = vand.u32 %v1461, 4294901760
    %2688 = vmatpush1.msra.mxu0 %v2687
    %2689 = vmatprep.subr.mxu0 0.0
    %v2690 = vand.u32 %v1460, 4294901760
    %2691 = vmatpush1.msra.mxu0 %v2690
    %2692 = vmatprep.subr.mxu0 0.0
    %v2693 = vand.u32 %v1459, 4294901760
    %2694 = vmatpush1.msra.mxu0 %v2693
    %2695 = vmatprep.subr.mxu0 0.0
    %v2696 = vand.u32 %v1458, 4294901760
    %2697 = vmatpush1.msra.mxu0 %v2696
    %2698 = vmatprep.subr.mxu0 0.0
    %v2699 = vand.u32 %v1457, 4294901760
    %2700 = vmatpush1.msra.mxu0 %v2699
    %2701 = vmatprep.subr.mxu0 0.0
    %v2702 = vand.u32 %v1456, 4294901760
    %2703 = vmatpush1.msra.mxu0 %v2702
    %2704 = vmatprep.subr.mxu0 0.0
    %v2705 = vand.u32 %v1455, 4294901760
    %2706 = vmatpush1.msra.mxu0 %v2705
    %2707 = vmatprep.subr.mxu0 0.0
    %v2708 = vand.u32 %v1454, 4294901760
    %2709 = vmatpush1.msra.mxu0 %v2708
    %2710 = vmatprep.subr.mxu0 0.0
    %v2711 = vand.u32 %v1453, 4294901760
    %2712 = vmatpush1.msra.mxu0 %v2711
    %2713 = vmatprep.subr.mxu0 0.0
    %v2714 = vand.u32 %v1452, 4294901760
    %2715 = vmatpush1.msra.mxu0 %v2714
    %2716 = vmatprep.subr.mxu0 0.0
    %v2717 = vand.u32 %v1451, 4294901760
    %2718 = vmatpush1.msra.mxu0 %v2717
    %2719 = vmatprep.subr.mxu0 0.0
    %v2720 = vand.u32 %v1450, 4294901760
    %2721 = vmatpush1.msra.mxu0 %v2720
    %2722 = vmatprep.subr.mxu0 0.0
    %2723 = vmatpush2.msra.mxu0 0.0
    %2724 = vmatprep.subr.mxu0 0.0
    %2725 = vmatpush2.msra.mxu0 0.0
    %2726 = vmatprep.subr.mxu0 0.0
    %2727 = vmatpush2.msra.mxu0 0.0
    %2728 = vmatprep.subr.mxu0 0.0
    %2729 = vmatpush2.msra.mxu0 0.0
    %2730 = vmatprep.subr.mxu0 0.0
    %2731 = vmatpush2.msra.mxu0 0.0
    %2732 = vmatprep.subr.mxu0 0.0
    %2733 = vmatpush2.msra.mxu0 0.0
    %2734 = vmatprep.subr.mxu0 0.0
    %2735 = vmatpush2.msra.mxu0 0.0
    %2736 = vmatprep.subr.mxu0 0.0
    %2737 = vmatpush2.msra.mxu0 0.0
    %2738 = vmatprep.subr.mxu0 0.0
    %2739 = vmatpush2.msra.mxu0 0.0
    %2740 = vmatprep.subr.mxu0 0.0
    %2741 = vmatpush2.msra.mxu0 0.0
    %2742 = vmatprep.subr.mxu0 0.0
    %2743 = vmatpush2.msra.mxu0 0.0
    %2744 = vmatprep.subr.mxu0 0.0
    %2745 = vmatpush2.msra.mxu0 0.0
    %2746 = vmatprep.subr.mxu0 0.0
    %2747 = vmatpush2.msra.mxu0 0.0
    %2748 = vmatprep.subr.mxu0 0.0
    %2749 = vmatpush2.msra.mxu0 0.0
    %2750 = vmatprep.subr.mxu0 0.0
    %2751 = vmatpush2.msra.mxu0 0.0
    %2752 = vmatprep.subr.mxu0 0.0
    %2753 = vmatpush2.msra.mxu0 0.0
    %2754 = vmatprep.mubr.f32.mxu0 0.0
    %v2755 = vand.u32 %v1415, 4294901760
    %v2756 = vsub.f32 %v1415, %v2755
    %v2757 = vand.u32 %v2756, 4294901760
    %2758 = vmatmul.mubr.f32.gmra.mxu0 %v2757
    %v2759 = vpop.f32.mrf.mxu0
    %v2760 = vadd.f32 %v2671, %v2759
    %v2761 = vpop.f32.mrf.mxu0
    %2762 = vdwg.mxu0
    %2763 = vmatprep.subr.mxu0 0.0
    %v2764 = vand.u32 %v1465, 4294901760
    %v2765 = vsub.f32 %v1465, %v2764
    %v2766 = vand.u32 %v2765, 4294901760
    %2767 = vmatpush1.msra.mxu0 %v2766
    %2768 = vmatprep.subr.mxu0 0.0
    %v2769 = vand.u32 %v1464, 4294901760
    %v2770 = vsub.f32 %v1464, %v2769
    %v2771 = vand.u32 %v2770, 4294901760
    %2772 = vmatpush1.msra.mxu0 %v2771
    %2773 = vmatprep.subr.mxu0 0.0
    %v2774 = vand.u32 %v1463, 4294901760
    %v2775 = vsub.f32 %v1463, %v2774
    %v2776 = vand.u32 %v2775, 4294901760
    %2777 = vmatpush1.msra.mxu0 %v2776
    %2778 = vmatprep.subr.mxu0 0.0
    %v2779 = vand.u32 %v1462, 4294901760
    %v2780 = vsub.f32 %v1462, %v2779
    %v2781 = vand.u32 %v2780, 4294901760
    %2782 = vmatpush1.msra.mxu0 %v2781
    %2783 = vmatprep.subr.mxu0 0.0
    %v2784 = vand.u32 %v1461, 4294901760
    %v2785 = vsub.f32 %v1461, %v2784
    %v2786 = vand.u32 %v2785, 4294901760
    %2787 = vmatpush1.msra.mxu0 %v2786
    %2788 = vmatprep.subr.mxu0 0.0
    %v2789 = vand.u32 %v1460, 4294901760
    %v2790 = vsub.f32 %v1460, %v2789
    %v2791 = vand.u32 %v2790, 4294901760
    %2792 = vmatpush1.msra.mxu0 %v2791
    %2793 = vmatprep.subr.mxu0 0.0
    %v2794 = vand.u32 %v1459, 4294901760
    %v2795 = vsub.f32 %v1459, %v2794
    %v2796 = vand.u32 %v2795, 4294901760
    %2797 = vmatpush1.msra.mxu0 %v2796
    %2798 = vmatprep.subr.mxu0 0.0
    %v2799 = vand.u32 %v1458, 4294901760
    %v2800 = vsub.f32 %v1458, %v2799
    %v2801 = vand.u32 %v2800, 4294901760
    %2802 = vmatpush1.msra.mxu0 %v2801
    %2803 = vmatprep.subr.mxu0 0.0
    %v2804 = vand.u32 %v1457, 4294901760
    %v2805 = vsub.f32 %v1457, %v2804
    %v2806 = vand.u32 %v2805, 4294901760
    %2807 = vmatpush1.msra.mxu0 %v2806
    %2808 = vmatprep.subr.mxu0 0.0
    %v2809 = vand.u32 %v1456, 4294901760
    %v2810 = vsub.f32 %v1456, %v2809
    %v2811 = vand.u32 %v2810, 4294901760
    %2812 = vmatpush1.msra.mxu0 %v2811
    %2813 = vmatprep.subr.mxu0 0.0
    %v2814 = vand.u32 %v1455, 4294901760
    %v2815 = vsub.f32 %v1455, %v2814
    %v2816 = vand.u32 %v2815, 4294901760
    %2817 = vmatpush1.msra.mxu0 %v2816
    %2818 = vmatprep.subr.mxu0 0.0
    %v2819 = vand.u32 %v1454, 4294901760
    %v2820 = vsub.f32 %v1454, %v2819
    %v2821 = vand.u32 %v2820, 4294901760
    %2822 = vmatpush1.msra.mxu0 %v2821
    %2823 = vmatprep.subr.mxu0 0.0
    %v2824 = vand.u32 %v1453, 4294901760
    %v2825 = vsub.f32 %v1453, %v2824
    %v2826 = vand.u32 %v2825, 4294901760
    %2827 = vmatpush1.msra.mxu0 %v2826
    %2828 = vmatprep.subr.mxu0 0.0
    %v2829 = vand.u32 %v1452, 4294901760
    %v2830 = vsub.f32 %v1452, %v2829
    %v2831 = vand.u32 %v2830, 4294901760
    %2832 = vmatpush1.msra.mxu0 %v2831
    %2833 = vmatprep.subr.mxu0 0.0
    %v2834 = vand.u32 %v1451, 4294901760
    %v2835 = vsub.f32 %v1451, %v2834
    %v2836 = vand.u32 %v2835, 4294901760
    %2837 = vmatpush1.msra.mxu0 %v2836
    %2838 = vmatprep.subr.mxu0 0.0
    %v2839 = vand.u32 %v1450, 4294901760
    %v2840 = vsub.f32 %v1450, %v2839
    %v2841 = vand.u32 %v2840, 4294901760
    %2842 = vmatpush1.msra.mxu0 %v2841
    %2843 = vmatprep.subr.mxu0 0.0
    %2844 = vmatpush2.msra.mxu0 0.0
    %2845 = vmatprep.subr.mxu0 0.0
    %2846 = vmatpush2.msra.mxu0 0.0
    %2847 = vmatprep.subr.mxu0 0.0
    %2848 = vmatpush2.msra.mxu0 0.0
    %2849 = vmatprep.subr.mxu0 0.0
    %2850 = vmatpush2.msra.mxu0 0.0
    %2851 = vmatprep.subr.mxu0 0.0
    %2852 = vmatpush2.msra.mxu0 0.0
    %2853 = vmatprep.subr.mxu0 0.0
    %2854 = vmatpush2.msra.mxu0 0.0
    %2855 = vmatprep.subr.mxu0 0.0
    %2856 = vmatpush2.msra.mxu0 0.0
    %2857 = vmatprep.subr.mxu0 0.0
    %2858 = vmatpush2.msra.mxu0 0.0
    %2859 = vmatprep.subr.mxu0 0.0
    %2860 = vmatpush2.msra.mxu0 0.0
    %2861 = vmatprep.subr.mxu0 0.0
    %2862 = vmatpush2.msra.mxu0 0.0
    %2863 = vmatprep.subr.mxu0 0.0
    %2864 = vmatpush2.msra.mxu0 0.0
    %2865 = vmatprep.subr.mxu0 0.0
    %2866 = vmatpush2.msra.mxu0 0.0
    %2867 = vmatprep.subr.mxu0 0.0
    %2868 = vmatpush2.msra.mxu0 0.0
    %2869 = vmatprep.subr.mxu0 0.0
    %2870 = vmatpush2.msra.mxu0 0.0
    %2871 = vmatprep.subr.mxu0 0.0
    %2872 = vmatpush2.msra.mxu0 0.0
    %2873 = vmatprep.subr.mxu0 0.0
    %2874 = vmatpush2.msra.mxu0 0.0
    %2875 = vmatprep.mubr.f32.mxu0 0.0
    %v2876 = vand.u32 %v1415, 4294901760
    %2877 = vmatmul.mubr.f32.gmra.mxu0 %v2876
    %v2878 = vpop.f32.mrf.mxu0
    %v2879 = vadd.f32 %v2760, %v2878
    %v2880 = vpop.f32.mrf.mxu0
    %2881 = vdwg.mxu0
    %2882 = vmatprep.subr.mxu0 0.0
    %v2883 = vand.u32 %v1465, 4294901760
    %2884 = vmatpush1.msra.mxu0 %v2883
    %2885 = vmatprep.subr.mxu0 0.0
    %v2886 = vand.u32 %v1464, 4294901760
    %2887 = vmatpush1.msra.mxu0 %v2886
    %2888 = vmatprep.subr.mxu0 0.0
    %v2889 = vand.u32 %v1463, 4294901760
    %2890 = vmatpush1.msra.mxu0 %v2889
    %2891 = vmatprep.subr.mxu0 0.0
    %v2892 = vand.u32 %v1462, 4294901760
    %2893 = vmatpush1.msra.mxu0 %v2892
    %2894 = vmatprep.subr.mxu0 0.0
    %v2895 = vand.u32 %v1461, 4294901760
    %2896 = vmatpush1.msra.mxu0 %v2895
    %2897 = vmatprep.subr.mxu0 0.0
    %v2898 = vand.u32 %v1460, 4294901760
    %2899 = vmatpush1.msra.mxu0 %v2898
    %2900 = vmatprep.subr.mxu0 0.0
    %v2901 = vand.u32 %v1459, 4294901760
    %2902 = vmatpush1.msra.mxu0 %v2901
    %2903 = vmatprep.subr.mxu0 0.0
    %v2904 = vand.u32 %v1458, 4294901760
    %2905 = vmatpush1.msra.mxu0 %v2904
    %2906 = vmatprep.subr.mxu0 0.0
    %v2907 = vand.u32 %v1457, 4294901760
    %2908 = vmatpush1.msra.mxu0 %v2907
    %2909 = vmatprep.subr.mxu0 0.0
    %v2910 = vand.u32 %v1456, 4294901760
    %2911 = vmatpush1.msra.mxu0 %v2910
    %2912 = vmatprep.subr.mxu0 0.0
    %v2913 = vand.u32 %v1455, 4294901760
    %2914 = vmatpush1.msra.mxu0 %v2913
    %2915 = vmatprep.subr.mxu0 0.0
    %v2916 = vand.u32 %v1454, 4294901760
    %2917 = vmatpush1.msra.mxu0 %v2916
    %2918 = vmatprep.subr.mxu0 0.0
    %v2919 = vand.u32 %v1453, 4294901760
    %2920 = vmatpush1.msra.mxu0 %v2919
    %2921 = vmatprep.subr.mxu0 0.0
    %v2922 = vand.u32 %v1452, 4294901760
    %2923 = vmatpush1.msra.mxu0 %v2922
    %2924 = vmatprep.subr.mxu0 0.0
    %v2925 = vand.u32 %v1451, 4294901760
    %2926 = vmatpush1.msra.mxu0 %v2925
    %2927 = vmatprep.subr.mxu0 0.0
    %v2928 = vand.u32 %v1450, 4294901760
    %2929 = vmatpush1.msra.mxu0 %v2928
    %2930 = vmatprep.subr.mxu0 0.0
    %2931 = vmatpush2.msra.mxu0 0.0
    %2932 = vmatprep.subr.mxu0 0.0
    %2933 = vmatpush2.msra.mxu0 0.0
    %2934 = vmatprep.subr.mxu0 0.0
    %2935 = vmatpush2.msra.mxu0 0.0
    %2936 = vmatprep.subr.mxu0 0.0
    %2937 = vmatpush2.msra.mxu0 0.0
    %2938 = vmatprep.subr.mxu0 0.0
    %2939 = vmatpush2.msra.mxu0 0.0
    %2940 = vmatprep.subr.mxu0 0.0
    %2941 = vmatpush2.msra.mxu0 0.0
    %2942 = vmatprep.subr.mxu0 0.0
    %2943 = vmatpush2.msra.mxu0 0.0
    %2944 = vmatprep.subr.mxu0 0.0
    %2945 = vmatpush2.msra.mxu0 0.0
    %2946 = vmatprep.subr.mxu0 0.0
    %2947 = vmatpush2.msra.mxu0 0.0
    %2948 = vmatprep.subr.mxu0 0.0
    %2949 = vmatpush2.msra.mxu0 0.0
    %2950 = vmatprep.subr.mxu0 0.0
    %2951 = vmatpush2.msra.mxu0 0.0
    %2952 = vmatprep.subr.mxu0 0.0
    %2953 = vmatpush2.msra.mxu0 0.0
    %2954 = vmatprep.subr.mxu0 0.0
    %2955 = vmatpush2.msra.mxu0 0.0
    %2956 = vmatprep.subr.mxu0 0.0
    %2957 = vmatpush2.msra.mxu0 0.0
    %2958 = vmatprep.subr.mxu0 0.0
    %2959 = vmatpush2.msra.mxu0 0.0
    %2960 = vmatprep.subr.mxu0 0.0
    %2961 = vmatpush2.msra.mxu0 0.0
    %2962 = vmatprep.mubr.f32.mxu0 0.0
    %v2963 = vand.u32 %v1415, 4294901760
    %2964 = vmatmul.mubr.f32.gmra.mxu0 %v2963
    %v2965 = vpop.f32.mrf.mxu0
    %v2966 = vadd.f32 %v2879, %v2965
    %v2967 = vpop.f32.mrf.mxu0
    %2968 = vdwg.mxu0
    %vm2969 = vcmask 523264
    %2970 = vst.msk [vmem:[#allocation2] sm:$0xff] %vm2969, %v2966
    %v2971 = vld [vmem:[%s3] sm:$0xf]
    %vm2972 = vcmask 64512
    %v2974 = vsel %vm2972, %v2971, 0
    %2976 = vmatprep.subr.mxu0 0.0
    %2977 = vmatpush1.msra.mxu0 0.0
    %2978 = vmatprep.subr.mxu0 0.0
    %2979 = vmatpush1.msra.mxu0 0.0
    %2980 = vmatprep.subr.mxu0 0.0
    %2981 = vmatpush1.msra.mxu0 0.0
    %2982 = vmatprep.subr.mxu0 0.0
    %2983 = vmatpush1.msra.mxu0 0.0
    %2984 = vmatprep.subr.mxu0 0.0
    %2985 = vmatpush1.msra.mxu0 0.0
    %2986 = vmatprep.subr.mxu0 0.0
    %2987 = vmatpush1.msra.mxu0 0.0
    %2988 = vmatprep.subr.mxu0 0.0
    %2989 = vmatpush1.msra.mxu0 0.0
    %2990 = vmatprep.subr.mxu0 0.0
    %2991 = vmatpush1.msra.mxu0 0.0
    %2992 = vmatprep.subr.mxu0 0.0
    %2993 = vmatpush1.msra.mxu0 0.0
    %2994 = vmatprep.subr.mxu0 0.0
    %2995 = vmatpush1.msra.mxu0 0.0
    %2996 = vmatprep.subr.mxu0 0.0
    %2997 = vmatpush1.msra.mxu0 0.0
    %2998 = vmatprep.subr.mxu0 0.0
    %2999 = vmatpush1.msra.mxu0 0.0
    %3000 = vmatprep.subr.mxu0 0.0
    %3001 = vmatpush1.msra.mxu0 0.0
    %3002 = vmatprep.subr.mxu0 0.0
    %3003 = vmatpush1.msra.mxu0 0.0
    %3004 = vmatprep.subr.mxu0 0.0
    %3005 = vmatpush1.msra.mxu0 0.0
    %3006 = vmatprep.subr.mxu0 0.0
    %v3007 = vand.u32 %v2966, 4294901760
    %3008 = vmatpush1.msra.mxu0 %v3007
    %3009 = vmatprep.subr.mxu0 0.0
    %3010 = vmatpush2.msra.mxu0 0.0
    %3011 = vmatprep.subr.mxu0 0.0
    %3012 = vmatpush2.msra.mxu0 0.0
    %3013 = vmatprep.subr.mxu0 0.0
    %3014 = vmatpush2.msra.mxu0 0.0
    %3015 = vmatprep.subr.mxu0 0.0
    %3016 = vmatpush2.msra.mxu0 0.0
    %3017 = vmatprep.subr.mxu0 0.0
    %3018 = vmatpush2.msra.mxu0 0.0
    %3019 = vmatprep.subr.mxu0 0.0
    %3020 = vmatpush2.msra.mxu0 0.0
    %3021 = vmatprep.subr.mxu0 0.0
    %3022 = vmatpush2.msra.mxu0 0.0
    %3023 = vmatprep.subr.mxu0 0.0
    %3024 = vmatpush2.msra.mxu0 0.0
    %3025 = vmatprep.subr.mxu0 0.0
    %3026 = vmatpush2.msra.mxu0 0.0
    %3027 = vmatprep.subr.mxu0 0.0
    %3028 = vmatpush2.msra.mxu0 0.0
    %3029 = vmatprep.subr.mxu0 0.0
    %3030 = vmatpush2.msra.mxu0 0.0
    %3031 = vmatprep.subr.mxu0 0.0
    %3032 = vmatpush2.msra.mxu0 0.0
    %3033 = vmatprep.subr.mxu0 0.0
    %3034 = vmatpush2.msra.mxu0 0.0
    %3035 = vmatprep.subr.mxu0 0.0
    %3036 = vmatpush2.msra.mxu0 0.0
    %3037 = vmatprep.subr.mxu0 0.0
    %3038 = vmatpush2.msra.mxu0 0.0
    %3039 = vmatprep.subr.mxu0 0.0
    %3040 = vmatpush2.msra.mxu0 0.0
    %3041 = vmatprep.mubr.f32.mxu0 0.0
    %v3042 = vand.u32 %v2974, 4294901760
    %v3043 = vsub.f32 %v2974, %v3042
    %v3044 = vand.u32 %v3043, 4294901760
    %v3045 = vsub.f32 %v3043, %v3044
    %v3046 = vand.u32 %v3045, 4294901760
    %3047 = vmatmul.mubr.f32.gmra.mxu0 %v3046
    %v3048 = vpop.f32.mrf.mxu0
    %v3049 = vadd.f32 0.0, %v3048
    %v3050 = vpop.f32.mrf.mxu0
    %3051 = vdwg.mxu0
    %3052 = vmatprep.subr.mxu0 0.0
    %3053 = vmatpush1.msra.mxu0 0.0
    %3054 = vmatprep.subr.mxu0 0.0
    %3055 = vmatpush1.msra.mxu0 0.0
    %3056 = vmatprep.subr.mxu0 0.0
    %3057 = vmatpush1.msra.mxu0 0.0
    %3058 = vmatprep.subr.mxu0 0.0
    %3059 = vmatpush1.msra.mxu0 0.0
    %3060 = vmatprep.subr.mxu0 0.0
    %3061 = vmatpush1.msra.mxu0 0.0
    %3062 = vmatprep.subr.mxu0 0.0
    %3063 = vmatpush1.msra.mxu0 0.0
    %3064 = vmatprep.subr.mxu0 0.0
    %3065 = vmatpush1.msra.mxu0 0.0
    %3066 = vmatprep.subr.mxu0 0.0
    %3067 = vmatpush1.msra.mxu0 0.0
    %3068 = vmatprep.subr.mxu0 0.0
    %3069 = vmatpush1.msra.mxu0 0.0
    %3070 = vmatprep.subr.mxu0 0.0
    %3071 = vmatpush1.msra.mxu0 0.0
    %3072 = vmatprep.subr.mxu0 0.0
    %3073 = vmatpush1.msra.mxu0 0.0
    %3074 = vmatprep.subr.mxu0 0.0
    %3075 = vmatpush1.msra.mxu0 0.0
    %3076 = vmatprep.subr.mxu0 0.0
    %3077 = vmatpush1.msra.mxu0 0.0
    %3078 = vmatprep.subr.mxu0 0.0
    %3079 = vmatpush1.msra.mxu0 0.0
    %3080 = vmatprep.subr.mxu0 0.0
    %3081 = vmatpush1.msra.mxu0 0.0
    %3082 = vmatprep.subr.mxu0 0.0
    %v3083 = vand.u32 %v2966, 4294901760
    %v3084 = vsub.f32 %v2966, %v3083
    %v3085 = vand.u32 %v3084, 4294901760
    %v3086 = vsub.f32 %v3084, %v3085
    %v3087 = vand.u32 %v3086, 4294901760
    %3088 = vmatpush1.msra.mxu0 %v3087
    %3089 = vmatprep.subr.mxu0 0.0
    %3090 = vmatpush2.msra.mxu0 0.0
    %3091 = vmatprep.subr.mxu0 0.0
    %3092 = vmatpush2.msra.mxu0 0.0
    %3093 = vmatprep.subr.mxu0 0.0
    %3094 = vmatpush2.msra.mxu0 0.0
    %3095 = vmatprep.subr.mxu0 0.0
    %3096 = vmatpush2.msra.mxu0 0.0
    %3097 = vmatprep.subr.mxu0 0.0
    %3098 = vmatpush2.msra.mxu0 0.0
    %3099 = vmatprep.subr.mxu0 0.0
    %3100 = vmatpush2.msra.mxu0 0.0
    %3101 = vmatprep.subr.mxu0 0.0
    %3102 = vmatpush2.msra.mxu0 0.0
    %3103 = vmatprep.subr.mxu0 0.0
    %3104 = vmatpush2.msra.mxu0 0.0
    %3105 = vmatprep.subr.mxu0 0.0
    %3106 = vmatpush2.msra.mxu0 0.0
    %3107 = vmatprep.subr.mxu0 0.0
    %3108 = vmatpush2.msra.mxu0 0.0
    %3109 = vmatprep.subr.mxu0 0.0
    %3110 = vmatpush2.msra.mxu0 0.0
    %3111 = vmatprep.subr.mxu0 0.0
    %3112 = vmatpush2.msra.mxu0 0.0
    %3113 = vmatprep.subr.mxu0 0.0
    %3114 = vmatpush2.msra.mxu0 0.0
    %3115 = vmatprep.subr.mxu0 0.0
    %3116 = vmatpush2.msra.mxu0 0.0
    %3117 = vmatprep.subr.mxu0 0.0
    %3118 = vmatpush2.msra.mxu0 0.0
    %3119 = vmatprep.subr.mxu0 0.0
    %3120 = vmatpush2.msra.mxu0 0.0
    %3121 = vmatprep.mubr.f32.mxu0 0.0
    %v3122 = vand.u32 %v2974, 4294901760
    %3123 = vmatmul.mubr.f32.gmra.mxu0 %v3122
    %v3124 = vpop.f32.mrf.mxu0
    %v3125 = vadd.f32 %v3049, %v3124
    %v3126 = vpop.f32.mrf.mxu0
    %3127 = vdwg.mxu0
    %3128 = vmatprep.subr.mxu0 0.0
    %3129 = vmatpush1.msra.mxu0 0.0
    %3130 = vmatprep.subr.mxu0 0.0
    %3131 = vmatpush1.msra.mxu0 0.0
    %3132 = vmatprep.subr.mxu0 0.0
    %3133 = vmatpush1.msra.mxu0 0.0
    %3134 = vmatprep.subr.mxu0 0.0
    %3135 = vmatpush1.msra.mxu0 0.0
    %3136 = vmatprep.subr.mxu0 0.0
    %3137 = vmatpush1.msra.mxu0 0.0
    %3138 = vmatprep.subr.mxu0 0.0
    %3139 = vmatpush1.msra.mxu0 0.0
    %3140 = vmatprep.subr.mxu0 0.0
    %3141 = vmatpush1.msra.mxu0 0.0
    %3142 = vmatprep.subr.mxu0 0.0
    %3143 = vmatpush1.msra.mxu0 0.0
    %3144 = vmatprep.subr.mxu0 0.0
    %3145 = vmatpush1.msra.mxu0 0.0
    %3146 = vmatprep.subr.mxu0 0.0
    %3147 = vmatpush1.msra.mxu0 0.0
    %3148 = vmatprep.subr.mxu0 0.0
    %3149 = vmatpush1.msra.mxu0 0.0
    %3150 = vmatprep.subr.mxu0 0.0
    %3151 = vmatpush1.msra.mxu0 0.0
    %3152 = vmatprep.subr.mxu0 0.0
    %3153 = vmatpush1.msra.mxu0 0.0
    %3154 = vmatprep.subr.mxu0 0.0
    %3155 = vmatpush1.msra.mxu0 0.0
    %3156 = vmatprep.subr.mxu0 0.0
    %3157 = vmatpush1.msra.mxu0 0.0
    %3158 = vmatprep.subr.mxu0 0.0
    %v3159 = vand.u32 %v2966, 4294901760
    %v3160 = vsub.f32 %v2966, %v3159
    %3161 = vmatpush1.msra.mxu0 %v3160
    %3162 = vmatprep.subr.mxu0 0.0
    %3163 = vmatpush2.msra.mxu0 0.0
    %3164 = vmatprep.subr.mxu0 0.0
    %3165 = vmatpush2.msra.mxu0 0.0
    %3166 = vmatprep.subr.mxu0 0.0
    %3167 = vmatpush2.msra.mxu0 0.0
    %3168 = vmatprep.subr.mxu0 0.0
    %3169 = vmatpush2.msra.mxu0 0.0
    %3170 = vmatprep.subr.mxu0 0.0
    %3171 = vmatpush2.msra.mxu0 0.0
    %3172 = vmatprep.subr.mxu0 0.0
    %3173 = vmatpush2.msra.mxu0 0.0
    %3174 = vmatprep.subr.mxu0 0.0
    %3175 = vmatpush2.msra.mxu0 0.0
    %3176 = vmatprep.subr.mxu0 0.0
    %3177 = vmatpush2.msra.mxu0 0.0
    %3178 = vmatprep.subr.mxu0 0.0
    %3179 = vmatpush2.msra.mxu0 0.0
    %3180 = vmatprep.subr.mxu0 0.0
    %3181 = vmatpush2.msra.mxu0 0.0
    %3182 = vmatprep.subr.mxu0 0.0
    %3183 = vmatpush2.msra.mxu0 0.0
    %3184 = vmatprep.subr.mxu0 0.0
    %3185 = vmatpush2.msra.mxu0 0.0
    %3186 = vmatprep.subr.mxu0 0.0
    %3187 = vmatpush2.msra.mxu0 0.0
    %3188 = vmatprep.subr.mxu0 0.0
    %3189 = vmatpush2.msra.mxu0 0.0
    %3190 = vmatprep.subr.mxu0 0.0
    %3191 = vmatpush2.msra.mxu0 0.0
    %3192 = vmatprep.subr.mxu0 0.0
    %3193 = vmatpush2.msra.mxu0 0.0
    %3194 = vmatprep.mubr.f32.mxu0 0.0
    %v3195 = vand.u32 %v2974, 4294901760
    %v3196 = vsub.f32 %v2974, %v3195
    %3197 = vmatmul.mubr.f32.gmra.mxu0 %v3196
    %v3198 = vpop.f32.mrf.mxu0
    %v3199 = vadd.f32 %v3125, %v3198
    %v3200 = vpop.f32.mrf.mxu0
    %3201 = vdwg.mxu0
    %3202 = vmatprep.subr.mxu0 0.0
    %3203 = vmatpush1.msra.mxu0 0.0
    %3204 = vmatprep.subr.mxu0 0.0
    %3205 = vmatpush1.msra.mxu0 0.0
    %3206 = vmatprep.subr.mxu0 0.0
    %3207 = vmatpush1.msra.mxu0 0.0
    %3208 = vmatprep.subr.mxu0 0.0
    %3209 = vmatpush1.msra.mxu0 0.0
    %3210 = vmatprep.subr.mxu0 0.0
    %3211 = vmatpush1.msra.mxu0 0.0
    %3212 = vmatprep.subr.mxu0 0.0
    %3213 = vmatpush1.msra.mxu0 0.0
    %3214 = vmatprep.subr.mxu0 0.0
    %3215 = vmatpush1.msra.mxu0 0.0
    %3216 = vmatprep.subr.mxu0 0.0
    %3217 = vmatpush1.msra.mxu0 0.0
    %3218 = vmatprep.subr.mxu0 0.0
    %3219 = vmatpush1.msra.mxu0 0.0
    %3220 = vmatprep.subr.mxu0 0.0
    %3221 = vmatpush1.msra.mxu0 0.0
    %3222 = vmatprep.subr.mxu0 0.0
    %3223 = vmatpush1.msra.mxu0 0.0
    %3224 = vmatprep.subr.mxu0 0.0
    %3225 = vmatpush1.msra.mxu0 0.0
    %3226 = vmatprep.subr.mxu0 0.0
    %3227 = vmatpush1.msra.mxu0 0.0
    %3228 = vmatprep.subr.mxu0 0.0
    %3229 = vmatpush1.msra.mxu0 0.0
    %3230 = vmatprep.subr.mxu0 0.0
    %3231 = vmatpush1.msra.mxu0 0.0
    %3232 = vmatprep.subr.mxu0 0.0
    %v3233 = vand.u32 %v2966, 4294901760
    %3234 = vmatpush1.msra.mxu0 %v3233
    %3235 = vmatprep.subr.mxu0 0.0
    %3236 = vmatpush2.msra.mxu0 0.0
    %3237 = vmatprep.subr.mxu0 0.0
    %3238 = vmatpush2.msra.mxu0 0.0
    %3239 = vmatprep.subr.mxu0 0.0
    %3240 = vmatpush2.msra.mxu0 0.0
    %3241 = vmatprep.subr.mxu0 0.0
    %3242 = vmatpush2.msra.mxu0 0.0
    %3243 = vmatprep.subr.mxu0 0.0
    %3244 = vmatpush2.msra.mxu0 0.0
    %3245 = vmatprep.subr.mxu0 0.0
    %3246 = vmatpush2.msra.mxu0 0.0
    %3247 = vmatprep.subr.mxu0 0.0
    %3248 = vmatpush2.msra.mxu0 0.0
    %3249 = vmatprep.subr.mxu0 0.0
    %3250 = vmatpush2.msra.mxu0 0.0
    %3251 = vmatprep.subr.mxu0 0.0
    %3252 = vmatpush2.msra.mxu0 0.0
    %3253 = vmatprep.subr.mxu0 0.0
    %3254 = vmatpush2.msra.mxu0 0.0
    %3255 = vmatprep.subr.mxu0 0.0
    %3256 = vmatpush2.msra.mxu0 0.0
    %3257 = vmatprep.subr.mxu0 0.0
    %3258 = vmatpush2.msra.mxu0 0.0
    %3259 = vmatprep.subr.mxu0 0.0
    %3260 = vmatpush2.msra.mxu0 0.0
    %3261 = vmatprep.subr.mxu0 0.0
    %3262 = vmatpush2.msra.mxu0 0.0
    %3263 = vmatprep.subr.mxu0 0.0
    %3264 = vmatpush2.msra.mxu0 0.0
    %3265 = vmatprep.subr.mxu0 0.0
    %3266 = vmatpush2.msra.mxu0 0.0
    %3267 = vmatprep.mubr.f32.mxu0 0.0
    %v3268 = vand.u32 %v2974, 4294901760
    %v3269 = vsub.f32 %v2974, %v3268
    %v3270 = vand.u32 %v3269, 4294901760
    %3271 = vmatmul.mubr.f32.gmra.mxu0 %v3270
    %v3272 = vpop.f32.mrf.mxu0
    %v3273 = vadd.f32 %v3199, %v3272
    %v3274 = vpop.f32.mrf.mxu0
    %3275 = vdwg.mxu0
    %3276 = vmatprep.subr.mxu0 0.0
    %3277 = vmatpush1.msra.mxu0 0.0
    %3278 = vmatprep.subr.mxu0 0.0
    %3279 = vmatpush1.msra.mxu0 0.0
    %3280 = vmatprep.subr.mxu0 0.0
    %3281 = vmatpush1.msra.mxu0 0.0
    %3282 = vmatprep.subr.mxu0 0.0
    %3283 = vmatpush1.msra.mxu0 0.0
    %3284 = vmatprep.subr.mxu0 0.0
    %3285 = vmatpush1.msra.mxu0 0.0
    %3286 = vmatprep.subr.mxu0 0.0
    %3287 = vmatpush1.msra.mxu0 0.0
    %3288 = vmatprep.subr.mxu0 0.0
    %3289 = vmatpush1.msra.mxu0 0.0
    %3290 = vmatprep.subr.mxu0 0.0
    %3291 = vmatpush1.msra.mxu0 0.0
    %3292 = vmatprep.subr.mxu0 0.0
    %3293 = vmatpush1.msra.mxu0 0.0
    %3294 = vmatprep.subr.mxu0 0.0
    %3295 = vmatpush1.msra.mxu0 0.0
    %3296 = vmatprep.subr.mxu0 0.0
    %3297 = vmatpush1.msra.mxu0 0.0
    %3298 = vmatprep.subr.mxu0 0.0
    %3299 = vmatpush1.msra.mxu0 0.0
    %3300 = vmatprep.subr.mxu0 0.0
    %3301 = vmatpush1.msra.mxu0 0.0
    %3302 = vmatprep.subr.mxu0 0.0
    %3303 = vmatpush1.msra.mxu0 0.0
    %3304 = vmatprep.subr.mxu0 0.0
    %3305 = vmatpush1.msra.mxu0 0.0
    %3306 = vmatprep.subr.mxu0 0.0
    %v3307 = vand.u32 %v2966, 4294901760
    %v3308 = vsub.f32 %v2966, %v3307
    %v3309 = vand.u32 %v3308, 4294901760
    %3310 = vmatpush1.msra.mxu0 %v3309
    %3311 = vmatprep.subr.mxu0 0.0
    %3312 = vmatpush2.msra.mxu0 0.0
    %3313 = vmatprep.subr.mxu0 0.0
    %3314 = vmatpush2.msra.mxu0 0.0
    %3315 = vmatprep.subr.mxu0 0.0
    %3316 = vmatpush2.msra.mxu0 0.0
    %3317 = vmatprep.subr.mxu0 0.0
    %3318 = vmatpush2.msra.mxu0 0.0
    %3319 = vmatprep.subr.mxu0 0.0
    %3320 = vmatpush2.msra.mxu0 0.0
    %3321 = vmatprep.subr.mxu0 0.0
    %3322 = vmatpush2.msra.mxu0 0.0
    %3323 = vmatprep.subr.mxu0 0.0
    %3324 = vmatpush2.msra.mxu0 0.0
    %3325 = vmatprep.subr.mxu0 0.0
    %3326 = vmatpush2.msra.mxu0 0.0
    %3327 = vmatprep.subr.mxu0 0.0
    %3328 = vmatpush2.msra.mxu0 0.0
    %3329 = vmatprep.subr.mxu0 0.0
    %3330 = vmatpush2.msra.mxu0 0.0
    %3331 = vmatprep.subr.mxu0 0.0
    %3332 = vmatpush2.msra.mxu0 0.0
    %3333 = vmatprep.subr.mxu0 0.0
    %3334 = vmatpush2.msra.mxu0 0.0
    %3335 = vmatprep.subr.mxu0 0.0
    %3336 = vmatpush2.msra.mxu0 0.0
    %3337 = vmatprep.subr.mxu0 0.0
    %3338 = vmatpush2.msra.mxu0 0.0
    %3339 = vmatprep.subr.mxu0 0.0
    %3340 = vmatpush2.msra.mxu0 0.0
    %3341 = vmatprep.subr.mxu0 0.0
    %3342 = vmatpush2.msra.mxu0 0.0
    %3343 = vmatprep.mubr.f32.mxu0 0.0
    %v3344 = vand.u32 %v2974, 4294901760
    %3345 = vmatmul.mubr.f32.gmra.mxu0 %v3344
    %v3346 = vpop.f32.mrf.mxu0
    %v3347 = vadd.f32 %v3273, %v3346
    %v3348 = vpop.f32.mrf.mxu0
    %3349 = vdwg.mxu0
    %3350 = vmatprep.subr.mxu0 0.0
    %3351 = vmatpush1.msra.mxu0 0.0
    %3352 = vmatprep.subr.mxu0 0.0
    %3353 = vmatpush1.msra.mxu0 0.0
    %3354 = vmatprep.subr.mxu0 0.0
    %3355 = vmatpush1.msra.mxu0 0.0
    %3356 = vmatprep.subr.mxu0 0.0
    %3357 = vmatpush1.msra.mxu0 0.0
    %3358 = vmatprep.subr.mxu0 0.0
    %3359 = vmatpush1.msra.mxu0 0.0
    %3360 = vmatprep.subr.mxu0 0.0
    %3361 = vmatpush1.msra.mxu0 0.0
    %3362 = vmatprep.subr.mxu0 0.0
    %3363 = vmatpush1.msra.mxu0 0.0
    %3364 = vmatprep.subr.mxu0 0.0
    %3365 = vmatpush1.msra.mxu0 0.0
    %3366 = vmatprep.subr.mxu0 0.0
    %3367 = vmatpush1.msra.mxu0 0.0
    %3368 = vmatprep.subr.mxu0 0.0
    %3369 = vmatpush1.msra.mxu0 0.0
    %3370 = vmatprep.subr.mxu0 0.0
    %3371 = vmatpush1.msra.mxu0 0.0
    %3372 = vmatprep.subr.mxu0 0.0
    %3373 = vmatpush1.msra.mxu0 0.0
    %3374 = vmatprep.subr.mxu0 0.0
    %3375 = vmatpush1.msra.mxu0 0.0
    %3376 = vmatprep.subr.mxu0 0.0
    %3377 = vmatpush1.msra.mxu0 0.0
    %3378 = vmatprep.subr.mxu0 0.0
    %3379 = vmatpush1.msra.mxu0 0.0
    %3380 = vmatprep.subr.mxu0 0.0
    %v3381 = vand.u32 %v2966, 4294901760
    %3382 = vmatpush1.msra.mxu0 %v3381
    %3383 = vmatprep.subr.mxu0 0.0
    %3384 = vmatpush2.msra.mxu0 0.0
    %3385 = vmatprep.subr.mxu0 0.0
    %3386 = vmatpush2.msra.mxu0 0.0
    %3387 = vmatprep.subr.mxu0 0.0
    %3388 = vmatpush2.msra.mxu0 0.0
    %3389 = vmatprep.subr.mxu0 0.0
    %3390 = vmatpush2.msra.mxu0 0.0
    %3391 = vmatprep.subr.mxu0 0.0
    %3392 = vmatpush2.msra.mxu0 0.0
    %3393 = vmatprep.subr.mxu0 0.0
    %3394 = vmatpush2.msra.mxu0 0.0
    %3395 = vmatprep.subr.mxu0 0.0
    %3396 = vmatpush2.msra.mxu0 0.0
    %3397 = vmatprep.subr.mxu0 0.0
    %3398 = vmatpush2.msra.mxu0 0.0
    %3399 = vmatprep.subr.mxu0 0.0
    %3400 = vmatpush2.msra.mxu0 0.0
    %3401 = vmatprep.subr.mxu0 0.0
    %3402 = vmatpush2.msra.mxu0 0.0
    %3403 = vmatprep.subr.mxu0 0.0
    %3404 = vmatpush2.msra.mxu0 0.0
    %3405 = vmatprep.subr.mxu0 0.0
    %3406 = vmatpush2.msra.mxu0 0.0
    %3407 = vmatprep.subr.mxu0 0.0
    %3408 = vmatpush2.msra.mxu0 0.0
    %3409 = vmatprep.subr.mxu0 0.0
    %3410 = vmatpush2.msra.mxu0 0.0
    %3411 = vmatprep.subr.mxu0 0.0
    %3412 = vmatpush2.msra.mxu0 0.0
    %3413 = vmatprep.subr.mxu0 0.0
    %3414 = vmatpush2.msra.mxu0 0.0
    %3415 = vmatprep.mubr.f32.mxu0 0.0
    %v3416 = vand.u32 %v2974, 4294901760
    %3417 = vmatmul.mubr.f32.gmra.mxu0 %v3416
    %v3418 = vpop.f32.mrf.mxu0
    %v3419 = vadd.f32 %v3347, %v3418
    %v3420 = vpop.f32.mrf.mxu0
    %3421 = vdwg.mxu0
    %s3422 = scalar_lea.vmem %s3, 4
    %v3423 = vld [vmem:[%s3422] sm:$0xf]
    %v3425 = vsel %vm2972, %v3423, 0
    %3427 = vmatprep.subr.mxu0 0.0
    %3428 = vmatpush1.msra.mxu0 0.0
    %3429 = vmatprep.subr.mxu0 0.0
    %3430 = vmatpush1.msra.mxu0 0.0
    %3431 = vmatprep.subr.mxu0 0.0
    %3432 = vmatpush1.msra.mxu0 0.0
    %3433 = vmatprep.subr.mxu0 0.0
    %3434 = vmatpush1.msra.mxu0 0.0
    %3435 = vmatprep.subr.mxu0 0.0
    %3436 = vmatpush1.msra.mxu0 0.0
    %3437 = vmatprep.subr.mxu0 0.0
    %3438 = vmatpush1.msra.mxu0 0.0
    %3439 = vmatprep.subr.mxu0 0.0
    %3440 = vmatpush1.msra.mxu0 0.0
    %3441 = vmatprep.subr.mxu0 0.0
    %3442 = vmatpush1.msra.mxu0 0.0
    %3443 = vmatprep.subr.mxu0 0.0
    %3444 = vmatpush1.msra.mxu0 0.0
    %3445 = vmatprep.subr.mxu0 0.0
    %3446 = vmatpush1.msra.mxu0 0.0
    %3447 = vmatprep.subr.mxu0 0.0
    %3448 = vmatpush1.msra.mxu0 0.0
    %3449 = vmatprep.subr.mxu0 0.0
    %3450 = vmatpush1.msra.mxu0 0.0
    %3451 = vmatprep.subr.mxu0 0.0
    %3452 = vmatpush1.msra.mxu0 0.0
    %3453 = vmatprep.subr.mxu0 0.0
    %3454 = vmatpush1.msra.mxu0 0.0
    %3455 = vmatprep.subr.mxu0 0.0
    %3456 = vmatpush1.msra.mxu0 0.0
    %3457 = vmatprep.subr.mxu0 0.0
    %v3458 = vand.u32 %v2966, 4294901760
    %3459 = vmatpush1.msra.mxu0 %v3458
    %3460 = vmatprep.subr.mxu0 0.0
    %3461 = vmatpush2.msra.mxu0 0.0
    %3462 = vmatprep.subr.mxu0 0.0
    %3463 = vmatpush2.msra.mxu0 0.0
    %3464 = vmatprep.subr.mxu0 0.0
    %3465 = vmatpush2.msra.mxu0 0.0
    %3466 = vmatprep.subr.mxu0 0.0
    %3467 = vmatpush2.msra.mxu0 0.0
    %3468 = vmatprep.subr.mxu0 0.0
    %3469 = vmatpush2.msra.mxu0 0.0
    %3470 = vmatprep.subr.mxu0 0.0
    %3471 = vmatpush2.msra.mxu0 0.0
    %3472 = vmatprep.subr.mxu0 0.0
    %3473 = vmatpush2.msra.mxu0 0.0
    %3474 = vmatprep.subr.mxu0 0.0
    %3475 = vmatpush2.msra.mxu0 0.0
    %3476 = vmatprep.subr.mxu0 0.0
    %3477 = vmatpush2.msra.mxu0 0.0
    %3478 = vmatprep.subr.mxu0 0.0
    %3479 = vmatpush2.msra.mxu0 0.0
    %3480 = vmatprep.subr.mxu0 0.0
    %3481 = vmatpush2.msra.mxu0 0.0
    %3482 = vmatprep.subr.mxu0 0.0
    %3483 = vmatpush2.msra.mxu0 0.0
    %3484 = vmatprep.subr.mxu0 0.0
    %3485 = vmatpush2.msra.mxu0 0.0
    %3486 = vmatprep.subr.mxu0 0.0
    %3487 = vmatpush2.msra.mxu0 0.0
    %3488 = vmatprep.subr.mxu0 0.0
    %3489 = vmatpush2.msra.mxu0 0.0
    %3490 = vmatprep.subr.mxu0 0.0
    %3491 = vmatpush2.msra.mxu0 0.0
    %3492 = vmatprep.mubr.f32.mxu0 0.0
    %v3493 = vand.u32 %v3425, 4294901760
    %v3494 = vsub.f32 %v3425, %v3493
    %v3495 = vand.u32 %v3494, 4294901760
    %v3496 = vsub.f32 %v3494, %v3495
    %v3497 = vand.u32 %v3496, 4294901760
    %3498 = vmatmul.mubr.f32.gmra.mxu0 %v3497
    %v3499 = vpop.f32.mrf.mxu0
    %v3500 = vadd.f32 0.0, %v3499
    %v3501 = vpop.f32.mrf.mxu0
    %3502 = vdwg.mxu0
    %3503 = vmatprep.subr.mxu0 0.0
    %3504 = vmatpush1.msra.mxu0 0.0
    %3505 = vmatprep.subr.mxu0 0.0
    %3506 = vmatpush1.msra.mxu0 0.0
    %3507 = vmatprep.subr.mxu0 0.0
    %3508 = vmatpush1.msra.mxu0 0.0
    %3509 = vmatprep.subr.mxu0 0.0
    %3510 = vmatpush1.msra.mxu0 0.0
    %3511 = vmatprep.subr.mxu0 0.0
    %3512 = vmatpush1.msra.mxu0 0.0
    %3513 = vmatprep.subr.mxu0 0.0
    %3514 = vmatpush1.msra.mxu0 0.0
    %3515 = vmatprep.subr.mxu0 0.0
    %3516 = vmatpush1.msra.mxu0 0.0
    %3517 = vmatprep.subr.mxu0 0.0
    %3518 = vmatpush1.msra.mxu0 0.0
    %3519 = vmatprep.subr.mxu0 0.0
    %3520 = vmatpush1.msra.mxu0 0.0
    %3521 = vmatprep.subr.mxu0 0.0
    %3522 = vmatpush1.msra.mxu0 0.0
    %3523 = vmatprep.subr.mxu0 0.0
    %3524 = vmatpush1.msra.mxu0 0.0
    %3525 = vmatprep.subr.mxu0 0.0
    %3526 = vmatpush1.msra.mxu0 0.0
    %3527 = vmatprep.subr.mxu0 0.0
    %3528 = vmatpush1.msra.mxu0 0.0
    %3529 = vmatprep.subr.mxu0 0.0
    %3530 = vmatpush1.msra.mxu0 0.0
    %3531 = vmatprep.subr.mxu0 0.0
    %3532 = vmatpush1.msra.mxu0 0.0
    %3533 = vmatprep.subr.mxu0 0.0
    %v3534 = vand.u32 %v2966, 4294901760
    %v3535 = vsub.f32 %v2966, %v3534
    %v3536 = vand.u32 %v3535, 4294901760
    %v3537 = vsub.f32 %v3535, %v3536
    %v3538 = vand.u32 %v3537, 4294901760
    %3539 = vmatpush1.msra.mxu0 %v3538
    %3540 = vmatprep.subr.mxu0 0.0
    %3541 = vmatpush2.msra.mxu0 0.0
    %3542 = vmatprep.subr.mxu0 0.0
    %3543 = vmatpush2.msra.mxu0 0.0
    %3544 = vmatprep.subr.mxu0 0.0
    %3545 = vmatpush2.msra.mxu0 0.0
    %3546 = vmatprep.subr.mxu0 0.0
    %3547 = vmatpush2.msra.mxu0 0.0
    %3548 = vmatprep.subr.mxu0 0.0
    %3549 = vmatpush2.msra.mxu0 0.0
    %3550 = vmatprep.subr.mxu0 0.0
    %3551 = vmatpush2.msra.mxu0 0.0
    %3552 = vmatprep.subr.mxu0 0.0
    %3553 = vmatpush2.msra.mxu0 0.0
    %3554 = vmatprep.subr.mxu0 0.0
    %3555 = vmatpush2.msra.mxu0 0.0
    %3556 = vmatprep.subr.mxu0 0.0
    %3557 = vmatpush2.msra.mxu0 0.0
    %3558 = vmatprep.subr.mxu0 0.0
    %3559 = vmatpush2.msra.mxu0 0.0
    %3560 = vmatprep.subr.mxu0 0.0
    %3561 = vmatpush2.msra.mxu0 0.0
    %3562 = vmatprep.subr.mxu0 0.0
    %3563 = vmatpush2.msra.mxu0 0.0
    %3564 = vmatprep.subr.mxu0 0.0
    %3565 = vmatpush2.msra.mxu0 0.0
    %3566 = vmatprep.subr.mxu0 0.0
    %3567 = vmatpush2.msra.mxu0 0.0
    %3568 = vmatprep.subr.mxu0 0.0
    %3569 = vmatpush2.msra.mxu0 0.0
    %3570 = vmatprep.subr.mxu0 0.0
    %3571 = vmatpush2.msra.mxu0 0.0
    %3572 = vmatprep.mubr.f32.mxu0 0.0
    %v3573 = vand.u32 %v3425, 4294901760
    %3574 = vmatmul.mubr.f32.gmra.mxu0 %v3573
    %v3575 = vpop.f32.mrf.mxu0
    %v3576 = vadd.f32 %v3500, %v3575
    %v3577 = vpop.f32.mrf.mxu0
    %3578 = vdwg.mxu0
    %3579 = vmatprep.subr.mxu0 0.0
    %3580 = vmatpush1.msra.mxu0 0.0
    %3581 = vmatprep.subr.mxu0 0.0
    %3582 = vmatpush1.msra.mxu0 0.0
    %3583 = vmatprep.subr.mxu0 0.0
    %3584 = vmatpush1.msra.mxu0 0.0
    %3585 = vmatprep.subr.mxu0 0.0
    %3586 = vmatpush1.msra.mxu0 0.0
    %3587 = vmatprep.subr.mxu0 0.0
    %3588 = vmatpush1.msra.mxu0 0.0
    %3589 = vmatprep.subr.mxu0 0.0
    %3590 = vmatpush1.msra.mxu0 0.0
    %3591 = vmatprep.subr.mxu0 0.0
    %3592 = vmatpush1.msra.mxu0 0.0
    %3593 = vmatprep.subr.mxu0 0.0
    %3594 = vmatpush1.msra.mxu0 0.0
    %3595 = vmatprep.subr.mxu0 0.0
    %3596 = vmatpush1.msra.mxu0 0.0
    %3597 = vmatprep.subr.mxu0 0.0
    %3598 = vmatpush1.msra.mxu0 0.0
    %3599 = vmatprep.subr.mxu0 0.0
    %3600 = vmatpush1.msra.mxu0 0.0
    %3601 = vmatprep.subr.mxu0 0.0
    %3602 = vmatpush1.msra.mxu0 0.0
    %3603 = vmatprep.subr.mxu0 0.0
    %3604 = vmatpush1.msra.mxu0 0.0
    %3605 = vmatprep.subr.mxu0 0.0
    %3606 = vmatpush1.msra.mxu0 0.0
    %3607 = vmatprep.subr.mxu0 0.0
    %3608 = vmatpush1.msra.mxu0 0.0
    %3609 = vmatprep.subr.mxu0 0.0
    %v3610 = vand.u32 %v2966, 4294901760
    %v3611 = vsub.f32 %v2966, %v3610
    %3612 = vmatpush1.msra.mxu0 %v3611
    %3613 = vmatprep.subr.mxu0 0.0
    %3614 = vmatpush2.msra.mxu0 0.0
    %3615 = vmatprep.subr.mxu0 0.0
    %3616 = vmatpush2.msra.mxu0 0.0
    %3617 = vmatprep.subr.mxu0 0.0
    %3618 = vmatpush2.msra.mxu0 0.0
    %3619 = vmatprep.subr.mxu0 0.0
    %3620 = vmatpush2.msra.mxu0 0.0
    %3621 = vmatprep.subr.mxu0 0.0
    %3622 = vmatpush2.msra.mxu0 0.0
    %3623 = vmatprep.subr.mxu0 0.0
    %3624 = vmatpush2.msra.mxu0 0.0
    %3625 = vmatprep.subr.mxu0 0.0
    %3626 = vmatpush2.msra.mxu0 0.0
    %3627 = vmatprep.subr.mxu0 0.0
    %3628 = vmatpush2.msra.mxu0 0.0
    %3629 = vmatprep.subr.mxu0 0.0
    %3630 = vmatpush2.msra.mxu0 0.0
    %3631 = vmatprep.subr.mxu0 0.0
    %3632 = vmatpush2.msra.mxu0 0.0
    %3633 = vmatprep.subr.mxu0 0.0
    %3634 = vmatpush2.msra.mxu0 0.0
    %3635 = vmatprep.subr.mxu0 0.0
    %3636 = vmatpush2.msra.mxu0 0.0
    %3637 = vmatprep.subr.mxu0 0.0
    %3638 = vmatpush2.msra.mxu0 0.0
    %3639 = vmatprep.subr.mxu0 0.0
    %3640 = vmatpush2.msra.mxu0 0.0
    %3641 = vmatprep.subr.mxu0 0.0
    %3642 = vmatpush2.msra.mxu0 0.0
    %3643 = vmatprep.subr.mxu0 0.0
    %3644 = vmatpush2.msra.mxu0 0.0
    %3645 = vmatprep.mubr.f32.mxu0 0.0
    %v3646 = vand.u32 %v3425, 4294901760
    %v3647 = vsub.f32 %v3425, %v3646
    %3648 = vmatmul.mubr.f32.gmra.mxu0 %v3647
    %v3649 = vpop.f32.mrf.mxu0
    %v3650 = vadd.f32 %v3576, %v3649
    %v3651 = vpop.f32.mrf.mxu0
    %3652 = vdwg.mxu0
    %3653 = vmatprep.subr.mxu0 0.0
    %3654 = vmatpush1.msra.mxu0 0.0
    %3655 = vmatprep.subr.mxu0 0.0
    %3656 = vmatpush1.msra.mxu0 0.0
    %3657 = vmatprep.subr.mxu0 0.0
    %3658 = vmatpush1.msra.mxu0 0.0
    %3659 = vmatprep.subr.mxu0 0.0
    %3660 = vmatpush1.msra.mxu0 0.0
    %3661 = vmatprep.subr.mxu0 0.0
    %3662 = vmatpush1.msra.mxu0 0.0
    %3663 = vmatprep.subr.mxu0 0.0
    %3664 = vmatpush1.msra.mxu0 0.0
    %3665 = vmatprep.subr.mxu0 0.0
    %3666 = vmatpush1.msra.mxu0 0.0
    %3667 = vmatprep.subr.mxu0 0.0
    %3668 = vmatpush1.msra.mxu0 0.0
    %3669 = vmatprep.subr.mxu0 0.0
    %3670 = vmatpush1.msra.mxu0 0.0
    %3671 = vmatprep.subr.mxu0 0.0
    %3672 = vmatpush1.msra.mxu0 0.0
    %3673 = vmatprep.subr.mxu0 0.0
    %3674 = vmatpush1.msra.mxu0 0.0
    %3675 = vmatprep.subr.mxu0 0.0
    %3676 = vmatpush1.msra.mxu0 0.0
    %3677 = vmatprep.subr.mxu0 0.0
    %3678 = vmatpush1.msra.mxu0 0.0
    %3679 = vmatprep.subr.mxu0 0.0
    %3680 = vmatpush1.msra.mxu0 0.0
    %3681 = vmatprep.subr.mxu0 0.0
    %3682 = vmatpush1.msra.mxu0 0.0
    %3683 = vmatprep.subr.mxu0 0.0
    %v3684 = vand.u32 %v2966, 4294901760
    %3685 = vmatpush1.msra.mxu0 %v3684
    %3686 = vmatprep.subr.mxu0 0.0
    %3687 = vmatpush2.msra.mxu0 0.0
    %3688 = vmatprep.subr.mxu0 0.0
    %3689 = vmatpush2.msra.mxu0 0.0
    %3690 = vmatprep.subr.mxu0 0.0
    %3691 = vmatpush2.msra.mxu0 0.0
    %3692 = vmatprep.subr.mxu0 0.0
    %3693 = vmatpush2.msra.mxu0 0.0
    %3694 = vmatprep.subr.mxu0 0.0
    %3695 = vmatpush2.msra.mxu0 0.0
    %3696 = vmatprep.subr.mxu0 0.0
    %3697 = vmatpush2.msra.mxu0 0.0
    %3698 = vmatprep.subr.mxu0 0.0
    %3699 = vmatpush2.msra.mxu0 0.0
    %3700 = vmatprep.subr.mxu0 0.0
    %3701 = vmatpush2.msra.mxu0 0.0
    %3702 = vmatprep.subr.mxu0 0.0
    %3703 = vmatpush2.msra.mxu0 0.0
    %3704 = vmatprep.subr.mxu0 0.0
    %3705 = vmatpush2.msra.mxu0 0.0
    %3706 = vmatprep.subr.mxu0 0.0
    %3707 = vmatpush2.msra.mxu0 0.0
    %3708 = vmatprep.subr.mxu0 0.0
    %3709 = vmatpush2.msra.mxu0 0.0
    %3710 = vmatprep.subr.mxu0 0.0
    %3711 = vmatpush2.msra.mxu0 0.0
    %3712 = vmatprep.subr.mxu0 0.0
    %3713 = vmatpush2.msra.mxu0 0.0
    %3714 = vmatprep.subr.mxu0 0.0
    %3715 = vmatpush2.msra.mxu0 0.0
    %3716 = vmatprep.subr.mxu0 0.0
    %3717 = vmatpush2.msra.mxu0 0.0
    %3718 = vmatprep.mubr.f32.mxu0 0.0
    %v3719 = vand.u32 %v3425, 4294901760
    %v3720 = vsub.f32 %v3425, %v3719
    %v3721 = vand.u32 %v3720, 4294901760
    %3722 = vmatmul.mubr.f32.gmra.mxu0 %v3721
    %v3723 = vpop.f32.mrf.mxu0
    %v3724 = vadd.f32 %v3650, %v3723
    %v3725 = vpop.f32.mrf.mxu0
    %3726 = vdwg.mxu0
    %3727 = vmatprep.subr.mxu0 0.0
    %3728 = vmatpush1.msra.mxu0 0.0
    %3729 = vmatprep.subr.mxu0 0.0
    %3730 = vmatpush1.msra.mxu0 0.0
    %3731 = vmatprep.subr.mxu0 0.0
    %3732 = vmatpush1.msra.mxu0 0.0
    %3733 = vmatprep.subr.mxu0 0.0
    %3734 = vmatpush1.msra.mxu0 0.0
    %3735 = vmatprep.subr.mxu0 0.0
    %3736 = vmatpush1.msra.mxu0 0.0
    %3737 = vmatprep.subr.mxu0 0.0
    %3738 = vmatpush1.msra.mxu0 0.0
    %3739 = vmatprep.subr.mxu0 0.0
    %3740 = vmatpush1.msra.mxu0 0.0
    %3741 = vmatprep.subr.mxu0 0.0
    %3742 = vmatpush1.msra.mxu0 0.0
    %3743 = vmatprep.subr.mxu0 0.0
    %3744 = vmatpush1.msra.mxu0 0.0
    %3745 = vmatprep.subr.mxu0 0.0
    %3746 = vmatpush1.msra.mxu0 0.0
    %3747 = vmatprep.subr.mxu0 0.0
    %3748 = vmatpush1.msra.mxu0 0.0
    %3749 = vmatprep.subr.mxu0 0.0
    %3750 = vmatpush1.msra.mxu0 0.0
    %3751 = vmatprep.subr.mxu0 0.0
    %3752 = vmatpush1.msra.mxu0 0.0
    %3753 = vmatprep.subr.mxu0 0.0
    %3754 = vmatpush1.msra.mxu0 0.0
    %3755 = vmatprep.subr.mxu0 0.0
    %3756 = vmatpush1.msra.mxu0 0.0
    %3757 = vmatprep.subr.mxu0 0.0
    %v3758 = vand.u32 %v2966, 4294901760
    %v3759 = vsub.f32 %v2966, %v3758
    %v3760 = vand.u32 %v3759, 4294901760
    %3761 = vmatpush1.msra.mxu0 %v3760
    %3762 = vmatprep.subr.mxu0 0.0
    %3763 = vmatpush2.msra.mxu0 0.0
    %3764 = vmatprep.subr.mxu0 0.0
    %3765 = vmatpush2.msra.mxu0 0.0
    %3766 = vmatprep.subr.mxu0 0.0
    %3767 = vmatpush2.msra.mxu0 0.0
    %3768 = vmatprep.subr.mxu0 0.0
    %3769 = vmatpush2.msra.mxu0 0.0
    %3770 = vmatprep.subr.mxu0 0.0
    %3771 = vmatpush2.msra.mxu0 0.0
    %3772 = vmatprep.subr.mxu0 0.0
    %3773 = vmatpush2.msra.mxu0 0.0
    %3774 = vmatprep.subr.mxu0 0.0
    %3775 = vmatpush2.msra.mxu0 0.0
    %3776 = vmatprep.subr.mxu0 0.0
    %3777 = vmatpush2.msra.mxu0 0.0
    %3778 = vmatprep.subr.mxu0 0.0
    %3779 = vmatpush2.msra.mxu0 0.0
    %3780 = vmatprep.subr.mxu0 0.0
    %3781 = vmatpush2.msra.mxu0 0.0
    %3782 = vmatprep.subr.mxu0 0.0
    %3783 = vmatpush2.msra.mxu0 0.0
    %3784 = vmatprep.subr.mxu0 0.0
    %3785 = vmatpush2.msra.mxu0 0.0
    %3786 = vmatprep.subr.mxu0 0.0
    %3787 = vmatpush2.msra.mxu0 0.0
    %3788 = vmatprep.subr.mxu0 0.0
    %3789 = vmatpush2.msra.mxu0 0.0
    %3790 = vmatprep.subr.mxu0 0.0
    %3791 = vmatpush2.msra.mxu0 0.0
    %3792 = vmatprep.subr.mxu0 0.0
    %3793 = vmatpush2.msra.mxu0 0.0
    %3794 = vmatprep.mubr.f32.mxu0 0.0
    %v3795 = vand.u32 %v3425, 4294901760
    %3796 = vmatmul.mubr.f32.gmra.mxu0 %v3795
    %v3797 = vpop.f32.mrf.mxu0
    %v3798 = vadd.f32 %v3724, %v3797
    %v3799 = vpop.f32.mrf.mxu0
    %3800 = vdwg.mxu0
    %3801 = vmatprep.subr.mxu0 0.0
    %3802 = vmatpush1.msra.mxu0 0.0
    %3803 = vmatprep.subr.mxu0 0.0
    %3804 = vmatpush1.msra.mxu0 0.0
    %3805 = vmatprep.subr.mxu0 0.0
    %3806 = vmatpush1.msra.mxu0 0.0
    %3807 = vmatprep.subr.mxu0 0.0
    %3808 = vmatpush1.msra.mxu0 0.0
    %3809 = vmatprep.subr.mxu0 0.0
    %3810 = vmatpush1.msra.mxu0 0.0
    %3811 = vmatprep.subr.mxu0 0.0
    %3812 = vmatpush1.msra.mxu0 0.0
    %3813 = vmatprep.subr.mxu0 0.0
    %3814 = vmatpush1.msra.mxu0 0.0
    %3815 = vmatprep.subr.mxu0 0.0
    %3816 = vmatpush1.msra.mxu0 0.0
    %3817 = vmatprep.subr.mxu0 0.0
    %3818 = vmatpush1.msra.mxu0 0.0
    %3819 = vmatprep.subr.mxu0 0.0
    %3820 = vmatpush1.msra.mxu0 0.0
    %3821 = vmatprep.subr.mxu0 0.0
    %3822 = vmatpush1.msra.mxu0 0.0
    %3823 = vmatprep.subr.mxu0 0.0
    %3824 = vmatpush1.msra.mxu0 0.0
    %3825 = vmatprep.subr.mxu0 0.0
    %3826 = vmatpush1.msra.mxu0 0.0
    %3827 = vmatprep.subr.mxu0 0.0
    %3828 = vmatpush1.msra.mxu0 0.0
    %3829 = vmatprep.subr.mxu0 0.0
    %3830 = vmatpush1.msra.mxu0 0.0
    %3831 = vmatprep.subr.mxu0 0.0
    %v3832 = vand.u32 %v2966, 4294901760
    %3833 = vmatpush1.msra.mxu0 %v3832
    %3834 = vmatprep.subr.mxu0 0.0
    %3835 = vmatpush2.msra.mxu0 0.0
    %3836 = vmatprep.subr.mxu0 0.0
    %3837 = vmatpush2.msra.mxu0 0.0
    %3838 = vmatprep.subr.mxu0 0.0
    %3839 = vmatpush2.msra.mxu0 0.0
    %3840 = vmatprep.subr.mxu0 0.0
    %3841 = vmatpush2.msra.mxu0 0.0
    %3842 = vmatprep.subr.mxu0 0.0
    %3843 = vmatpush2.msra.mxu0 0.0
    %3844 = vmatprep.subr.mxu0 0.0
    %3845 = vmatpush2.msra.mxu0 0.0
    %3846 = vmatprep.subr.mxu0 0.0
    %3847 = vmatpush2.msra.mxu0 0.0
    %3848 = vmatprep.subr.mxu0 0.0
    %3849 = vmatpush2.msra.mxu0 0.0
    %3850 = vmatprep.subr.mxu0 0.0
    %3851 = vmatpush2.msra.mxu0 0.0
    %3852 = vmatprep.subr.mxu0 0.0
    %3853 = vmatpush2.msra.mxu0 0.0
    %3854 = vmatprep.subr.mxu0 0.0
    %3855 = vmatpush2.msra.mxu0 0.0
    %3856 = vmatprep.subr.mxu0 0.0
    %3857 = vmatpush2.msra.mxu0 0.0
    %3858 = vmatprep.subr.mxu0 0.0
    %3859 = vmatpush2.msra.mxu0 0.0
    %3860 = vmatprep.subr.mxu0 0.0
    %3861 = vmatpush2.msra.mxu0 0.0
    %3862 = vmatprep.subr.mxu0 0.0
    %3863 = vmatpush2.msra.mxu0 0.0
    %3864 = vmatprep.subr.mxu0 0.0
    %3865 = vmatpush2.msra.mxu0 0.0
    %3866 = vmatprep.mubr.f32.mxu0 0.0
    %v3867 = vand.u32 %v3425, 4294901760
    %3868 = vmatmul.mubr.f32.gmra.mxu0 %v3867
    %v3869 = vpop.f32.mrf.mxu0
    %v3870 = vadd.f32 %v3798, %v3869
    %v3871 = vpop.f32.mrf.mxu0
    %3872 = vdwg.mxu0
    %s3873 = scalar_lea.vmem %s3, 8
    %v3874 = vld [vmem:[%s3873] sm:$0xf]
    %v3876 = vsel %vm2972, %v3874, 0
    %3878 = vmatprep.subr.mxu0 0.0
    %3879 = vmatpush1.msra.mxu0 0.0
    %3880 = vmatprep.subr.mxu0 0.0
    %3881 = vmatpush1.msra.mxu0 0.0
    %3882 = vmatprep.subr.mxu0 0.0
    %3883 = vmatpush1.msra.mxu0 0.0
    %3884 = vmatprep.subr.mxu0 0.0
    %3885 = vmatpush1.msra.mxu0 0.0
    %3886 = vmatprep.subr.mxu0 0.0
    %3887 = vmatpush1.msra.mxu0 0.0
    %3888 = vmatprep.subr.mxu0 0.0
    %3889 = vmatpush1.msra.mxu0 0.0
    %3890 = vmatprep.subr.mxu0 0.0
    %3891 = vmatpush1.msra.mxu0 0.0
    %3892 = vmatprep.subr.mxu0 0.0
    %3893 = vmatpush1.msra.mxu0 0.0
    %3894 = vmatprep.subr.mxu0 0.0
    %3895 = vmatpush1.msra.mxu0 0.0
    %3896 = vmatprep.subr.mxu0 0.0
    %3897 = vmatpush1.msra.mxu0 0.0
    %3898 = vmatprep.subr.mxu0 0.0
    %3899 = vmatpush1.msra.mxu0 0.0
    %3900 = vmatprep.subr.mxu0 0.0
    %3901 = vmatpush1.msra.mxu0 0.0
    %3902 = vmatprep.subr.mxu0 0.0
    %3903 = vmatpush1.msra.mxu0 0.0
    %3904 = vmatprep.subr.mxu0 0.0
    %3905 = vmatpush1.msra.mxu0 0.0
    %3906 = vmatprep.subr.mxu0 0.0
    %3907 = vmatpush1.msra.mxu0 0.0
    %3908 = vmatprep.subr.mxu0 0.0
    %v3909 = vand.u32 %v2966, 4294901760
    %3910 = vmatpush1.msra.mxu0 %v3909
    %3911 = vmatprep.subr.mxu0 0.0
    %3912 = vmatpush2.msra.mxu0 0.0
    %3913 = vmatprep.subr.mxu0 0.0
    %3914 = vmatpush2.msra.mxu0 0.0
    %3915 = vmatprep.subr.mxu0 0.0
    %3916 = vmatpush2.msra.mxu0 0.0
    %3917 = vmatprep.subr.mxu0 0.0
    %3918 = vmatpush2.msra.mxu0 0.0
    %3919 = vmatprep.subr.mxu0 0.0
    %3920 = vmatpush2.msra.mxu0 0.0
    %3921 = vmatprep.subr.mxu0 0.0
    %3922 = vmatpush2.msra.mxu0 0.0
    %3923 = vmatprep.subr.mxu0 0.0
    %3924 = vmatpush2.msra.mxu0 0.0
    %3925 = vmatprep.subr.mxu0 0.0
    %3926 = vmatpush2.msra.mxu0 0.0
    %3927 = vmatprep.subr.mxu0 0.0
    %3928 = vmatpush2.msra.mxu0 0.0
    %3929 = vmatprep.subr.mxu0 0.0
    %3930 = vmatpush2.msra.mxu0 0.0
    %3931 = vmatprep.subr.mxu0 0.0
    %3932 = vmatpush2.msra.mxu0 0.0
    %3933 = vmatprep.subr.mxu0 0.0
    %3934 = vmatpush2.msra.mxu0 0.0
    %3935 = vmatprep.subr.mxu0 0.0
    %3936 = vmatpush2.msra.mxu0 0.0
    %3937 = vmatprep.subr.mxu0 0.0
    %3938 = vmatpush2.msra.mxu0 0.0
    %3939 = vmatprep.subr.mxu0 0.0
    %3940 = vmatpush2.msra.mxu0 0.0
    %3941 = vmatprep.subr.mxu0 0.0
    %3942 = vmatpush2.msra.mxu0 0.0
    %3943 = vmatprep.mubr.f32.mxu0 0.0
    %v3944 = vand.u32 %v3876, 4294901760
    %v3945 = vsub.f32 %v3876, %v3944
    %v3946 = vand.u32 %v3945, 4294901760
    %v3947 = vsub.f32 %v3945, %v3946
    %v3948 = vand.u32 %v3947, 4294901760
    %3949 = vmatmul.mubr.f32.gmra.mxu0 %v3948
    %v3950 = vpop.f32.mrf.mxu0
    %v3951 = vadd.f32 0.0, %v3950
    %v3952 = vpop.f32.mrf.mxu0
    %3953 = vdwg.mxu0
    %3954 = vmatprep.subr.mxu0 0.0
    %3955 = vmatpush1.msra.mxu0 0.0
    %3956 = vmatprep.subr.mxu0 0.0
    %3957 = vmatpush1.msra.mxu0 0.0
    %3958 = vmatprep.subr.mxu0 0.0
    %3959 = vmatpush1.msra.mxu0 0.0
    %3960 = vmatprep.subr.mxu0 0.0
    %3961 = vmatpush1.msra.mxu0 0.0
    %3962 = vmatprep.subr.mxu0 0.0
    %3963 = vmatpush1.msra.mxu0 0.0
    %3964 = vmatprep.subr.mxu0 0.0
    %3965 = vmatpush1.msra.mxu0 0.0
    %3966 = vmatprep.subr.mxu0 0.0
    %3967 = vmatpush1.msra.mxu0 0.0
    %3968 = vmatprep.subr.mxu0 0.0
    %3969 = vmatpush1.msra.mxu0 0.0
    %3970 = vmatprep.subr.mxu0 0.0
    %3971 = vmatpush1.msra.mxu0 0.0
    %3972 = vmatprep.subr.mxu0 0.0
    %3973 = vmatpush1.msra.mxu0 0.0
    %3974 = vmatprep.subr.mxu0 0.0
    %3975 = vmatpush1.msra.mxu0 0.0
    %3976 = vmatprep.subr.mxu0 0.0
    %3977 = vmatpush1.msra.mxu0 0.0
    %3978 = vmatprep.subr.mxu0 0.0
    %3979 = vmatpush1.msra.mxu0 0.0
    %3980 = vmatprep.subr.mxu0 0.0
    %3981 = vmatpush1.msra.mxu0 0.0
    %3982 = vmatprep.subr.mxu0 0.0
    %3983 = vmatpush1.msra.mxu0 0.0
    %3984 = vmatprep.subr.mxu0 0.0
    %v3985 = vand.u32 %v2966, 4294901760
    %v3986 = vsub.f32 %v2966, %v3985
    %v3987 = vand.u32 %v3986, 4294901760
    %v3988 = vsub.f32 %v3986, %v3987
    %v3989 = vand.u32 %v3988, 4294901760
    %3990 = vmatpush1.msra.mxu0 %v3989
    %3991 = vmatprep.subr.mxu0 0.0
    %3992 = vmatpush2.msra.mxu0 0.0
    %3993 = vmatprep.subr.mxu0 0.0
    %3994 = vmatpush2.msra.mxu0 0.0
    %3995 = vmatprep.subr.mxu0 0.0
    %3996 = vmatpush2.msra.mxu0 0.0
    %3997 = vmatprep.subr.mxu0 0.0
    %3998 = vmatpush2.msra.mxu0 0.0
    %3999 = vmatprep.subr.mxu0 0.0
    %4000 = vmatpush2.msra.mxu0 0.0
    %4001 = vmatprep.subr.mxu0 0.0
    %4002 = vmatpush2.msra.mxu0 0.0
    %4003 = vmatprep.subr.mxu0 0.0
    %4004 = vmatpush2.msra.mxu0 0.0
    %4005 = vmatprep.subr.mxu0 0.0
    %4006 = vmatpush2.msra.mxu0 0.0
    %4007 = vmatprep.subr.mxu0 0.0
    %4008 = vmatpush2.msra.mxu0 0.0
    %4009 = vmatprep.subr.mxu0 0.0
    %4010 = vmatpush2.msra.mxu0 0.0
    %4011 = vmatprep.subr.mxu0 0.0
    %4012 = vmatpush2.msra.mxu0 0.0
    %4013 = vmatprep.subr.mxu0 0.0
    %4014 = vmatpush2.msra.mxu0 0.0
    %4015 = vmatprep.subr.mxu0 0.0
    %4016 = vmatpush2.msra.mxu0 0.0
    %4017 = vmatprep.subr.mxu0 0.0
    %4018 = vmatpush2.msra.mxu0 0.0
    %4019 = vmatprep.subr.mxu0 0.0
    %4020 = vmatpush2.msra.mxu0 0.0
    %4021 = vmatprep.subr.mxu0 0.0
    %4022 = vmatpush2.msra.mxu0 0.0
    %4023 = vmatprep.mubr.f32.mxu0 0.0
    %v4024 = vand.u32 %v3876, 4294901760
    %4025 = vmatmul.mubr.f32.gmra.mxu0 %v4024
    %v4026 = vpop.f32.mrf.mxu0
    %v4027 = vadd.f32 %v3951, %v4026
    %v4028 = vpop.f32.mrf.mxu0
    %4029 = vdwg.mxu0
    %4030 = vmatprep.subr.mxu0 0.0
    %4031 = vmatpush1.msra.mxu0 0.0
    %4032 = vmatprep.subr.mxu0 0.0
    %4033 = vmatpush1.msra.mxu0 0.0
    %4034 = vmatprep.subr.mxu0 0.0
    %4035 = vmatpush1.msra.mxu0 0.0
    %4036 = vmatprep.subr.mxu0 0.0
    %4037 = vmatpush1.msra.mxu0 0.0
    %4038 = vmatprep.subr.mxu0 0.0
    %4039 = vmatpush1.msra.mxu0 0.0
    %4040 = vmatprep.subr.mxu0 0.0
    %4041 = vmatpush1.msra.mxu0 0.0
    %4042 = vmatprep.subr.mxu0 0.0
    %4043 = vmatpush1.msra.mxu0 0.0
    %4044 = vmatprep.subr.mxu0 0.0
    %4045 = vmatpush1.msra.mxu0 0.0
    %4046 = vmatprep.subr.mxu0 0.0
    %4047 = vmatpush1.msra.mxu0 0.0
    %4048 = vmatprep.subr.mxu0 0.0
    %4049 = vmatpush1.msra.mxu0 0.0
    %4050 = vmatprep.subr.mxu0 0.0
    %4051 = vmatpush1.msra.mxu0 0.0
    %4052 = vmatprep.subr.mxu0 0.0
    %4053 = vmatpush1.msra.mxu0 0.0
    %4054 = vmatprep.subr.mxu0 0.0
    %4055 = vmatpush1.msra.mxu0 0.0
    %4056 = vmatprep.subr.mxu0 0.0
    %4057 = vmatpush1.msra.mxu0 0.0
    %4058 = vmatprep.subr.mxu0 0.0
    %4059 = vmatpush1.msra.mxu0 0.0
    %4060 = vmatprep.subr.mxu0 0.0
    %v4061 = vand.u32 %v2966, 4294901760
    %v4062 = vsub.f32 %v2966, %v4061
    %4063 = vmatpush1.msra.mxu0 %v4062
    %4064 = vmatprep.subr.mxu0 0.0
    %4065 = vmatpush2.msra.mxu0 0.0
    %4066 = vmatprep.subr.mxu0 0.0
    %4067 = vmatpush2.msra.mxu0 0.0
    %4068 = vmatprep.subr.mxu0 0.0
    %4069 = vmatpush2.msra.mxu0 0.0
    %4070 = vmatprep.subr.mxu0 0.0
    %4071 = vmatpush2.msra.mxu0 0.0
    %4072 = vmatprep.subr.mxu0 0.0
    %4073 = vmatpush2.msra.mxu0 0.0
    %4074 = vmatprep.subr.mxu0 0.0
    %4075 = vmatpush2.msra.mxu0 0.0
    %4076 = vmatprep.subr.mxu0 0.0
    %4077 = vmatpush2.msra.mxu0 0.0
    %4078 = vmatprep.subr.mxu0 0.0
    %4079 = vmatpush2.msra.mxu0 0.0
    %4080 = vmatprep.subr.mxu0 0.0
    %4081 = vmatpush2.msra.mxu0 0.0
    %4082 = vmatprep.subr.mxu0 0.0
    %4083 = vmatpush2.msra.mxu0 0.0
    %4084 = vmatprep.subr.mxu0 0.0
    %4085 = vmatpush2.msra.mxu0 0.0
    %4086 = vmatprep.subr.mxu0 0.0
    %4087 = vmatpush2.msra.mxu0 0.0
    %4088 = vmatprep.subr.mxu0 0.0
    %4089 = vmatpush2.msra.mxu0 0.0
    %4090 = vmatprep.subr.mxu0 0.0
    %4091 = vmatpush2.msra.mxu0 0.0
    %4092 = vmatprep.subr.mxu0 0.0
    %4093 = vmatpush2.msra.mxu0 0.0
    %4094 = vmatprep.subr.mxu0 0.0
    %4095 = vmatpush2.msra.mxu0 0.0
    %4096 = vmatprep.mubr.f32.mxu0 0.0
    %v4097 = vand.u32 %v3876, 4294901760
    %v4098 = vsub.f32 %v3876, %v4097
    %4099 = vmatmul.mubr.f32.gmra.mxu0 %v4098
    %v4100 = vpop.f32.mrf.mxu0
    %v4101 = vadd.f32 %v4027, %v4100
    %v4102 = vpop.f32.mrf.mxu0
    %4103 = vdwg.mxu0
    %4104 = vmatprep.subr.mxu0 0.0
    %4105 = vmatpush1.msra.mxu0 0.0
    %4106 = vmatprep.subr.mxu0 0.0
    %4107 = vmatpush1.msra.mxu0 0.0
    %4108 = vmatprep.subr.mxu0 0.0
    %4109 = vmatpush1.msra.mxu0 0.0
    %4110 = vmatprep.subr.mxu0 0.0
    %4111 = vmatpush1.msra.mxu0 0.0
    %4112 = vmatprep.subr.mxu0 0.0
    %4113 = vmatpush1.msra.mxu0 0.0
    %4114 = vmatprep.subr.mxu0 0.0
    %4115 = vmatpush1.msra.mxu0 0.0
    %4116 = vmatprep.subr.mxu0 0.0
    %4117 = vmatpush1.msra.mxu0 0.0
    %4118 = vmatprep.subr.mxu0 0.0
    %4119 = vmatpush1.msra.mxu0 0.0
    %4120 = vmatprep.subr.mxu0 0.0
    %4121 = vmatpush1.msra.mxu0 0.0
    %4122 = vmatprep.subr.mxu0 0.0
    %4123 = vmatpush1.msra.mxu0 0.0
    %4124 = vmatprep.subr.mxu0 0.0
    %4125 = vmatpush1.msra.mxu0 0.0
    %4126 = vmatprep.subr.mxu0 0.0
    %4127 = vmatpush1.msra.mxu0 0.0
    %4128 = vmatprep.subr.mxu0 0.0
    %4129 = vmatpush1.msra.mxu0 0.0
    %4130 = vmatprep.subr.mxu0 0.0
    %4131 = vmatpush1.msra.mxu0 0.0
    %4132 = vmatprep.subr.mxu0 0.0
    %4133 = vmatpush1.msra.mxu0 0.0
    %4134 = vmatprep.subr.mxu0 0.0
    %v4135 = vand.u32 %v2966, 4294901760
    %4136 = vmatpush1.msra.mxu0 %v4135
    %4137 = vmatprep.subr.mxu0 0.0
    %4138 = vmatpush2.msra.mxu0 0.0
    %4139 = vmatprep.subr.mxu0 0.0
    %4140 = vmatpush2.msra.mxu0 0.0
    %4141 = vmatprep.subr.mxu0 0.0
    %4142 = vmatpush2.msra.mxu0 0.0
    %4143 = vmatprep.subr.mxu0 0.0
    %4144 = vmatpush2.msra.mxu0 0.0
    %4145 = vmatprep.subr.mxu0 0.0
    %4146 = vmatpush2.msra.mxu0 0.0
    %4147 = vmatprep.subr.mxu0 0.0
    %4148 = vmatpush2.msra.mxu0 0.0
    %4149 = vmatprep.subr.mxu0 0.0
    %4150 = vmatpush2.msra.mxu0 0.0
    %4151 = vmatprep.subr.mxu0 0.0
    %4152 = vmatpush2.msra.mxu0 0.0
    %4153 = vmatprep.subr.mxu0 0.0
    %4154 = vmatpush2.msra.mxu0 0.0
    %4155 = vmatprep.subr.mxu0 0.0
    %4156 = vmatpush2.msra.mxu0 0.0
    %4157 = vmatprep.subr.mxu0 0.0
    %4158 = vmatpush2.msra.mxu0 0.0
    %4159 = vmatprep.subr.mxu0 0.0
    %4160 = vmatpush2.msra.mxu0 0.0
    %4161 = vmatprep.subr.mxu0 0.0
    %4162 = vmatpush2.msra.mxu0 0.0
    %4163 = vmatprep.subr.mxu0 0.0
    %4164 = vmatpush2.msra.mxu0 0.0
    %4165 = vmatprep.subr.mxu0 0.0
    %4166 = vmatpush2.msra.mxu0 0.0
    %4167 = vmatprep.subr.mxu0 0.0
    %4168 = vmatpush2.msra.mxu0 0.0
    %4169 = vmatprep.mubr.f32.mxu0 0.0
    %v4170 = vand.u32 %v3876, 4294901760
    %v4171 = vsub.f32 %v3876, %v4170
    %v4172 = vand.u32 %v4171, 4294901760
    %4173 = vmatmul.mubr.f32.gmra.mxu0 %v4172
    %v4174 = vpop.f32.mrf.mxu0
    %v4175 = vadd.f32 %v4101, %v4174
    %v4176 = vpop.f32.mrf.mxu0
    %4177 = vdwg.mxu0
    %4178 = vmatprep.subr.mxu0 0.0
    %4179 = vmatpush1.msra.mxu0 0.0
    %4180 = vmatprep.subr.mxu0 0.0
    %4181 = vmatpush1.msra.mxu0 0.0
    %4182 = vmatprep.subr.mxu0 0.0
    %4183 = vmatpush1.msra.mxu0 0.0
    %4184 = vmatprep.subr.mxu0 0.0
    %4185 = vmatpush1.msra.mxu0 0.0
    %4186 = vmatprep.subr.mxu0 0.0
    %4187 = vmatpush1.msra.mxu0 0.0
    %4188 = vmatprep.subr.mxu0 0.0
    %4189 = vmatpush1.msra.mxu0 0.0
    %4190 = vmatprep.subr.mxu0 0.0
    %4191 = vmatpush1.msra.mxu0 0.0
    %4192 = vmatprep.subr.mxu0 0.0
    %4193 = vmatpush1.msra.mxu0 0.0
    %4194 = vmatprep.subr.mxu0 0.0
    %4195 = vmatpush1.msra.mxu0 0.0
    %4196 = vmatprep.subr.mxu0 0.0
    %4197 = vmatpush1.msra.mxu0 0.0
    %4198 = vmatprep.subr.mxu0 0.0
    %4199 = vmatpush1.msra.mxu0 0.0
    %4200 = vmatprep.subr.mxu0 0.0
    %4201 = vmatpush1.msra.mxu0 0.0
    %4202 = vmatprep.subr.mxu0 0.0
    %4203 = vmatpush1.msra.mxu0 0.0
    %4204 = vmatprep.subr.mxu0 0.0
    %4205 = vmatpush1.msra.mxu0 0.0
    %4206 = vmatprep.subr.mxu0 0.0
    %4207 = vmatpush1.msra.mxu0 0.0
    %4208 = vmatprep.subr.mxu0 0.0
    %v4209 = vand.u32 %v2966, 4294901760
    %v4210 = vsub.f32 %v2966, %v4209
    %v4211 = vand.u32 %v4210, 4294901760
    %4212 = vmatpush1.msra.mxu0 %v4211
    %4213 = vmatprep.subr.mxu0 0.0
    %4214 = vmatpush2.msra.mxu0 0.0
    %4215 = vmatprep.subr.mxu0 0.0
    %4216 = vmatpush2.msra.mxu0 0.0
    %4217 = vmatprep.subr.mxu0 0.0
    %4218 = vmatpush2.msra.mxu0 0.0
    %4219 = vmatprep.subr.mxu0 0.0
    %4220 = vmatpush2.msra.mxu0 0.0
    %4221 = vmatprep.subr.mxu0 0.0
    %4222 = vmatpush2.msra.mxu0 0.0
    %4223 = vmatprep.subr.mxu0 0.0
    %4224 = vmatpush2.msra.mxu0 0.0
    %4225 = vmatprep.subr.mxu0 0.0
    %4226 = vmatpush2.msra.mxu0 0.0
    %4227 = vmatprep.subr.mxu0 0.0
    %4228 = vmatpush2.msra.mxu0 0.0
    %4229 = vmatprep.subr.mxu0 0.0
    %4230 = vmatpush2.msra.mxu0 0.0
    %4231 = vmatprep.subr.mxu0 0.0
    %4232 = vmatpush2.msra.mxu0 0.0
    %4233 = vmatprep.subr.mxu0 0.0
    %4234 = vmatpush2.msra.mxu0 0.0
    %4235 = vmatprep.subr.mxu0 0.0
    %4236 = vmatpush2.msra.mxu0 0.0
    %4237 = vmatprep.subr.mxu0 0.0
    %4238 = vmatpush2.msra.mxu0 0.0
    %4239 = vmatprep.subr.mxu0 0.0
    %4240 = vmatpush2.msra.mxu0 0.0
    %4241 = vmatprep.subr.mxu0 0.0
    %4242 = vmatpush2.msra.mxu0 0.0
    %4243 = vmatprep.subr.mxu0 0.0
    %4244 = vmatpush2.msra.mxu0 0.0
    %4245 = vmatprep.mubr.f32.mxu0 0.0
    %v4246 = vand.u32 %v3876, 4294901760
    %4247 = vmatmul.mubr.f32.gmra.mxu0 %v4246
    %v4248 = vpop.f32.mrf.mxu0
    %v4249 = vadd.f32 %v4175, %v4248
    %v4250 = vpop.f32.mrf.mxu0
    %4251 = vdwg.mxu0
    %4252 = vmatprep.subr.mxu0 0.0
    %4253 = vmatpush1.msra.mxu0 0.0
    %4254 = vmatprep.subr.mxu0 0.0
    %4255 = vmatpush1.msra.mxu0 0.0
    %4256 = vmatprep.subr.mxu0 0.0
    %4257 = vmatpush1.msra.mxu0 0.0
    %4258 = vmatprep.subr.mxu0 0.0
    %4259 = vmatpush1.msra.mxu0 0.0
    %4260 = vmatprep.subr.mxu0 0.0
    %4261 = vmatpush1.msra.mxu0 0.0
    %4262 = vmatprep.subr.mxu0 0.0
    %4263 = vmatpush1.msra.mxu0 0.0
    %4264 = vmatprep.subr.mxu0 0.0
    %4265 = vmatpush1.msra.mxu0 0.0
    %4266 = vmatprep.subr.mxu0 0.0
    %4267 = vmatpush1.msra.mxu0 0.0
    %4268 = vmatprep.subr.mxu0 0.0
    %4269 = vmatpush1.msra.mxu0 0.0
    %4270 = vmatprep.subr.mxu0 0.0
    %4271 = vmatpush1.msra.mxu0 0.0
    %4272 = vmatprep.subr.mxu0 0.0
    %4273 = vmatpush1.msra.mxu0 0.0
    %4274 = vmatprep.subr.mxu0 0.0
    %4275 = vmatpush1.msra.mxu0 0.0
    %4276 = vmatprep.subr.mxu0 0.0
    %4277 = vmatpush1.msra.mxu0 0.0
    %4278 = vmatprep.subr.mxu0 0.0
    %4279 = vmatpush1.msra.mxu0 0.0
    %4280 = vmatprep.subr.mxu0 0.0
    %4281 = vmatpush1.msra.mxu0 0.0
    %4282 = vmatprep.subr.mxu0 0.0
    %v4283 = vand.u32 %v2966, 4294901760
    %4284 = vmatpush1.msra.mxu0 %v4283
    %4285 = vmatprep.subr.mxu0 0.0
    %4286 = vmatpush2.msra.mxu0 0.0
    %4287 = vmatprep.subr.mxu0 0.0
    %4288 = vmatpush2.msra.mxu0 0.0
    %4289 = vmatprep.subr.mxu0 0.0
    %4290 = vmatpush2.msra.mxu0 0.0
    %4291 = vmatprep.subr.mxu0 0.0
    %4292 = vmatpush2.msra.mxu0 0.0
    %4293 = vmatprep.subr.mxu0 0.0
    %4294 = vmatpush2.msra.mxu0 0.0
    %4295 = vmatprep.subr.mxu0 0.0
    %4296 = vmatpush2.msra.mxu0 0.0
    %4297 = vmatprep.subr.mxu0 0.0
    %4298 = vmatpush2.msra.mxu0 0.0
    %4299 = vmatprep.subr.mxu0 0.0
    %4300 = vmatpush2.msra.mxu0 0.0
    %4301 = vmatprep.subr.mxu0 0.0
    %4302 = vmatpush2.msra.mxu0 0.0
    %4303 = vmatprep.subr.mxu0 0.0
    %4304 = vmatpush2.msra.mxu0 0.0
    %4305 = vmatprep.subr.mxu0 0.0
    %4306 = vmatpush2.msra.mxu0 0.0
    %4307 = vmatprep.subr.mxu0 0.0
    %4308 = vmatpush2.msra.mxu0 0.0
    %4309 = vmatprep.subr.mxu0 0.0
    %4310 = vmatpush2.msra.mxu0 0.0
    %4311 = vmatprep.subr.mxu0 0.0
    %4312 = vmatpush2.msra.mxu0 0.0
    %4313 = vmatprep.subr.mxu0 0.0
    %4314 = vmatpush2.msra.mxu0 0.0
    %4315 = vmatprep.subr.mxu0 0.0
    %4316 = vmatpush2.msra.mxu0 0.0
    %4317 = vmatprep.mubr.f32.mxu0 0.0
    %v4318 = vand.u32 %v3876, 4294901760
    %4319 = vmatmul.mubr.f32.gmra.mxu0 %v4318
    %v4320 = vpop.f32.mrf.mxu0
    %v4321 = vadd.f32 %v4249, %v4320
    %v4322 = vpop.f32.mrf.mxu0
    %4323 = vdwg.mxu0
    %4325 = vrot.lane.b32.xlu0 %v3870, 64
    %v4326 = vpop.permute.xlu0 %4325
    %v4328 = vsel %vm2969, %v3419, %v4326
    %v4329 = vld [vmem:[%s4] sm:$0xff]
    %v4330 = vld [vmem:[%s4 + $0x8] sm:$0xff]
    %v4331 = vld [vmem:[%s4 + $0x10] sm:$0xff]
    %v4332 = vld [vmem:[%s4 + $0x18] sm:$0xff]
    %v4333 = vld [vmem:[%s4 + $0x20] sm:$0xff]
    %v4334 = vld [vmem:[%s4 + $0x28] sm:$0xff]
    %v4335 = vld [vmem:[%s4 + $0x30] sm:$0xff]
    %v4336 = vld [vmem:[%s4 + $0x38] sm:$0xff]
    %v4337 = vld [vmem:[%s4 + $0x40] sm:$0xff]
    %v4338 = vld [vmem:[%s4 + $0x48] sm:$0xff]
    %v4339 = vld [vmem:[%s4 + $0x50] sm:$0xff]
    %v4340 = vld [vmem:[%s4 + $0x58] sm:$0xff]
    %v4341 = vld [vmem:[%s4 + $0x60] sm:$0xff]
    %v4342 = vld [vmem:[%s4 + $0x68] sm:$0xff]
    %v4343 = vld [vmem:[%s4 + $0x70] sm:$0xff]
    %v4344 = vld [vmem:[%s4 + $0x78] sm:$0xff]
    %v4345 = vld [vmem:[%s4 + $0x80] sm:$0xff]
    %v4346 = vld [vmem:[%s4 + $0x88] sm:$0xff]
    %v4347 = vld [vmem:[%s4 + $0x90] sm:$0xff]
    %v4348 = vld [vmem:[%s4 + $0x98] sm:$0xff]
    %v4349 = vld [vmem:[%s4 + $0xa0] sm:$0xff]
    %v4350 = vld [vmem:[%s4 + $0xa8] sm:$0xff]
    %v4351 = vld [vmem:[%s4 + $0xb0] sm:$0xff]
    %v4352 = vld [vmem:[%s4 + $0xb8] sm:$0xff]
    %v4354 = vsel %vm2969, %v4321, 0
    %4356 = vmatprep.subr.mxu0 0.0
    %v4357 = vand.u32 %v4344, 4294901760
    %4358 = vmatpush1.msra.mxu0 %v4357
    %4359 = vmatprep.subr.mxu0 0.0
    %v4360 = vand.u32 %v4343, 4294901760
    %4361 = vmatpush1.msra.mxu0 %v4360
    %4362 = vmatprep.subr.mxu0 0.0
    %v4363 = vand.u32 %v4342, 4294901760
    %4364 = vmatpush1.msra.mxu0 %v4363
    %4365 = vmatprep.subr.mxu0 0.0
    %v4366 = vand.u32 %v4341, 4294901760
    %4367 = vmatpush1.msra.mxu0 %v4366
    %4368 = vmatprep.subr.mxu0 0.0
    %v4369 = vand.u32 %v4340, 4294901760
    %4370 = vmatpush1.msra.mxu0 %v4369
    %4371 = vmatprep.subr.mxu0 0.0
    %v4372 = vand.u32 %v4339, 4294901760
    %4373 = vmatpush1.msra.mxu0 %v4372
    %4374 = vmatprep.subr.mxu0 0.0
    %v4375 = vand.u32 %v4338, 4294901760
    %4376 = vmatpush1.msra.mxu0 %v4375
    %4377 = vmatprep.subr.mxu0 0.0
    %v4378 = vand.u32 %v4337, 4294901760
    %4379 = vmatpush1.msra.mxu0 %v4378
    %4380 = vmatprep.subr.mxu0 0.0
    %v4381 = vand.u32 %v4336, 4294901760
    %4382 = vmatpush1.msra.mxu0 %v4381
    %4383 = vmatprep.subr.mxu0 0.0
    %v4384 = vand.u32 %v4335, 4294901760
    %4385 = vmatpush1.msra.mxu0 %v4384
    %4386 = vmatprep.subr.mxu0 0.0
    %v4387 = vand.u32 %v4334, 4294901760
    %4388 = vmatpush1.msra.mxu0 %v4387
    %4389 = vmatprep.subr.mxu0 0.0
    %v4390 = vand.u32 %v4333, 4294901760
    %4391 = vmatpush1.msra.mxu0 %v4390
    %4392 = vmatprep.subr.mxu0 0.0
    %v4393 = vand.u32 %v4332, 4294901760
    %4394 = vmatpush1.msra.mxu0 %v4393
    %4395 = vmatprep.subr.mxu0 0.0
    %v4396 = vand.u32 %v4331, 4294901760
    %4397 = vmatpush1.msra.mxu0 %v4396
    %4398 = vmatprep.subr.mxu0 0.0
    %v4399 = vand.u32 %v4330, 4294901760
    %4400 = vmatpush1.msra.mxu0 %v4399
    %4401 = vmatprep.subr.mxu0 0.0
    %v4402 = vand.u32 %v4329, 4294901760
    %4403 = vmatpush1.msra.mxu0 %v4402
    %4404 = vmatprep.subr.mxu0 0.0
    %4405 = vmatpush2.msra.mxu0 0.0
    %4406 = vmatprep.subr.mxu0 0.0
    %4407 = vmatpush2.msra.mxu0 0.0
    %4408 = vmatprep.subr.mxu0 0.0
    %4409 = vmatpush2.msra.mxu0 0.0
    %4410 = vmatprep.subr.mxu0 0.0
    %4411 = vmatpush2.msra.mxu0 0.0
    %4412 = vmatprep.subr.mxu0 0.0
    %4413 = vmatpush2.msra.mxu0 0.0
    %4414 = vmatprep.subr.mxu0 0.0
    %4415 = vmatpush2.msra.mxu0 0.0
    %4416 = vmatprep.subr.mxu0 0.0
    %4417 = vmatpush2.msra.mxu0 0.0
    %4418 = vmatprep.subr.mxu0 0.0
    %4419 = vmatpush2.msra.mxu0 0.0
    %4420 = vmatprep.subr.mxu0 0.0
    %v4421 = vand.u32 %v4352, 4294901760
    %4422 = vmatpush2.msra.mxu0 %v4421
    %4423 = vmatprep.subr.mxu0 0.0
    %v4424 = vand.u32 %v4351, 4294901760
    %4425 = vmatpush2.msra.mxu0 %v4424
    %4426 = vmatprep.subr.mxu0 0.0
    %v4427 = vand.u32 %v4350, 4294901760
    %4428 = vmatpush2.msra.mxu0 %v4427
    %4429 = vmatprep.subr.mxu0 0.0
    %v4430 = vand.u32 %v4349, 4294901760
    %4431 = vmatpush2.msra.mxu0 %v4430
    %4432 = vmatprep.subr.mxu0 0.0
    %v4433 = vand.u32 %v4348, 4294901760
    %4434 = vmatpush2.msra.mxu0 %v4433
    %4435 = vmatprep.subr.mxu0 0.0
    %v4436 = vand.u32 %v4347, 4294901760
    %4437 = vmatpush2.msra.mxu0 %v4436
    %4438 = vmatprep.subr.mxu0 0.0
    %v4439 = vand.u32 %v4346, 4294901760
    %4440 = vmatpush2.msra.mxu0 %v4439
    %4441 = vmatprep.subr.mxu0 0.0
    %v4442 = vand.u32 %v4345, 4294901760
    %4443 = vmatpush2.msra.mxu0 %v4442
    %v4444 = vand.u32 %v4354, 4294901760
    %v4445 = vsub.f32 %v4354, %v4444
    %v4446 = vand.u32 %v4445, 4294901760
    %v4447 = vsub.f32 %v4445, %v4446
    %v4448 = vand.u32 %v4447, 4294901760
    %4449 = vmatprep.mubr.f32.mxu0 %v4448
    %v4450 = vand.u32 %v4328, 4294901760
    %v4451 = vsub.f32 %v4328, %v4450
    %v4452 = vand.u32 %v4451, 4294901760
    %v4453 = vsub.f32 %v4451, %v4452
    %v4454 = vand.u32 %v4453, 4294901760
    %4455 = vmatmul.mubr.f32.gmra.mxu0 %v4454
    %v4456 = vpop.f32.mrf.mxu0
    %v4457 = vadd.f32 0.0, %v4456
    %v4458 = vpop.f32.mrf.mxu0
    %4459 = vdwg.mxu0
    %4460 = vmatprep.subr.mxu0 0.0
    %v4461 = vand.u32 %v4344, 4294901760
    %v4462 = vsub.f32 %v4344, %v4461
    %v4463 = vand.u32 %v4462, 4294901760
    %v4464 = vsub.f32 %v4462, %v4463
    %v4465 = vand.u32 %v4464, 4294901760
    %4466 = vmatpush1.msra.mxu0 %v4465
    %4467 = vmatprep.subr.mxu0 0.0
    %v4468 = vand.u32 %v4343, 4294901760
    %v4469 = vsub.f32 %v4343, %v4468
    %v4470 = vand.u32 %v4469, 4294901760
    %v4471 = vsub.f32 %v4469, %v4470
    %v4472 = vand.u32 %v4471, 4294901760
    %4473 = vmatpush1.msra.mxu0 %v4472
    %4474 = vmatprep.subr.mxu0 0.0
    %v4475 = vand.u32 %v4342, 4294901760
    %v4476 = vsub.f32 %v4342, %v4475
    %v4477 = vand.u32 %v4476, 4294901760
    %v4478 = vsub.f32 %v4476, %v4477
    %v4479 = vand.u32 %v4478, 4294901760
    %4480 = vmatpush1.msra.mxu0 %v4479
    %4481 = vmatprep.subr.mxu0 0.0
    %v4482 = vand.u32 %v4341, 4294901760
    %v4483 = vsub.f32 %v4341, %v4482
    %v4484 = vand.u32 %v4483, 4294901760
    %v4485 = vsub.f32 %v4483, %v4484
    %v4486 = vand.u32 %v4485, 4294901760
    %4487 = vmatpush1.msra.mxu0 %v4486
    %4488 = vmatprep.subr.mxu0 0.0
    %v4489 = vand.u32 %v4340, 4294901760
    %v4490 = vsub.f32 %v4340, %v4489
    %v4491 = vand.u32 %v4490, 4294901760
    %v4492 = vsub.f32 %v4490, %v4491
    %v4493 = vand.u32 %v4492, 4294901760
    %4494 = vmatpush1.msra.mxu0 %v4493
    %4495 = vmatprep.subr.mxu0 0.0
    %v4496 = vand.u32 %v4339, 4294901760
    %v4497 = vsub.f32 %v4339, %v4496
    %v4498 = vand.u32 %v4497, 4294901760
    %v4499 = vsub.f32 %v4497, %v4498
    %v4500 = vand.u32 %v4499, 4294901760
    %4501 = vmatpush1.msra.mxu0 %v4500
    %4502 = vmatprep.subr.mxu0 0.0
    %v4503 = vand.u32 %v4338, 4294901760
    %v4504 = vsub.f32 %v4338, %v4503
    %v4505 = vand.u32 %v4504, 4294901760
    %v4506 = vsub.f32 %v4504, %v4505
    %v4507 = vand.u32 %v4506, 4294901760
    %4508 = vmatpush1.msra.mxu0 %v4507
    %4509 = vmatprep.subr.mxu0 0.0
    %v4510 = vand.u32 %v4337, 4294901760
    %v4511 = vsub.f32 %v4337, %v4510
    %v4512 = vand.u32 %v4511, 4294901760
    %v4513 = vsub.f32 %v4511, %v4512
    %v4514 = vand.u32 %v4513, 4294901760
    %4515 = vmatpush1.msra.mxu0 %v4514
    %4516 = vmatprep.subr.mxu0 0.0
    %v4517 = vand.u32 %v4336, 4294901760
    %v4518 = vsub.f32 %v4336, %v4517
    %v4519 = vand.u32 %v4518, 4294901760
    %v4520 = vsub.f32 %v4518, %v4519
    %v4521 = vand.u32 %v4520, 4294901760
    %4522 = vmatpush1.msra.mxu0 %v4521
    %4523 = vmatprep.subr.mxu0 0.0
    %v4524 = vand.u32 %v4335, 4294901760
    %v4525 = vsub.f32 %v4335, %v4524
    %v4526 = vand.u32 %v4525, 4294901760
    %v4527 = vsub.f32 %v4525, %v4526
    %v4528 = vand.u32 %v4527, 4294901760
    %4529 = vmatpush1.msra.mxu0 %v4528
    %4530 = vmatprep.subr.mxu0 0.0
    %v4531 = vand.u32 %v4334, 4294901760
    %v4532 = vsub.f32 %v4334, %v4531
    %v4533 = vand.u32 %v4532, 4294901760
    %v4534 = vsub.f32 %v4532, %v4533
    %v4535 = vand.u32 %v4534, 4294901760
    %4536 = vmatpush1.msra.mxu0 %v4535
    %4537 = vmatprep.subr.mxu0 0.0
    %v4538 = vand.u32 %v4333, 4294901760
    %v4539 = vsub.f32 %v4333, %v4538
    %v4540 = vand.u32 %v4539, 4294901760
    %v4541 = vsub.f32 %v4539, %v4540
    %v4542 = vand.u32 %v4541, 4294901760
    %4543 = vmatpush1.msra.mxu0 %v4542
    %4544 = vmatprep.subr.mxu0 0.0
    %v4545 = vand.u32 %v4332, 4294901760
    %v4546 = vsub.f32 %v4332, %v4545
    %v4547 = vand.u32 %v4546, 4294901760
    %v4548 = vsub.f32 %v4546, %v4547
    %v4549 = vand.u32 %v4548, 4294901760
    %4550 = vmatpush1.msra.mxu0 %v4549
    %4551 = vmatprep.subr.mxu0 0.0
    %v4552 = vand.u32 %v4331, 4294901760
    %v4553 = vsub.f32 %v4331, %v4552
    %v4554 = vand.u32 %v4553, 4294901760
    %v4555 = vsub.f32 %v4553, %v4554
    %v4556 = vand.u32 %v4555, 4294901760
    %4557 = vmatpush1.msra.mxu0 %v4556
    %4558 = vmatprep.subr.mxu0 0.0
    %v4559 = vand.u32 %v4330, 4294901760
    %v4560 = vsub.f32 %v4330, %v4559
    %v4561 = vand.u32 %v4560, 4294901760
    %v4562 = vsub.f32 %v4560, %v4561
    %v4563 = vand.u32 %v4562, 4294901760
    %4564 = vmatpush1.msra.mxu0 %v4563
    %4565 = vmatprep.subr.mxu0 0.0
    %v4566 = vand.u32 %v4329, 4294901760
    %v4567 = vsub.f32 %v4329, %v4566
    %v4568 = vand.u32 %v4567, 4294901760
    %v4569 = vsub.f32 %v4567, %v4568
    %v4570 = vand.u32 %v4569, 4294901760
    %4571 = vmatpush1.msra.mxu0 %v4570
    %4572 = vmatprep.subr.mxu0 0.0
    %4573 = vmatpush2.msra.mxu0 0.0
    %4574 = vmatprep.subr.mxu0 0.0
    %4575 = vmatpush2.msra.mxu0 0.0
    %4576 = vmatprep.subr.mxu0 0.0
    %4577 = vmatpush2.msra.mxu0 0.0
    %4578 = vmatprep.subr.mxu0 0.0
    %4579 = vmatpush2.msra.mxu0 0.0
    %4580 = vmatprep.subr.mxu0 0.0
    %4581 = vmatpush2.msra.mxu0 0.0
    %4582 = vmatprep.subr.mxu0 0.0
    %4583 = vmatpush2.msra.mxu0 0.0
    %4584 = vmatprep.subr.mxu0 0.0
    %4585 = vmatpush2.msra.mxu0 0.0
    %4586 = vmatprep.subr.mxu0 0.0
    %4587 = vmatpush2.msra.mxu0 0.0
    %4588 = vmatprep.subr.mxu0 0.0
    %v4589 = vand.u32 %v4352, 4294901760
    %v4590 = vsub.f32 %v4352, %v4589
    %v4591 = vand.u32 %v4590, 4294901760
    %v4592 = vsub.f32 %v4590, %v4591
    %v4593 = vand.u32 %v4592, 4294901760
    %4594 = vmatpush2.msra.mxu0 %v4593
    %4595 = vmatprep.subr.mxu0 0.0
    %v4596 = vand.u32 %v4351, 4294901760
    %v4597 = vsub.f32 %v4351, %v4596
    %v4598 = vand.u32 %v4597, 4294901760
    %v4599 = vsub.f32 %v4597, %v4598
    %v4600 = vand.u32 %v4599, 4294901760
    %4601 = vmatpush2.msra.mxu0 %v4600
    %4602 = vmatprep.subr.mxu0 0.0
    %v4603 = vand.u32 %v4350, 4294901760
    %v4604 = vsub.f32 %v4350, %v4603
    %v4605 = vand.u32 %v4604, 4294901760
    %v4606 = vsub.f32 %v4604, %v4605
    %v4607 = vand.u32 %v4606, 4294901760
    %4608 = vmatpush2.msra.mxu0 %v4607
    %4609 = vmatprep.subr.mxu0 0.0
    %v4610 = vand.u32 %v4349, 4294901760
    %v4611 = vsub.f32 %v4349, %v4610
    %v4612 = vand.u32 %v4611, 4294901760
    %v4613 = vsub.f32 %v4611, %v4612
    %v4614 = vand.u32 %v4613, 4294901760
    %4615 = vmatpush2.msra.mxu0 %v4614
    %4616 = vmatprep.subr.mxu0 0.0
    %v4617 = vand.u32 %v4348, 4294901760
    %v4618 = vsub.f32 %v4348, %v4617
    %v4619 = vand.u32 %v4618, 4294901760
    %v4620 = vsub.f32 %v4618, %v4619
    %v4621 = vand.u32 %v4620, 4294901760
    %4622 = vmatpush2.msra.mxu0 %v4621
    %4623 = vmatprep.subr.mxu0 0.0
    %v4624 = vand.u32 %v4347, 4294901760
    %v4625 = vsub.f32 %v4347, %v4624
    %v4626 = vand.u32 %v4625, 4294901760
    %v4627 = vsub.f32 %v4625, %v4626
    %v4628 = vand.u32 %v4627, 4294901760
    %4629 = vmatpush2.msra.mxu0 %v4628
    %4630 = vmatprep.subr.mxu0 0.0
    %v4631 = vand.u32 %v4346, 4294901760
    %v4632 = vsub.f32 %v4346, %v4631
    %v4633 = vand.u32 %v4632, 4294901760
    %v4634 = vsub.f32 %v4632, %v4633
    %v4635 = vand.u32 %v4634, 4294901760
    %4636 = vmatpush2.msra.mxu0 %v4635
    %4637 = vmatprep.subr.mxu0 0.0
    %v4638 = vand.u32 %v4345, 4294901760
    %v4639 = vsub.f32 %v4345, %v4638
    %v4640 = vand.u32 %v4639, 4294901760
    %v4641 = vsub.f32 %v4639, %v4640
    %v4642 = vand.u32 %v4641, 4294901760
    %4643 = vmatpush2.msra.mxu0 %v4642
    %v4644 = vand.u32 %v4354, 4294901760
    %4645 = vmatprep.mubr.f32.mxu0 %v4644
    %v4646 = vand.u32 %v4328, 4294901760
    %4647 = vmatmul.mubr.f32.gmra.mxu0 %v4646
    %v4648 = vpop.f32.mrf.mxu0
    %v4649 = vadd.f32 %v4457, %v4648
    %v4650 = vpop.f32.mrf.mxu0
    %4651 = vdwg.mxu0
    %4652 = vmatprep.subr.mxu0 0.0
    %v4653 = vand.u32 %v4344, 4294901760
    %v4654 = vsub.f32 %v4344, %v4653
    %4655 = vmatpush1.msra.mxu0 %v4654
    %4656 = vmatprep.subr.mxu0 0.0
    %v4657 = vand.u32 %v4343, 4294901760
    %v4658 = vsub.f32 %v4343, %v4657
    %4659 = vmatpush1.msra.mxu0 %v4658
    %4660 = vmatprep.subr.mxu0 0.0
    %v4661 = vand.u32 %v4342, 4294901760
    %v4662 = vsub.f32 %v4342, %v4661
    %4663 = vmatpush1.msra.mxu0 %v4662
    %4664 = vmatprep.subr.mxu0 0.0
    %v4665 = vand.u32 %v4341, 4294901760
    %v4666 = vsub.f32 %v4341, %v4665
    %4667 = vmatpush1.msra.mxu0 %v4666
    %4668 = vmatprep.subr.mxu0 0.0
    %v4669 = vand.u32 %v4340, 4294901760
    %v4670 = vsub.f32 %v4340, %v4669
    %4671 = vmatpush1.msra.mxu0 %v4670
    %4672 = vmatprep.subr.mxu0 0.0
    %v4673 = vand.u32 %v4339, 4294901760
    %v4674 = vsub.f32 %v4339, %v4673
    %4675 = vmatpush1.msra.mxu0 %v4674
    %4676 = vmatprep.subr.mxu0 0.0
    %v4677 = vand.u32 %v4338, 4294901760
    %v4678 = vsub.f32 %v4338, %v4677
    %4679 = vmatpush1.msra.mxu0 %v4678
    %4680 = vmatprep.subr.mxu0 0.0
    %v4681 = vand.u32 %v4337, 4294901760
    %v4682 = vsub.f32 %v4337, %v4681
    %4683 = vmatpush1.msra.mxu0 %v4682
    %4684 = vmatprep.subr.mxu0 0.0
    %v4685 = vand.u32 %v4336, 4294901760
    %v4686 = vsub.f32 %v4336, %v4685
    %4687 = vmatpush1.msra.mxu0 %v4686
    %4688 = vmatprep.subr.mxu0 0.0
    %v4689 = vand.u32 %v4335, 4294901760
    %v4690 = vsub.f32 %v4335, %v4689
    %4691 = vmatpush1.msra.mxu0 %v4690
    %4692 = vmatprep.subr.mxu0 0.0
    %v4693 = vand.u32 %v4334, 4294901760
    %v4694 = vsub.f32 %v4334, %v4693
    %4695 = vmatpush1.msra.mxu0 %v4694
    %4696 = vmatprep.subr.mxu0 0.0
    %v4697 = vand.u32 %v4333, 4294901760
    %v4698 = vsub.f32 %v4333, %v4697
    %4699 = vmatpush1.msra.mxu0 %v4698
    %4700 = vmatprep.subr.mxu0 0.0
    %v4701 = vand.u32 %v4332, 4294901760
    %v4702 = vsub.f32 %v4332, %v4701
    %4703 = vmatpush1.msra.mxu0 %v4702
    %4704 = vmatprep.subr.mxu0 0.0
    %v4705 = vand.u32 %v4331, 4294901760
    %v4706 = vsub.f32 %v4331, %v4705
    %4707 = vmatpush1.msra.mxu0 %v4706
    %4708 = vmatprep.subr.mxu0 0.0
    %v4709 = vand.u32 %v4330, 4294901760
    %v4710 = vsub.f32 %v4330, %v4709
    %4711 = vmatpush1.msra.mxu0 %v4710
    %4712 = vmatprep.subr.mxu0 0.0
    %v4713 = vand.u32 %v4329, 4294901760
    %v4714 = vsub.f32 %v4329, %v4713
    %4715 = vmatpush1.msra.mxu0 %v4714
    %4716 = vmatprep.subr.mxu0 0.0
    %4717 = vmatpush2.msra.mxu0 0.0
    %4718 = vmatprep.subr.mxu0 0.0
    %4719 = vmatpush2.msra.mxu0 0.0
    %4720 = vmatprep.subr.mxu0 0.0
    %4721 = vmatpush2.msra.mxu0 0.0
    %4722 = vmatprep.subr.mxu0 0.0
    %4723 = vmatpush2.msra.mxu0 0.0
    %4724 = vmatprep.subr.mxu0 0.0
    %4725 = vmatpush2.msra.mxu0 0.0
    %4726 = vmatprep.subr.mxu0 0.0
    %4727 = vmatpush2.msra.mxu0 0.0
    %4728 = vmatprep.subr.mxu0 0.0
    %4729 = vmatpush2.msra.mxu0 0.0
    %4730 = vmatprep.subr.mxu0 0.0
    %4731 = vmatpush2.msra.mxu0 0.0
    %4732 = vmatprep.subr.mxu0 0.0
    %v4733 = vand.u32 %v4352, 4294901760
    %v4734 = vsub.f32 %v4352, %v4733
    %4735 = vmatpush2.msra.mxu0 %v4734
    %4736 = vmatprep.subr.mxu0 0.0
    %v4737 = vand.u32 %v4351, 4294901760
    %v4738 = vsub.f32 %v4351, %v4737
    %4739 = vmatpush2.msra.mxu0 %v4738
    %4740 = vmatprep.subr.mxu0 0.0
    %v4741 = vand.u32 %v4350, 4294901760
    %v4742 = vsub.f32 %v4350, %v4741
    %4743 = vmatpush2.msra.mxu0 %v4742
    %4744 = vmatprep.subr.mxu0 0.0
    %v4745 = vand.u32 %v4349, 4294901760
    %v4746 = vsub.f32 %v4349, %v4745
    %4747 = vmatpush2.msra.mxu0 %v4746
    %4748 = vmatprep.subr.mxu0 0.0
    %v4749 = vand.u32 %v4348, 4294901760
    %v4750 = vsub.f32 %v4348, %v4749
    %4751 = vmatpush2.msra.mxu0 %v4750
    %4752 = vmatprep.subr.mxu0 0.0
    %v4753 = vand.u32 %v4347, 4294901760
    %v4754 = vsub.f32 %v4347, %v4753
    %4755 = vmatpush2.msra.mxu0 %v4754
    %4756 = vmatprep.subr.mxu0 0.0
    %v4757 = vand.u32 %v4346, 4294901760
    %v4758 = vsub.f32 %v4346, %v4757
    %4759 = vmatpush2.msra.mxu0 %v4758
    %4760 = vmatprep.subr.mxu0 0.0
    %v4761 = vand.u32 %v4345, 4294901760
    %v4762 = vsub.f32 %v4345, %v4761
    %4763 = vmatpush2.msra.mxu0 %v4762
    %v4764 = vand.u32 %v4354, 4294901760
    %v4765 = vsub.f32 %v4354, %v4764
    %4766 = vmatprep.mubr.f32.mxu0 %v4765
    %v4767 = vand.u32 %v4328, 4294901760
    %v4768 = vsub.f32 %v4328, %v4767
    %4769 = vmatmul.mubr.f32.gmra.mxu0 %v4768
    %v4770 = vpop.f32.mrf.mxu0
    %v4771 = vadd.f32 %v4649, %v4770
    %v4772 = vpop.f32.mrf.mxu0
    %4773 = vdwg.mxu0
    %4774 = vmatprep.subr.mxu0 0.0
    %v4775 = vand.u32 %v4344, 4294901760
    %4776 = vmatpush1.msra.mxu0 %v4775
    %4777 = vmatprep.subr.mxu0 0.0
    %v4778 = vand.u32 %v4343, 4294901760
    %4779 = vmatpush1.msra.mxu0 %v4778
    %4780 = vmatprep.subr.mxu0 0.0
    %v4781 = vand.u32 %v4342, 4294901760
    %4782 = vmatpush1.msra.mxu0 %v4781
    %4783 = vmatprep.subr.mxu0 0.0
    %v4784 = vand.u32 %v4341, 4294901760
    %4785 = vmatpush1.msra.mxu0 %v4784
    %4786 = vmatprep.subr.mxu0 0.0
    %v4787 = vand.u32 %v4340, 4294901760
    %4788 = vmatpush1.msra.mxu0 %v4787
    %4789 = vmatprep.subr.mxu0 0.0
    %v4790 = vand.u32 %v4339, 4294901760
    %4791 = vmatpush1.msra.mxu0 %v4790
    %4792 = vmatprep.subr.mxu0 0.0
    %v4793 = vand.u32 %v4338, 4294901760
    %4794 = vmatpush1.msra.mxu0 %v4793
    %4795 = vmatprep.subr.mxu0 0.0
    %v4796 = vand.u32 %v4337, 4294901760
    %4797 = vmatpush1.msra.mxu0 %v4796
    %4798 = vmatprep.subr.mxu0 0.0
    %v4799 = vand.u32 %v4336, 4294901760
    %4800 = vmatpush1.msra.mxu0 %v4799
    %4801 = vmatprep.subr.mxu0 0.0
    %v4802 = vand.u32 %v4335, 4294901760
    %4803 = vmatpush1.msra.mxu0 %v4802
    %4804 = vmatprep.subr.mxu0 0.0
    %v4805 = vand.u32 %v4334, 4294901760
    %4806 = vmatpush1.msra.mxu0 %v4805
    %4807 = vmatprep.subr.mxu0 0.0
    %v4808 = vand.u32 %v4333, 4294901760
    %4809 = vmatpush1.msra.mxu0 %v4808
    %4810 = vmatprep.subr.mxu0 0.0
    %v4811 = vand.u32 %v4332, 4294901760
    %4812 = vmatpush1.msra.mxu0 %v4811
    %4813 = vmatprep.subr.mxu0 0.0
    %v4814 = vand.u32 %v4331, 4294901760
    %4815 = vmatpush1.msra.mxu0 %v4814
    %4816 = vmatprep.subr.mxu0 0.0
    %v4817 = vand.u32 %v4330, 4294901760
    %4818 = vmatpush1.msra.mxu0 %v4817
    %4819 = vmatprep.subr.mxu0 0.0
    %v4820 = vand.u32 %v4329, 4294901760
    %4821 = vmatpush1.msra.mxu0 %v4820
    %4822 = vmatprep.subr.mxu0 0.0
    %4823 = vmatpush2.msra.mxu0 0.0
    %4824 = vmatprep.subr.mxu0 0.0
    %4825 = vmatpush2.msra.mxu0 0.0
    %4826 = vmatprep.subr.mxu0 0.0
    %4827 = vmatpush2.msra.mxu0 0.0
    %4828 = vmatprep.subr.mxu0 0.0
    %4829 = vmatpush2.msra.mxu0 0.0
    %4830 = vmatprep.subr.mxu0 0.0
    %4831 = vmatpush2.msra.mxu0 0.0
    %4832 = vmatprep.subr.mxu0 0.0
    %4833 = vmatpush2.msra.mxu0 0.0
    %4834 = vmatprep.subr.mxu0 0.0
    %4835 = vmatpush2.msra.mxu0 0.0
    %4836 = vmatprep.subr.mxu0 0.0
    %4837 = vmatpush2.msra.mxu0 0.0
    %4838 = vmatprep.subr.mxu0 0.0
    %v4839 = vand.u32 %v4352, 4294901760
    %4840 = vmatpush2.msra.mxu0 %v4839
    %4841 = vmatprep.subr.mxu0 0.0
    %v4842 = vand.u32 %v4351, 4294901760
    %4843 = vmatpush2.msra.mxu0 %v4842
    %4844 = vmatprep.subr.mxu0 0.0
    %v4845 = vand.u32 %v4350, 4294901760
    %4846 = vmatpush2.msra.mxu0 %v4845
    %4847 = vmatprep.subr.mxu0 0.0
    %v4848 = vand.u32 %v4349, 4294901760
    %4849 = vmatpush2.msra.mxu0 %v4848
    %4850 = vmatprep.subr.mxu0 0.0
    %v4851 = vand.u32 %v4348, 4294901760
    %4852 = vmatpush2.msra.mxu0 %v4851
    %4853 = vmatprep.subr.mxu0 0.0
    %v4854 = vand.u32 %v4347, 4294901760
    %4855 = vmatpush2.msra.mxu0 %v4854
    %4856 = vmatprep.subr.mxu0 0.0
    %v4857 = vand.u32 %v4346, 4294901760
    %4858 = vmatpush2.msra.mxu0 %v4857
    %4859 = vmatprep.subr.mxu0 0.0
    %v4860 = vand.u32 %v4345, 4294901760
    %4861 = vmatpush2.msra.mxu0 %v4860
    %v4862 = vand.u32 %v4354, 4294901760
    %v4863 = vsub.f32 %v4354, %v4862
    %v4864 = vand.u32 %v4863, 4294901760
    %4865 = vmatprep.mubr.f32.mxu0 %v4864
    %v4866 = vand.u32 %v4328, 4294901760
    %v4867 = vsub.f32 %v4328, %v4866
    %v4868 = vand.u32 %v4867, 4294901760
    %4869 = vmatmul.mubr.f32.gmra.mxu0 %v4868
    %v4870 = vpop.f32.mrf.mxu0
    %v4871 = vadd.f32 %v4771, %v4870
    %v4872 = vpop.f32.mrf.mxu0
    %4873 = vdwg.mxu0
    %4874 = vmatprep.subr.mxu0 0.0
    %v4875 = vand.u32 %v4344, 4294901760
    %v4876 = vsub.f32 %v4344, %v4875
    %v4877 = vand.u32 %v4876, 4294901760
    %4878 = vmatpush1.msra.mxu0 %v4877
    %4879 = vmatprep.subr.mxu0 0.0
    %v4880 = vand.u32 %v4343, 4294901760
    %v4881 = vsub.f32 %v4343, %v4880
    %v4882 = vand.u32 %v4881, 4294901760
    %4883 = vmatpush1.msra.mxu0 %v4882
    %4884 = vmatprep.subr.mxu0 0.0
    %v4885 = vand.u32 %v4342, 4294901760
    %v4886 = vsub.f32 %v4342, %v4885
    %v4887 = vand.u32 %v4886, 4294901760
    %4888 = vmatpush1.msra.mxu0 %v4887
    %4889 = vmatprep.subr.mxu0 0.0
    %v4890 = vand.u32 %v4341, 4294901760
    %v4891 = vsub.f32 %v4341, %v4890
    %v4892 = vand.u32 %v4891, 4294901760
    %4893 = vmatpush1.msra.mxu0 %v4892
    %4894 = vmatprep.subr.mxu0 0.0
    %v4895 = vand.u32 %v4340, 4294901760
    %v4896 = vsub.f32 %v4340, %v4895
    %v4897 = vand.u32 %v4896, 4294901760
    %4898 = vmatpush1.msra.mxu0 %v4897
    %4899 = vmatprep.subr.mxu0 0.0
    %v4900 = vand.u32 %v4339, 4294901760
    %v4901 = vsub.f32 %v4339, %v4900
    %v4902 = vand.u32 %v4901, 4294901760
    %4903 = vmatpush1.msra.mxu0 %v4902
    %4904 = vmatprep.subr.mxu0 0.0
    %v4905 = vand.u32 %v4338, 4294901760
    %v4906 = vsub.f32 %v4338, %v4905
    %v4907 = vand.u32 %v4906, 4294901760
    %4908 = vmatpush1.msra.mxu0 %v4907
    %4909 = vmatprep.subr.mxu0 0.0
    %v4910 = vand.u32 %v4337, 4294901760
    %v4911 = vsub.f32 %v4337, %v4910
    %v4912 = vand.u32 %v4911, 4294901760
    %4913 = vmatpush1.msra.mxu0 %v4912
    %4914 = vmatprep.subr.mxu0 0.0
    %v4915 = vand.u32 %v4336, 4294901760
    %v4916 = vsub.f32 %v4336, %v4915
    %v4917 = vand.u32 %v4916, 4294901760
    %4918 = vmatpush1.msra.mxu0 %v4917
    %4919 = vmatprep.subr.mxu0 0.0
    %v4920 = vand.u32 %v4335, 4294901760
    %v4921 = vsub.f32 %v4335, %v4920
    %v4922 = vand.u32 %v4921, 4294901760
    %4923 = vmatpush1.msra.mxu0 %v4922
    %4924 = vmatprep.subr.mxu0 0.0
    %v4925 = vand.u32 %v4334, 4294901760
    %v4926 = vsub.f32 %v4334, %v4925
    %v4927 = vand.u32 %v4926, 4294901760
    %4928 = vmatpush1.msra.mxu0 %v4927
    %4929 = vmatprep.subr.mxu0 0.0
    %v4930 = vand.u32 %v4333, 4294901760
    %v4931 = vsub.f32 %v4333, %v4930
    %v4932 = vand.u32 %v4931, 4294901760
    %4933 = vmatpush1.msra.mxu0 %v4932
    %4934 = vmatprep.subr.mxu0 0.0
    %v4935 = vand.u32 %v4332, 4294901760
    %v4936 = vsub.f32 %v4332, %v4935
    %v4937 = vand.u32 %v4936, 4294901760
    %4938 = vmatpush1.msra.mxu0 %v4937
    %4939 = vmatprep.subr.mxu0 0.0
    %v4940 = vand.u32 %v4331, 4294901760
    %v4941 = vsub.f32 %v4331, %v4940
    %v4942 = vand.u32 %v4941, 4294901760
    %4943 = vmatpush1.msra.mxu0 %v4942
    %4944 = vmatprep.subr.mxu0 0.0
    %v4945 = vand.u32 %v4330, 4294901760
    %v4946 = vsub.f32 %v4330, %v4945
    %v4947 = vand.u32 %v4946, 4294901760
    %4948 = vmatpush1.msra.mxu0 %v4947
    %4949 = vmatprep.subr.mxu0 0.0
    %v4950 = vand.u32 %v4329, 4294901760
    %v4951 = vsub.f32 %v4329, %v4950
    %v4952 = vand.u32 %v4951, 4294901760
    %4953 = vmatpush1.msra.mxu0 %v4952
    %4954 = vmatprep.subr.mxu0 0.0
    %4955 = vmatpush2.msra.mxu0 0.0
    %4956 = vmatprep.subr.mxu0 0.0
    %4957 = vmatpush2.msra.mxu0 0.0
    %4958 = vmatprep.subr.mxu0 0.0
    %4959 = vmatpush2.msra.mxu0 0.0
    %4960 = vmatprep.subr.mxu0 0.0
    %4961 = vmatpush2.msra.mxu0 0.0
    %4962 = vmatprep.subr.mxu0 0.0
    %4963 = vmatpush2.msra.mxu0 0.0
    %4964 = vmatprep.subr.mxu0 0.0
    %4965 = vmatpush2.msra.mxu0 0.0
    %4966 = vmatprep.subr.mxu0 0.0
    %4967 = vmatpush2.msra.mxu0 0.0
    %4968 = vmatprep.subr.mxu0 0.0
    %4969 = vmatpush2.msra.mxu0 0.0
    %4970 = vmatprep.subr.mxu0 0.0
    %v4971 = vand.u32 %v4352, 4294901760
    %v4972 = vsub.f32 %v4352, %v4971
    %v4973 = vand.u32 %v4972, 4294901760
    %4974 = vmatpush2.msra.mxu0 %v4973
    %4975 = vmatprep.subr.mxu0 0.0
    %v4976 = vand.u32 %v4351, 4294901760
    %v4977 = vsub.f32 %v4351, %v4976
    %v4978 = vand.u32 %v4977, 4294901760
    %4979 = vmatpush2.msra.mxu0 %v4978
    %4980 = vmatprep.subr.mxu0 0.0
    %v4981 = vand.u32 %v4350, 4294901760
    %v4982 = vsub.f32 %v4350, %v4981
    %v4983 = vand.u32 %v4982, 4294901760
    %4984 = vmatpush2.msra.mxu0 %v4983
    %4985 = vmatprep.subr.mxu0 0.0
    %v4986 = vand.u32 %v4349, 4294901760
    %v4987 = vsub.f32 %v4349, %v4986
    %v4988 = vand.u32 %v4987, 4294901760
    %4989 = vmatpush2.msra.mxu0 %v4988
    %4990 = vmatprep.subr.mxu0 0.0
    %v4991 = vand.u32 %v4348, 4294901760
    %v4992 = vsub.f32 %v4348, %v4991
    %v4993 = vand.u32 %v4992, 4294901760
    %4994 = vmatpush2.msra.mxu0 %v4993
    %4995 = vmatprep.subr.mxu0 0.0
    %v4996 = vand.u32 %v4347, 4294901760
    %v4997 = vsub.f32 %v4347, %v4996
    %v4998 = vand.u32 %v4997, 4294901760
    %4999 = vmatpush2.msra.mxu0 %v4998
    %5000 = vmatprep.subr.mxu0 0.0
    %v5001 = vand.u32 %v4346, 4294901760
    %v5002 = vsub.f32 %v4346, %v5001
    %v5003 = vand.u32 %v5002, 4294901760
    %5004 = vmatpush2.msra.mxu0 %v5003
    %5005 = vmatprep.subr.mxu0 0.0
    %v5006 = vand.u32 %v4345, 4294901760
    %v5007 = vsub.f32 %v4345, %v5006
    %v5008 = vand.u32 %v5007, 4294901760
    %5009 = vmatpush2.msra.mxu0 %v5008
    %v5010 = vand.u32 %v4354, 4294901760
    %5011 = vmatprep.mubr.f32.mxu0 %v5010
    %v5012 = vand.u32 %v4328, 4294901760
    %5013 = vmatmul.mubr.f32.gmra.mxu0 %v5012
    %v5014 = vpop.f32.mrf.mxu0
    %v5015 = vadd.f32 %v4871, %v5014
    %v5016 = vpop.f32.mrf.mxu0
    %5017 = vdwg.mxu0
    %5018 = vmatprep.subr.mxu0 0.0
    %v5019 = vand.u32 %v4344, 4294901760
    %5020 = vmatpush1.msra.mxu0 %v5019
    %5021 = vmatprep.subr.mxu0 0.0
    %v5022 = vand.u32 %v4343, 4294901760
    %5023 = vmatpush1.msra.mxu0 %v5022
    %5024 = vmatprep.subr.mxu0 0.0
    %v5025 = vand.u32 %v4342, 4294901760
    %5026 = vmatpush1.msra.mxu0 %v5025
    %5027 = vmatprep.subr.mxu0 0.0
    %v5028 = vand.u32 %v4341, 4294901760
    %5029 = vmatpush1.msra.mxu0 %v5028
    %5030 = vmatprep.subr.mxu0 0.0
    %v5031 = vand.u32 %v4340, 4294901760
    %5032 = vmatpush1.msra.mxu0 %v5031
    %5033 = vmatprep.subr.mxu0 0.0
    %v5034 = vand.u32 %v4339, 4294901760
    %5035 = vmatpush1.msra.mxu0 %v5034
    %5036 = vmatprep.subr.mxu0 0.0
    %v5037 = vand.u32 %v4338, 4294901760
    %5038 = vmatpush1.msra.mxu0 %v5037
    %5039 = vmatprep.subr.mxu0 0.0
    %v5040 = vand.u32 %v4337, 4294901760
    %5041 = vmatpush1.msra.mxu0 %v5040
    %5042 = vmatprep.subr.mxu0 0.0
    %v5043 = vand.u32 %v4336, 4294901760
    %5044 = vmatpush1.msra.mxu0 %v5043
    %5045 = vmatprep.subr.mxu0 0.0
    %v5046 = vand.u32 %v4335, 4294901760
    %5047 = vmatpush1.msra.mxu0 %v5046
    %5048 = vmatprep.subr.mxu0 0.0
    %v5049 = vand.u32 %v4334, 4294901760
    %5050 = vmatpush1.msra.mxu0 %v5049
    %5051 = vmatprep.subr.mxu0 0.0
    %v5052 = vand.u32 %v4333, 4294901760
    %5053 = vmatpush1.msra.mxu0 %v5052
    %5054 = vmatprep.subr.mxu0 0.0
    %v5055 = vand.u32 %v4332, 4294901760
    %5056 = vmatpush1.msra.mxu0 %v5055
    %5057 = vmatprep.subr.mxu0 0.0
    %v5058 = vand.u32 %v4331, 4294901760
    %5059 = vmatpush1.msra.mxu0 %v5058
    %5060 = vmatprep.subr.mxu0 0.0
    %v5061 = vand.u32 %v4330, 4294901760
    %5062 = vmatpush1.msra.mxu0 %v5061
    %5063 = vmatprep.subr.mxu0 0.0
    %v5064 = vand.u32 %v4329, 4294901760
    %5065 = vmatpush1.msra.mxu0 %v5064
    %5066 = vmatprep.subr.mxu0 0.0
    %5067 = vmatpush2.msra.mxu0 0.0
    %5068 = vmatprep.subr.mxu0 0.0
    %5069 = vmatpush2.msra.mxu0 0.0
    %5070 = vmatprep.subr.mxu0 0.0
    %5071 = vmatpush2.msra.mxu0 0.0
    %5072 = vmatprep.subr.mxu0 0.0
    %5073 = vmatpush2.msra.mxu0 0.0
    %5074 = vmatprep.subr.mxu0 0.0
    %5075 = vmatpush2.msra.mxu0 0.0
    %5076 = vmatprep.subr.mxu0 0.0
    %5077 = vmatpush2.msra.mxu0 0.0
    %5078 = vmatprep.subr.mxu0 0.0
    %5079 = vmatpush2.msra.mxu0 0.0
    %5080 = vmatprep.subr.mxu0 0.0
    %5081 = vmatpush2.msra.mxu0 0.0
    %5082 = vmatprep.subr.mxu0 0.0
    %v5083 = vand.u32 %v4352, 4294901760
    %5084 = vmatpush2.msra.mxu0 %v5083
    %5085 = vmatprep.subr.mxu0 0.0
    %v5086 = vand.u32 %v4351, 4294901760
    %5087 = vmatpush2.msra.mxu0 %v5086
    %5088 = vmatprep.subr.mxu0 0.0
    %v5089 = vand.u32 %v4350, 4294901760
    %5090 = vmatpush2.msra.mxu0 %v5089
    %5091 = vmatprep.subr.mxu0 0.0
    %v5092 = vand.u32 %v4349, 4294901760
    %5093 = vmatpush2.msra.mxu0 %v5092
    %5094 = vmatprep.subr.mxu0 0.0
    %v5095 = vand.u32 %v4348, 4294901760
    %5096 = vmatpush2.msra.mxu0 %v5095
    %5097 = vmatprep.subr.mxu0 0.0
    %v5098 = vand.u32 %v4347, 4294901760
    %5099 = vmatpush2.msra.mxu0 %v5098
    %5100 = vmatprep.subr.mxu0 0.0
    %v5101 = vand.u32 %v4346, 4294901760
    %5102 = vmatpush2.msra.mxu0 %v5101
    %5103 = vmatprep.subr.mxu0 0.0
    %v5104 = vand.u32 %v4345, 4294901760
    %5105 = vmatpush2.msra.mxu0 %v5104
    %v5106 = vand.u32 %v4354, 4294901760
    %5107 = vmatprep.mubr.f32.mxu0 %v5106
    %v5108 = vand.u32 %v4328, 4294901760
    %5109 = vmatmul.mubr.f32.gmra.mxu0 %v5108
    %v5110 = vpop.f32.mrf.mxu0
    %v5111 = vadd.f32 %v5015, %v5110
    %v5112 = vpop.f32.mrf.mxu0
    %5113 = vdwg.mxu0
    %vm5114 = vcmask 257024
    %5115 = vst.msk [vmem:[#allocation4] sm:$0xf] %vm5114, %v5111
    // Predicated region
    $region22: #{tpu_custom_call.1} parent=1 // pred_check
      _
    $region23: #{tpu_custom_call.1} parent=1 // pred_check_branch
      %5117 = sbr.rel (0) target = $region25
    $region24: #{tpu_custom_call.1} parent=1 // pred_region
      %s5119 = ssub.s32 128, 128
      %5120 = vsyncadd [#allocation3], %s5119
      %s5122 = sshll.u32 [#allocation2], 4
      %s5123 = int_to_ptr.vmem [resolvable:$true] %s5122
      %5125 = dma.vmem_to_hbm [thread:$0]  %s5123, 128, %s5, [#allocation3]
    $region25: #{tpu_custom_call.1} parent=1 // pred_fallthru
      _
    // Predicated region
    $region26: #{tpu_custom_call.1} parent=1 // pred_check
      _
    $region27: #{tpu_custom_call.1} parent=1 // pred_check_branch
      %5127 = sbr.rel (0) target = $region29
    $region28: #{tpu_custom_call.1} parent=1 // pred_region
      %s5129 = ssub.s32 64, 64
      %5130 = vsyncadd [#allocation5], %s5129
      %s5132 = sshll.u32 [#allocation4], 4
      %s5133 = int_to_ptr.vmem [resolvable:$true] %s5132
      %5135 = dma.vmem_to_hbm [thread:$0]  %s5133, 64, %s6, [#allocation5]
    $region29: #{tpu_custom_call.1} parent=1 // pred_fallthru
      _
    // Predicated region
    $region30: #{tpu_custom_call.1} parent=1 // pred_check
      _
    $region31: #{tpu_custom_call.1} parent=1 // pred_check_branch
      %5137 = sbr.rel (0) target = $region33
    $region32: #{tpu_custom_call.1} parent=1 // pred_region
      %5138 = dma.done [#allocation3], 128
    $region33: #{tpu_custom_call.1} parent=1 // pred_fallthru
      _
    // Predicated region
    $region34: #{tpu_custom_call.1} parent=1 // pred_check
      _
    $region35: #{tpu_custom_call.1} parent=1 // pred_check_branch
      %5140 = sbr.rel (0) target = $region37
    $region36: #{tpu_custom_call.1} parent=1 // pred_region
      %5141 = dma.done [#allocation5], 64
    $region37: #{tpu_custom_call.1} parent=1 // pred_fallthru
      _
    %5142 = vsyncpa [#allocation3], 1
    %5143 = vsyncpa [#allocation5], 1

</llo_original>
